<compile_context>
chip_gen: v6e
topology: v6e:2x2x1
jax: 0.10.0
libtpu: 0.0.40
codegen_flags: <defaults>
</compile_context>

<pallas_src>
import numpy as np
import jax
import jax.numpy as jnp
from jax import lax
from jax.experimental import pallas as pl
from jax.experimental.pallas import tpu as pltpu


# ----------------------------------------------------------------------------- param prep
def _adaptive_avg_pool_matrix(H, W, k):
    """PyTorch AdaptiveAvgPool2d((k,k)) as an averaging matrix of shape (k*k, H*W)."""
    Mk = np.zeros((k * k, H * W), dtype=np.float32)
    for i in range(k):
        rs, re = (i * H) // k, -((-(i + 1) * H) // k)
        for j in range(k):
            cs, ce = (j * W) // k, -((-(j + 1) * W) // k)
            area = float((re - rs) * (ce - cs))
            for r in range(rs, re):
                for c in range(cs, ce):
                    Mk[i * k + j, r * W + c] = 1.0 / area
    return Mk


def init_params(key, cin, cf, num_classes=7, hidden=1024):
    """Parameters in the PyTorch module's native layout (eval mode)."""
    keys = jax.random.split(key, 12)
    d_comb = cf * (1 + 4 + 9) + cf

    def u(k, shape, fan_in):
        lim = 1.0 / np.sqrt(fan_in)
        return jax.random.uniform(k, shape, jnp.float32, -lim, lim)

    p = {}
    p["wb"] = u(keys[0], (cin, cf), cin)                  # backbone stand-in 1x1 conv
    p["bb"] = u(keys[1], (cf,), cin)
    p["wa_att"] = u(keys[2], (cf, 1), cf)                 # SelfAttentionPooling.W
    p["ba_att"] = u(keys[3], (1,), cf)
    p["wf"] = u(keys[4], (d_comb, hidden), d_comb)        # fusion Linear(480, 1024)
    p["bf"] = u(keys[5], (hidden,), d_comb)
    p["bn_gamma"] = jnp.ones((hidden,), jnp.float32)
    p["bn_beta"] = jnp.zeros((hidden,), jnp.float32)
    p["bn_mean"] = 0.1 * jax.random.normal(keys[6], (hidden,), jnp.float32)
    p["bn_var"] = 1.0 + 0.1 * jnp.abs(jax.random.normal(keys[7], (hidden,), jnp.float32))
    p["wm"] = u(keys[8], (hidden, num_classes), hidden)   # classifier_main
    p["bm"] = u(keys[9], (num_classes,), hidden)
    p["wx"] = u(keys[10], (hidden, num_classes), hidden)  # classifier_aux
    p["bx"] = u(keys[11], (num_classes,), hidden)
    p["temperature"] = jnp.ones((1,), jnp.float32)        # torch.ones(1)
    return p


def prepare_params(p, H, W):
    """One-time host-side folds (valid in eval mode):
    BN -> fusion Linear, temperature -> classifier_main, classifier fusion,
    torch channel-major flatten order -> fusion weight rows, bf16 MXU weights."""
    cf = p["wb"].shape[1]
    n_rows = 15                                            # 14 pooling slots + 1 attention slot

    # Kernel combined order is slot-major: j = q*Cf + c, q in [pool1(1), pool2(4), pool3(9), att].
    # Map it to the torch combined order [pool1 flat, pool2 flat, pool3 flat, att] (channel-major).
    perm = np.empty(n_rows * cf, np.int64)
    for c in range(cf):
        perm[0 * cf + c] = c
        for q2 in range(4):
            perm[(1 + q2) * cf + c] = cf + c * 4 + q2
        for q3 in range(9):
            perm[(5 + q3) * cf + c] = 5 * cf + c * 9 + q3
        perm[14 * cf + c] = 14 * cf + c

    scale = p["bn_gamma"] * jax.lax.rsqrt(p["bn_var"] + 1e-5)
    wf = p["wf"][perm, :] * scale[None, :]
    bf = (p["bf"] - p["bn_mean"]) * scale + p["bn_beta"]

    inv_t = 1.0 / p["temperature"][0]
    wc = jnp.concatenate([p["wm"] * inv_t, p["wx"]], axis=1)
    bc = jnp.concatenate([p["bm"] * inv_t, p["bx"]], axis=0)

    m = np.concatenate([_adaptive_avg_pool_matrix(H, W, k) for k in (1, 2, 3)], axis=0)
    m = np.concatenate([m, np.zeros((1, H * W), np.float32)], axis=0)   # row 14: attention slot

    return {
        "wbT": jnp.asarray(p["wb"].T).astype(jnp.bfloat16),   # (Cf, Cin) bf16
        "bb": p["bb"].reshape(cf, 1),                          # (Cf, 1) f32
        "waC": p["wa_att"].reshape(cf, 1),                     # (Cf, 1) f32 (VPU attention scores)
        "ba": p["ba_att"].reshape(1, 1),                       # (1, 1) f32
        "M": jnp.asarray(m).astype(jnp.bfloat16),              # (15, S) bf16 pooling matrix
        "wf": wf.astype(jnp.bfloat16),                         # (480, hidden) BN-folded, permuted
        "bf": bf.reshape(1, -1),                               # (1, hidden) f32
        "wc": wc.astype(jnp.bfloat16),                         # (hidden, 2*nc) fused classifiers
        "bc": bc.reshape(1, -1),                               # (1, 2*nc) f32
    }


# ----------------------------------------------------------------------------- forward
def state_of_art_fer_forward(x_nchw, kp):
    B, Cin, H, W = x_nchw.shape
    S = H * W
    Cf = kp["wbT"].shape[0]
    n_rows = kp["M"].shape[0]                 # 15
    d_comb = Cf * n_rows
    hidden = kp["wf"].shape[1]
    nc2 = kp["wc"].shape[1]
    nc = nc2 // 2

    # Whole-batch lane-dense feature layout: columns are (b, s) with s fastest -> (Cin, B*S).
    xt = jnp.transpose(x_nchw.reshape(B, Cin, S), (1, 0, 2)).reshape(Cin, B * S)
    xt = xt.astype(jnp.bfloat16)

    def kernel(xt_ref, wbt_ref, bb_ref, wac_ref, ba_ref, m_ref, bfv_ref, bcv_ref,
               wf_hbm, wc_hbm, lm_ref, la_ref, comb_sc, wf_vmem, wc_vmem, sems):
        # Kick off the fusion/classifier weight fetch; it overlaps the head compute below.
        wf_cp = pltpu.make_async_copy(wf_hbm, wf_vmem, sems.at[0])
        wc_cp = pltpu.make_async_copy(wc_hbm, wc_vmem, sems.at[1])
        wf_cp.start()
        wc_cp.start()

        # Backbone stand-in: 1x1 conv (channel matmul) + ReLU, whole batch on lanes.
        feat = jnp.dot(wbt_ref[...], xt_ref[...], preferred_element_type=jnp.float32)
        feat = jnp.maximum(feat + bb_ref[...], 0.0)                      # (Cf, B*S) f32

        # SelfAttentionPooling scores (Linear Cf -> 1 over spatial positions) on VPU/XLU.
        sc = jnp.sum(wac_ref[...] * feat, axis=0, keepdims=True) + ba_ref[...]   # (1, B*S)

        feat_bf = feat.astype(jnp.bfloat16)
        row_id = lax.broadcasted_iota(jnp.int32, (n_rows, 1), 0)

        for b in range(B):                                               # static unroll (B small)
            s_b = sc[:, b * S:(b + 1) * S]                               # (1, S)
            p = jnp.exp(s_b - jnp.max(s_b, axis=1, keepdims=True))
            p = p / jnp.sum(p, axis=1, keepdims=True)                    # exact softmax weights
            # Rows 0..13: adaptive-avg-pool matrix; row 14: attention weights.
            r_b = jnp.where(row_id == n_rows - 1, p.astype(jnp.bfloat16), m_ref[...])   # (15, S)
            pooled = lax.dot_general(                                    # (n_rows, Cf) f32
                r_b, feat_bf[:, b * S:(b + 1) * S],
                (((1,), (1,)), ((), ())), preferred_element_type=jnp.float32)
            # Lane-dense (B, d_comb) combined features, slot-major (torch order folded into wf).
            for q in range(n_rows):
                comb_sc[b:b + 1, q * Cf:(q + 1) * Cf] = pooled[q:q + 1, :]

        # fusion Linear (BN folded) -> ReLU -> fused classifiers (temperature folded).
        wf_cp.wait()
        comb = comb_sc[...].astype(jnp.bfloat16)                         # (B, 480)
        h = jnp.dot(comb, wf_vmem[...], preferred_element_type=jnp.float32) + bfv_ref[...]
        h = jnp.maximum(h, 0.0).astype(jnp.bfloat16)                     # (B, hidden)
        wc_cp.wait()
        z = jnp.dot(h, wc_vmem[...], preferred_element_type=jnp.float32) + bcv_ref[...]
        lm_ref[...] = z[:, :nc]                                          # logits_main (/T folded)
        la_ref[...] = z[:, nc:]                                          # logits_aux

    def full(shape):
        return pl.BlockSpec(shape, lambda i, _n=len(shape): (0,) * _n)

    cost = pl.CostEstimate(
        flops=int(2 * Cf * Cin * B * S + 4 * Cf * B * S + 2 * B * n_rows * Cf * S
                  + 2 * B * d_comb * hidden + 2 * B * hidden * nc2),
        transcendentals=int(B * S),
        bytes_accessed=int(2 * (Cin * B * S + Cf * Cin + n_rows * S
                                + d_comb * hidden + hidden * nc2)
                           + 4 * (2 * Cf + 1 + hidden + nc2 + 2 * B * nc)),
    )

    fer = pl.pallas_call(
        kernel,
        out_shape=(jax.ShapeDtypeStruct((B, nc), jnp.float32),
                   jax.ShapeDtypeStruct((B, nc), jnp.float32)),
        grid=(1,),
        in_specs=[
            full((Cin, B * S)),                      # xt (bf16)
            full((Cf, Cin)),                         # wbT (bf16)
            full((Cf, 1)),                           # bb
            full((Cf, 1)),                           # waC
            full((1, 1)),                            # ba
            full((n_rows, S)),                       # M (bf16)
            full((1, hidden)),                       # bf (BN-folded bias)
            full((1, nc2)),                          # bc (fused classifier bias)
            pl.BlockSpec(memory_space=pl.ANY),       # wf stays in HBM; in-kernel DMA
            pl.BlockSpec(memory_space=pl.ANY),       # wc stays in HBM; in-kernel DMA
        ],
        out_specs=(full((B, nc)), full((B, nc))),
        scratch_shapes=[
            pltpu.VMEM((B, d_comb), jnp.float32),        # combined features (lane-dense)
            pltpu.VMEM((d_comb, hidden), jnp.bfloat16),  # wf landing buffer
            pltpu.VMEM((hidden, nc2), jnp.bfloat16),     # wc landing buffer
            pltpu.SemaphoreType.DMA((2,)),
        ],
        compiler_params=pltpu.CompilerParams(dimension_semantics=("arbitrary",)),
        cost_estimate=cost,
    )
    logits_main, logits_aux = fer(
        xt, kp["wbT"], kp["bb"], kp["waC"], kp["ba"], kp["M"], kp["bf"], kp["bc"],
        kp["wf"], kp["wc"])
    return logits_main, logits_aux


if __name__ == "__main__":
    key = jax.random.PRNGKey(0)
    kx, kp_key = jax.random.split(key)
    B, Cin, H, W = 2, 4, 16, 16
    Cf = 32          # small stand-in for backbone feature_dim
    num_classes = 7

    x = jax.random.normal(kx, (B, Cin, H, W), jnp.float32)
    torch_layout_params = init_params(kp_key, Cin, Cf, num_classes=num_classes, hidden=1024)
    kparams = prepare_params(torch_layout_params, H, W)

    fwd = jax.jit(state_of_art_fer_forward)
    logits_main, logits_aux = fwd(x, kparams)
    jax.block_until_ready((logits_main, logits_aux))

    assert logits_main.shape == (B, num_classes)
    assert logits_aux.shape == (B, num_classes)
    assert bool(jnp.all(jnp.isfinite(logits_main))) and bool(jnp.all(jnp.isfinite(logits_aux)))
    print("KERNEL_OK")
</pallas_src>

<mosaic_0001>
module attributes {stable_mosaic.version = 11 : i64} {
  func.func @kernel(%arg0: i32, %arg1: memref<4x512xbf16, #tpu.memory_space<vmem>>, %arg2: memref<32x4xbf16, #tpu.memory_space<vmem>>, %arg3: memref<32x1xf32, #tpu.memory_space<vmem>>, %arg4: memref<32x1xf32, #tpu.memory_space<vmem>>, %arg5: memref<1x1xf32, #tpu.memory_space<vmem>>, %arg6: memref<15x256xbf16, #tpu.memory_space<vmem>>, %arg7: memref<1x1024xf32, #tpu.memory_space<vmem>>, %arg8: memref<1x14xf32, #tpu.memory_space<vmem>>, %arg9: memref<480x1024xbf16, #tpu.memory_space<any>>, %arg10: memref<1024x14xbf16, #tpu.memory_space<any>>, %arg11: memref<2x7xf32, #tpu.memory_space<vmem>>, %arg12: memref<2x7xf32, #tpu.memory_space<vmem>>, %arg13: memref<2x480xf32, #tpu.memory_space<vmem>>, %arg14: memref<480x1024xbf16, #tpu.memory_space<vmem>>, %arg15: memref<1024x14xbf16, #tpu.memory_space<vmem>>, %arg16: memref<2x!tpu.dma_semaphore, #tpu.memory_space<semaphore_mem>>) attributes {dimension_semantics = [#tpu.dimension_semantics<arbitrary>], iteration_bounds = array<i64: 1>, scalar_prefetch = 0 : i64, scratch_operands = 4 : i64, tpu.core_type = #tpu.core_type<tc>, window_params = [{pipeline_mode = #tpu.pipeline_mode<synchronous>, transform_indices = @transform_0, window_bounds = array<i64: 4, 512>}, {pipeline_mode = #tpu.pipeline_mode<synchronous>, transform_indices = @transform_1, window_bounds = array<i64: 32, 4>}, {pipeline_mode = #tpu.pipeline_mode<synchronous>, transform_indices = @transform_2, window_bounds = array<i64: 32, 1>}, {pipeline_mode = #tpu.pipeline_mode<synchronous>, transform_indices = @transform_3, window_bounds = array<i64: 32, 1>}, {pipeline_mode = #tpu.pipeline_mode<synchronous>, transform_indices = @transform_4, window_bounds = array<i64: 1, 1>}, {pipeline_mode = #tpu.pipeline_mode<synchronous>, transform_indices = @transform_5, window_bounds = array<i64: 15, 256>}, {pipeline_mode = #tpu.pipeline_mode<synchronous>, transform_indices = @transform_6, window_bounds = array<i64: 1, 1024>}, {pipeline_mode = #tpu.pipeline_mode<synchronous>, transform_indices = @transform_7, window_bounds = array<i64: 1, 14>}, {}, {}, {pipeline_mode = #tpu.pipeline_mode<synchronous>, transform_indices = @transform_10, window_bounds = array<i64: 2, 7>}, {pipeline_mode = #tpu.pipeline_mode<synchronous>, transform_indices = @transform_11, window_bounds = array<i64: 2, 7>}]} {
    %c0_i32 = arith.constant 0 : i32
    %0 = tpu.memref_slice %arg16[%c0_i32] : memref<2x!tpu.dma_semaphore, #tpu.memory_space<semaphore_mem>> -> memref<1x!tpu.dma_semaphore, #tpu.memory_space<semaphore_mem>>
    %1 = tpu.memref_squeeze %0 : memref<1x!tpu.dma_semaphore, #tpu.memory_space<semaphore_mem>> -> memref<!tpu.dma_semaphore, #tpu.memory_space<semaphore_mem>>
    tpu.enqueue_dma source(%arg9 : memref<480x1024xbf16, #tpu.memory_space<any>>) target(%arg14 : memref<480x1024xbf16, #tpu.memory_space<vmem>>) target_semaphore(%1 : memref<!tpu.dma_semaphore, #tpu.memory_space<semaphore_mem>>)
    %c1_i32 = arith.constant 1 : i32
    %2 = tpu.memref_slice %arg16[%c1_i32] : memref<2x!tpu.dma_semaphore, #tpu.memory_space<semaphore_mem>> -> memref<1x!tpu.dma_semaphore, #tpu.memory_space<semaphore_mem>>
    %3 = tpu.memref_squeeze %2 : memref<1x!tpu.dma_semaphore, #tpu.memory_space<semaphore_mem>> -> memref<!tpu.dma_semaphore, #tpu.memory_space<semaphore_mem>>
    tpu.enqueue_dma source(%arg10 : memref<1024x14xbf16, #tpu.memory_space<any>>) target(%arg15 : memref<1024x14xbf16, #tpu.memory_space<vmem>>) target_semaphore(%3 : memref<!tpu.dma_semaphore, #tpu.memory_space<semaphore_mem>>)
    %c0 = arith.constant 0 : index
    %c0_0 = arith.constant 0 : index
    %4 = vector.load %arg2[%c0, %c0_0] : memref<32x4xbf16, #tpu.memory_space<vmem>>, vector<32x4xbf16>
    %c0_1 = arith.constant 0 : index
    %c0_2 = arith.constant 0 : index
    %5 = vector.load %arg1[%c0_1, %c0_2] : memref<4x512xbf16, #tpu.memory_space<vmem>>, vector<4x512xbf16>
    %cst = arith.constant dense<0.000000e+00> : vector<32x512xf32>
    %6 = tpu.matmul %4, %5, %cst {dimension_numbers = #tpu.dot_dimension_numbers<[1], [0], [0], [1], [0, 0, 1, 1], [], []>} : vector<32x4xbf16>, vector<4x512xbf16>, vector<32x512xf32> -> vector<32x512xf32>
    %c0_3 = arith.constant 0 : index
    %c0_4 = arith.constant 0 : index
    %7 = vector.load %arg3[%c0_3, %c0_4] : memref<32x1xf32, #tpu.memory_space<vmem>>, vector<32x1xf32>
    %8 = vector.broadcast %7 : vector<32x1xf32> to vector<32x512xf32>
    %9 = arith.addf %6, %8 : vector<32x512xf32>
    %cst_5 = arith.constant 0.000000e+00 : f32
    %10 = vector.broadcast %cst_5 : f32 to vector<32x512xf32>
    %11 = arith.maximumf %9, %10 : vector<32x512xf32>
    %c0_6 = arith.constant 0 : index
    %c0_7 = arith.constant 0 : index
    %12 = vector.load %arg4[%c0_6, %c0_7] : memref<32x1xf32, #tpu.memory_space<vmem>>, vector<32x1xf32>
    %13 = vector.broadcast %12 : vector<32x1xf32> to vector<32x512xf32>
    %14 = arith.mulf %13, %11 : vector<32x512xf32>
    %cst_8 = arith.constant dense<0.000000e+00> : vector<512xf32>
    %15 = vector.multi_reduction <add>, %14, %cst_8 [0] : vector<32x512xf32> to vector<512xf32>
    %16 = vector.shape_cast %15 : vector<512xf32> to vector<1x512xf32>
    %c0_9 = arith.constant 0 : index
    %c0_10 = arith.constant 0 : index
    %17 = vector.load %arg5[%c0_9, %c0_10] : memref<1x1xf32, #tpu.memory_space<vmem>>, vector<1x1xf32>
    %18 = vector.broadcast %17 : vector<1x1xf32> to vector<1x512xf32>
    %19 = arith.addf %16, %18 : vector<1x512xf32>
    %20 = arith.truncf %11 : vector<32x512xf32> to vector<32x512xbf16>
    %21 = tpu.iota {dimensions = array<i32: 0>} : vector<15x1xi32>
    %22 = vector.extract_strided_slice %19 {offsets = [0, 0], sizes = [1, 256], strides = [1, 1]} : vector<1x512xf32> to vector<1x256xf32>
    %cst_11 = arith.constant dense<0xFF800000> : vector<1xf32>
    %23 = vector.multi_reduction <maximumf>, %22, %cst_11 [1] : vector<1x256xf32> to vector<1xf32>
    %24 = vector.shape_cast %23 : vector<1xf32> to vector<1x1xf32>
    %25 = vector.broadcast %24 : vector<1x1xf32> to vector<1x256xf32>
    %26 = arith.subf %22, %25 : vector<1x256xf32>
    %27 = math.exp %26 : vector<1x256xf32>
    %cst_12 = arith.constant dense<0.000000e+00> : vector<1xf32>
    %28 = vector.multi_reduction <add>, %27, %cst_12 [1] : vector<1x256xf32> to vector<1xf32>
    %29 = vector.shape_cast %28 : vector<1xf32> to vector<1x1xf32>
    %30 = vector.broadcast %29 : vector<1x1xf32> to vector<1x256xf32>
    %31 = arith.divf %27, %30 : vector<1x256xf32>
    %c14_i32 = arith.constant 14 : i32
    %32 = vector.broadcast %c14_i32 : i32 to vector<15x1xi32>
    %33 = arith.cmpi eq, %21, %32 : vector<15x1xi32>
    %34 = arith.truncf %31 : vector<1x256xf32> to vector<1x256xbf16>
    %c0_13 = arith.constant 0 : index
    %c0_14 = arith.constant 0 : index
    %35 = vector.load %arg6[%c0_13, %c0_14] : memref<15x256xbf16, #tpu.memory_space<vmem>>, vector<15x256xbf16>
    %36 = vector.shape_cast %33 : vector<15x1xi1> to vector<15x1xi1>
    %37 = vector.broadcast %36 : vector<15x1xi1> to vector<15x256xi1>
    %38 = vector.shape_cast %34 : vector<1x256xbf16> to vector<1x256xbf16>
    %39 = vector.broadcast %38 : vector<1x256xbf16> to vector<15x256xbf16>
    %40 = arith.select %37, %39, %35 : vector<15x256xi1>, vector<15x256xbf16>
    %41 = vector.extract_strided_slice %20 {offsets = [0, 0], sizes = [32, 256], strides = [1, 1]} : vector<32x512xbf16> to vector<32x256xbf16>
    %cst_15 = arith.constant dense<0.000000e+00> : vector<15x32xf32>
    %42 = tpu.matmul %40, %41, %cst_15 {dimension_numbers = #tpu.dot_dimension_numbers<[1], [1], [0], [0], [0, 0, 1, 0], [], []>} : vector<15x256xbf16>, vector<32x256xbf16>, vector<15x32xf32> -> vector<15x32xf32>
    %43 = vector.extract_strided_slice %42 {offsets = [0, 0], sizes = [1, 32], strides = [1, 1]} : vector<15x32xf32> to vector<1x32xf32>
    %c0_16 = arith.constant 0 : index
    %c0_17 = arith.constant 0 : index
    %44 = vector.load %arg13[%c0_16, %c0_17] : memref<2x480xf32, #tpu.memory_space<vmem>>, vector<1x32xf32>
    tpu.vector_store %arg13[%c0_16, %c0_17], %43 {strides = array<i32>} : memref<2x480xf32, #tpu.memory_space<vmem>>, vector<1x32xf32>,
    %45 = vector.extract_strided_slice %42 {offsets = [1, 0], sizes = [1, 32], strides = [1, 1]} : vector<15x32xf32> to vector<1x32xf32>
    %c0_18 = arith.constant 0 : index
    %c32 = arith.constant 32 : index
    %46 = vector.load %arg13[%c0_18, %c32] : memref<2x480xf32, #tpu.memory_space<vmem>>, vector<1x32xf32>
    tpu.vector_store %arg13[%c0_18, %c32], %45 {strides = array<i32>} : memref<2x480xf32, #tpu.memory_space<vmem>>, vector<1x32xf32>,
    %47 = vector.extract_strided_slice %42 {offsets = [2, 0], sizes = [1, 32], strides = [1, 1]} : vector<15x32xf32> to vector<1x32xf32>
    %c0_19 = arith.constant 0 : index
    %c64 = arith.constant 64 : index
    %48 = vector.load %arg13[%c0_19, %c64] : memref<2x480xf32, #tpu.memory_space<vmem>>, vector<1x32xf32>
    tpu.vector_store %arg13[%c0_19, %c64], %47 {strides = array<i32>} : memref<2x480xf32, #tpu.memory_space<vmem>>, vector<1x32xf32>,
    %49 = vector.extract_strided_slice %42 {offsets = [3, 0], sizes = [1, 32], strides = [1, 1]} : vector<15x32xf32> to vector<1x32xf32>
    %c0_20 = arith.constant 0 : index
    %c96 = arith.constant 96 : index
    %50 = vector.load %arg13[%c0_20, %c96] : memref<2x480xf32, #tpu.memory_space<vmem>>, vector<1x32xf32>
    tpu.vector_store %arg13[%c0_20, %c96], %49 {strides = array<i32>} : memref<2x480xf32, #tpu.memory_space<vmem>>, vector<1x32xf32>,
    %51 = vector.extract_strided_slice %42 {offsets = [4, 0], sizes = [1, 32], strides = [1, 1]} : vector<15x32xf32> to vector<1x32xf32>
    %c0_21 = arith.constant 0 : index
    %c128 = arith.constant 128 : index
    %52 = vector.load %arg13[%c0_21, %c128] : memref<2x480xf32, #tpu.memory_space<vmem>>, vector<1x32xf32>
    tpu.vector_store %arg13[%c0_21, %c128], %51 {strides = array<i32>} : memref<2x480xf32, #tpu.memory_space<vmem>>, vector<1x32xf32>,
    %53 = vector.extract_strided_slice %42 {offsets = [5, 0], sizes = [1, 32], strides = [1, 1]} : vector<15x32xf32> to vector<1x32xf32>
    %c0_22 = arith.constant 0 : index
    %c160 = arith.constant 160 : index
    %54 = vector.load %arg13[%c0_22, %c160] : memref<2x480xf32, #tpu.memory_space<vmem>>, vector<1x32xf32>
    tpu.vector_store %arg13[%c0_22, %c160], %53 {strides = array<i32>} : memref<2x480xf32, #tpu.memory_space<vmem>>, vector<1x32xf32>,
    %55 = vector.extract_strided_slice %42 {offsets = [6, 0], sizes = [1, 32], strides = [1, 1]} : vector<15x32xf32> to vector<1x32xf32>
    %c0_23 = arith.constant 0 : index
    %c192 = arith.constant 192 : index
    %56 = vector.load %arg13[%c0_23, %c192] : memref<2x480xf32, #tpu.memory_space<vmem>>, vector<1x32xf32>
    tpu.vector_store %arg13[%c0_23, %c192], %55 {strides = array<i32>} : memref<2x480xf32, #tpu.memory_space<vmem>>, vector<1x32xf32>,
    %57 = vector.extract_strided_slice %42 {offsets = [7, 0], sizes = [1, 32], strides = [1, 1]} : vector<15x32xf32> to vector<1x32xf32>
    %c0_24 = arith.constant 0 : index
    %c224 = arith.constant 224 : index
    %58 = vector.load %arg13[%c0_24, %c224] : memref<2x480xf32, #tpu.memory_space<vmem>>, vector<1x32xf32>
    tpu.vector_store %arg13[%c0_24, %c224], %57 {strides = array<i32>} : memref<2x480xf32, #tpu.memory_space<vmem>>, vector<1x32xf32>,
    %59 = vector.extract_strided_slice %42 {offsets = [8, 0], sizes = [1, 32], strides = [1, 1]} : vector<15x32xf32> to vector<1x32xf32>
    %c0_25 = arith.constant 0 : index
    %c256 = arith.constant 256 : index
    %60 = vector.load %arg13[%c0_25, %c256] : memref<2x480xf32, #tpu.memory_space<vmem>>, vector<1x32xf32>
    tpu.vector_store %arg13[%c0_25, %c256], %59 {strides = array<i32>} : memref<2x480xf32, #tpu.memory_space<vmem>>, vector<1x32xf32>,
    %61 = vector.extract_strided_slice %42 {offsets = [9, 0], sizes = [1, 32], strides = [1, 1]} : vector<15x32xf32> to vector<1x32xf32>
    %c0_26 = arith.constant 0 : index
    %c288 = arith.constant 288 : index
    %62 = vector.load %arg13[%c0_26, %c288] : memref<2x480xf32, #tpu.memory_space<vmem>>, vector<1x32xf32>
    tpu.vector_store %arg13[%c0_26, %c288], %61 {strides = array<i32>} : memref<2x480xf32, #tpu.memory_space<vmem>>, vector<1x32xf32>,
    %63 = vector.extract_strided_slice %42 {offsets = [10, 0], sizes = [1, 32], strides = [1, 1]} : vector<15x32xf32> to vector<1x32xf32>
    %c0_27 = arith.constant 0 : index
    %c320 = arith.constant 320 : index
    %64 = vector.load %arg13[%c0_27, %c320] : memref<2x480xf32, #tpu.memory_space<vmem>>, vector<1x32xf32>
    tpu.vector_store %arg13[%c0_27, %c320], %63 {strides = array<i32>} : memref<2x480xf32, #tpu.memory_space<vmem>>, vector<1x32xf32>,
    %65 = vector.extract_strided_slice %42 {offsets = [11, 0], sizes = [1, 32], strides = [1, 1]} : vector<15x32xf32> to vector<1x32xf32>
    %c0_28 = arith.constant 0 : index
    %c352 = arith.constant 352 : index
    %66 = vector.load %arg13[%c0_28, %c352] : memref<2x480xf32, #tpu.memory_space<vmem>>, vector<1x32xf32>
    tpu.vector_store %arg13[%c0_28, %c352], %65 {strides = array<i32>} : memref<2x480xf32, #tpu.memory_space<vmem>>, vector<1x32xf32>,
    %67 = vector.extract_strided_slice %42 {offsets = [12, 0], sizes = [1, 32], strides = [1, 1]} : vector<15x32xf32> to vector<1x32xf32>
    %c0_29 = arith.constant 0 : index
    %c384 = arith.constant 384 : index
    %68 = vector.load %arg13[%c0_29, %c384] : memref<2x480xf32, #tpu.memory_space<vmem>>, vector<1x32xf32>
    tpu.vector_store %arg13[%c0_29, %c384], %67 {strides = array<i32>} : memref<2x480xf32, #tpu.memory_space<vmem>>, vector<1x32xf32>,
    %69 = vector.extract_strided_slice %42 {offsets = [13, 0], sizes = [1, 32], strides = [1, 1]} : vector<15x32xf32> to vector<1x32xf32>
    %c0_30 = arith.constant 0 : index
    %c416 = arith.constant 416 : index
    %70 = vector.load %arg13[%c0_30, %c416] : memref<2x480xf32, #tpu.memory_space<vmem>>, vector<1x32xf32>
    tpu.vector_store %arg13[%c0_30, %c416], %69 {strides = array<i32>} : memref<2x480xf32, #tpu.memory_space<vmem>>, vector<1x32xf32>,
    %71 = vector.extract_strided_slice %42 {offsets = [14, 0], sizes = [1, 32], strides = [1, 1]} : vector<15x32xf32> to vector<1x32xf32>
    %c0_31 = arith.constant 0 : index
    %c448 = arith.constant 448 : index
    %72 = vector.load %arg13[%c0_31, %c448] : memref<2x480xf32, #tpu.memory_space<vmem>>, vector<1x32xf32>
    tpu.vector_store %arg13[%c0_31, %c448], %71 {strides = array<i32>} : memref<2x480xf32, #tpu.memory_space<vmem>>, vector<1x32xf32>,
    %73 = vector.extract_strided_slice %19 {offsets = [0, 256], sizes = [1, 256], strides = [1, 1]} : vector<1x512xf32> to vector<1x256xf32>
    %cst_32 = arith.constant dense<0xFF800000> : vector<1xf32>
    %74 = vector.multi_reduction <maximumf>, %73, %cst_32 [1] : vector<1x256xf32> to vector<1xf32>
    %75 = vector.shape_cast %74 : vector<1xf32> to vector<1x1xf32>
    %76 = vector.broadcast %75 : vector<1x1xf32> to vector<1x256xf32>
    %77 = arith.subf %73, %76 : vector<1x256xf32>
    %78 = math.exp %77 : vector<1x256xf32>
    %cst_33 = arith.constant dense<0.000000e+00> : vector<1xf32>
    %79 = vector.multi_reduction <add>, %78, %cst_33 [1] : vector<1x256xf32> to vector<1xf32>
    %80 = vector.shape_cast %79 : vector<1xf32> to vector<1x1xf32>
    %81 = vector.broadcast %80 : vector<1x1xf32> to vector<1x256xf32>
    %82 = arith.divf %78, %81 : vector<1x256xf32>
    %c14_i32_34 = arith.constant 14 : i32
    %83 = vector.broadcast %c14_i32_34 : i32 to vector<15x1xi32>
    %84 = arith.cmpi eq, %21, %83 : vector<15x1xi32>
    %85 = arith.truncf %82 : vector<1x256xf32> to vector<1x256xbf16>
    %c0_35 = arith.constant 0 : index
    %c0_36 = arith.constant 0 : index
    %86 = vector.load %arg6[%c0_35, %c0_36] : memref<15x256xbf16, #tpu.memory_space<vmem>>, vector<15x256xbf16>
    %87 = vector.shape_cast %84 : vector<15x1xi1> to vector<15x1xi1>
    %88 = vector.broadcast %87 : vector<15x1xi1> to vector<15x256xi1>
    %89 = vector.shape_cast %85 : vector<1x256xbf16> to vector<1x256xbf16>
    %90 = vector.broadcast %89 : vector<1x256xbf16> to vector<15x256xbf16>
    %91 = arith.select %88, %90, %86 : vector<15x256xi1>, vector<15x256xbf16>
    %92 = vector.extract_strided_slice %20 {offsets = [0, 256], sizes = [32, 256], strides = [1, 1]} : vector<32x512xbf16> to vector<32x256xbf16>
    %cst_37 = arith.constant dense<0.000000e+00> : vector<15x32xf32>
    %93 = tpu.matmul %91, %92, %cst_37 {dimension_numbers = #tpu.dot_dimension_numbers<[1], [1], [0], [0], [0, 0, 1, 0], [], []>} : vector<15x256xbf16>, vector<32x256xbf16>, vector<15x32xf32> -> vector<15x32xf32>
    %94 = vector.extract_strided_slice %93 {offsets = [0, 0], sizes = [1, 32], strides = [1, 1]} : vector<15x32xf32> to vector<1x32xf32>
    %c1 = arith.constant 1 : index
    %c0_38 = arith.constant 0 : index
    %95 = vector.load %arg13[%c1, %c0_38] : memref<2x480xf32, #tpu.memory_space<vmem>>, vector<1x32xf32>
    tpu.vector_store %arg13[%c1, %c0_38], %94 {strides = array<i32>} : memref<2x480xf32, #tpu.memory_space<vmem>>, vector<1x32xf32>,
    %96 = vector.extract_strided_slice %93 {offsets = [1, 0], sizes = [1, 32], strides = [1, 1]} : vector<15x32xf32> to vector<1x32xf32>
    %c1_39 = arith.constant 1 : index
    %c32_40 = arith.constant 32 : index
    %97 = vector.load %arg13[%c1_39, %c32_40] : memref<2x480xf32, #tpu.memory_space<vmem>>, vector<1x32xf32>
    tpu.vector_store %arg13[%c1_39, %c32_40], %96 {strides = array<i32>} : memref<2x480xf32, #tpu.memory_space<vmem>>, vector<1x32xf32>,
    %98 = vector.extract_strided_slice %93 {offsets = [2, 0], sizes = [1, 32], strides = [1, 1]} : vector<15x32xf32> to vector<1x32xf32>
    %c1_41 = arith.constant 1 : index
    %c64_42 = arith.constant 64 : index
    %99 = vector.load %arg13[%c1_41, %c64_42] : memref<2x480xf32, #tpu.memory_space<vmem>>, vector<1x32xf32>
    tpu.vector_store %arg13[%c1_41, %c64_42], %98 {strides = array<i32>} : memref<2x480xf32, #tpu.memory_space<vmem>>, vector<1x32xf32>,
    %100 = vector.extract_strided_slice %93 {offsets = [3, 0], sizes = [1, 32], strides = [1, 1]} : vector<15x32xf32> to vector<1x32xf32>
    %c1_43 = arith.constant 1 : index
    %c96_44 = arith.constant 96 : index
    %101 = vector.load %arg13[%c1_43, %c96_44] : memref<2x480xf32, #tpu.memory_space<vmem>>, vector<1x32xf32>
    tpu.vector_store %arg13[%c1_43, %c96_44], %100 {strides = array<i32>} : memref<2x480xf32, #tpu.memory_space<vmem>>, vector<1x32xf32>,
    %102 = vector.extract_strided_slice %93 {offsets = [4, 0], sizes = [1, 32], strides = [1, 1]} : vector<15x32xf32> to vector<1x32xf32>
    %c1_45 = arith.constant 1 : index
    %c128_46 = arith.constant 128 : index
    %103 = vector.load %arg13[%c1_45, %c128_46] : memref<2x480xf32, #tpu.memory_space<vmem>>, vector<1x32xf32>
    tpu.vector_store %arg13[%c1_45, %c128_46], %102 {strides = array<i32>} : memref<2x480xf32, #tpu.memory_space<vmem>>, vector<1x32xf32>,
    %104 = vector.extract_strided_slice %93 {offsets = [5, 0], sizes = [1, 32], strides = [1, 1]} : vector<15x32xf32> to vector<1x32xf32>
    %c1_47 = arith.constant 1 : index
    %c160_48 = arith.constant 160 : index
    %105 = vector.load %arg13[%c1_47, %c160_48] : memref<2x480xf32, #tpu.memory_space<vmem>>, vector<1x32xf32>
    tpu.vector_store %arg13[%c1_47, %c160_48], %104 {strides = array<i32>} : memref<2x480xf32, #tpu.memory_space<vmem>>, vector<1x32xf32>,
    %106 = vector.extract_strided_slice %93 {offsets = [6, 0], sizes = [1, 32], strides = [1, 1]} : vector<15x32xf32> to vector<1x32xf32>
    %c1_49 = arith.constant 1 : index
    %c192_50 = arith.constant 192 : index
    %107 = vector.load %arg13[%c1_49, %c192_50] : memref<2x480xf32, #tpu.memory_space<vmem>>, vector<1x32xf32>
    tpu.vector_store %arg13[%c1_49, %c192_50], %106 {strides = array<i32>} : memref<2x480xf32, #tpu.memory_space<vmem>>, vector<1x32xf32>,
    %108 = vector.extract_strided_slice %93 {offsets = [7, 0], sizes = [1, 32], strides = [1, 1]} : vector<15x32xf32> to vector<1x32xf32>
    %c1_51 = arith.constant 1 : index
    %c224_52 = arith.constant 224 : index
    %109 = vector.load %arg13[%c1_51, %c224_52] : memref<2x480xf32, #tpu.memory_space<vmem>>, vector<1x32xf32>
    tpu.vector_store %arg13[%c1_51, %c224_52], %108 {strides = array<i32>} : memref<2x480xf32, #tpu.memory_space<vmem>>, vector<1x32xf32>,
    %110 = vector.extract_strided_slice %93 {offsets = [8, 0], sizes = [1, 32], strides = [1, 1]} : vector<15x32xf32> to vector<1x32xf32>
    %c1_53 = arith.constant 1 : index
    %c256_54 = arith.constant 256 : index
    %111 = vector.load %arg13[%c1_53, %c256_54] : memref<2x480xf32, #tpu.memory_space<vmem>>, vector<1x32xf32>
    tpu.vector_store %arg13[%c1_53, %c256_54], %110 {strides = array<i32>} : memref<2x480xf32, #tpu.memory_space<vmem>>, vector<1x32xf32>,
    %112 = vector.extract_strided_slice %93 {offsets = [9, 0], sizes = [1, 32], strides = [1, 1]} : vector<15x32xf32> to vector<1x32xf32>
    %c1_55 = arith.constant 1 : index
    %c288_56 = arith.constant 288 : index
    %113 = vector.load %arg13[%c1_55, %c288_56] : memref<2x480xf32, #tpu.memory_space<vmem>>, vector<1x32xf32>
    tpu.vector_store %arg13[%c1_55, %c288_56], %112 {strides = array<i32>} : memref<2x480xf32, #tpu.memory_space<vmem>>, vector<1x32xf32>,
    %114 = vector.extract_strided_slice %93 {offsets = [10, 0], sizes = [1, 32], strides = [1, 1]} : vector<15x32xf32> to vector<1x32xf32>
    %c1_57 = arith.constant 1 : index
    %c320_58 = arith.constant 320 : index
    %115 = vector.load %arg13[%c1_57, %c320_58] : memref<2x480xf32, #tpu.memory_space<vmem>>, vector<1x32xf32>
    tpu.vector_store %arg13[%c1_57, %c320_58], %114 {strides = array<i32>} : memref<2x480xf32, #tpu.memory_space<vmem>>, vector<1x32xf32>,
    %116 = vector.extract_strided_slice %93 {offsets = [11, 0], sizes = [1, 32], strides = [1, 1]} : vector<15x32xf32> to vector<1x32xf32>
    %c1_59 = arith.constant 1 : index
    %c352_60 = arith.constant 352 : index
    %117 = vector.load %arg13[%c1_59, %c352_60] : memref<2x480xf32, #tpu.memory_space<vmem>>, vector<1x32xf32>
    tpu.vector_store %arg13[%c1_59, %c352_60], %116 {strides = array<i32>} : memref<2x480xf32, #tpu.memory_space<vmem>>, vector<1x32xf32>,
    %118 = vector.extract_strided_slice %93 {offsets = [12, 0], sizes = [1, 32], strides = [1, 1]} : vector<15x32xf32> to vector<1x32xf32>
    %c1_61 = arith.constant 1 : index
    %c384_62 = arith.constant 384 : index
    %119 = vector.load %arg13[%c1_61, %c384_62] : memref<2x480xf32, #tpu.memory_space<vmem>>, vector<1x32xf32>
    tpu.vector_store %arg13[%c1_61, %c384_62], %118 {strides = array<i32>} : memref<2x480xf32, #tpu.memory_space<vmem>>, vector<1x32xf32>,
    %120 = vector.extract_strided_slice %93 {offsets = [13, 0], sizes = [1, 32], strides = [1, 1]} : vector<15x32xf32> to vector<1x32xf32>
    %c1_63 = arith.constant 1 : index
    %c416_64 = arith.constant 416 : index
    %121 = vector.load %arg13[%c1_63, %c416_64] : memref<2x480xf32, #tpu.memory_space<vmem>>, vector<1x32xf32>
    tpu.vector_store %arg13[%c1_63, %c416_64], %120 {strides = array<i32>} : memref<2x480xf32, #tpu.memory_space<vmem>>, vector<1x32xf32>,
    %122 = vector.extract_strided_slice %93 {offsets = [14, 0], sizes = [1, 32], strides = [1, 1]} : vector<15x32xf32> to vector<1x32xf32>
    %c1_65 = arith.constant 1 : index
    %c448_66 = arith.constant 448 : index
    %123 = vector.load %arg13[%c1_65, %c448_66] : memref<2x480xf32, #tpu.memory_space<vmem>>, vector<1x32xf32>
    tpu.vector_store %arg13[%c1_65, %c448_66], %122 {strides = array<i32>} : memref<2x480xf32, #tpu.memory_space<vmem>>, vector<1x32xf32>,
    %c0_i32_67 = arith.constant 0 : i32
    %124 = tpu.memref_slice %arg16[%c0_i32_67] : memref<2x!tpu.dma_semaphore, #tpu.memory_space<semaphore_mem>> -> memref<1x!tpu.dma_semaphore, #tpu.memory_space<semaphore_mem>>
    %125 = tpu.memref_squeeze %124 : memref<1x!tpu.dma_semaphore, #tpu.memory_space<semaphore_mem>> -> memref<!tpu.dma_semaphore, #tpu.memory_space<semaphore_mem>>
    tpu.wait_dma2 semaphore(%125 : memref<!tpu.dma_semaphore, #tpu.memory_space<semaphore_mem>>) src(%arg9 : memref<480x1024xbf16, #tpu.memory_space<any>>) dst(%arg14 : memref<480x1024xbf16, #tpu.memory_space<vmem>>)
    %c0_68 = arith.constant 0 : index
    %c0_69 = arith.constant 0 : index
    %126 = vector.load %arg13[%c0_68, %c0_69] : memref<2x480xf32, #tpu.memory_space<vmem>>, vector<2x480xf32>
    %127 = arith.truncf %126 : vector<2x480xf32> to vector<2x480xbf16>
    %c0_70 = arith.constant 0 : index
    %c0_71 = arith.constant 0 : index
    %128 = vector.load %arg14[%c0_70, %c0_71] : memref<480x1024xbf16, #tpu.memory_space<vmem>>, vector<480x1024xbf16>
    %cst_72 = arith.constant dense<0.000000e+00> : vector<2x1024xf32>
    %129 = tpu.matmul %127, %128, %cst_72 {dimension_numbers = #tpu.dot_dimension_numbers<[1], [0], [0], [1], [0, 0, 1, 1], [], []>} : vector<2x480xbf16>, vector<480x1024xbf16>, vector<2x1024xf32> -> vector<2x1024xf32>
    %c0_73 = arith.constant 0 : index
    %c0_74 = arith.constant 0 : index
    %130 = vector.load %arg7[%c0_73, %c0_74] : memref<1x1024xf32, #tpu.memory_space<vmem>>, vector<1x1024xf32>
    %131 = vector.broadcast %130 : vector<1x1024xf32> to vector<2x1024xf32>
    %132 = arith.addf %129, %131 : vector<2x1024xf32>
    %cst_75 = arith.constant 0.000000e+00 : f32
    %133 = vector.broadcast %cst_75 : f32 to vector<2x1024xf32>
    %134 = arith.maximumf %132, %133 : vector<2x1024xf32>
    %135 = arith.truncf %134 : vector<2x1024xf32> to vector<2x1024xbf16>
    %c1_i32_76 = arith.constant 1 : i32
    %136 = tpu.memref_slice %arg16[%c1_i32_76] : memref<2x!tpu.dma_semaphore, #tpu.memory_space<semaphore_mem>> -> memref<1x!tpu.dma_semaphore, #tpu.memory_space<semaphore_mem>>
    %137 = tpu.memref_squeeze %136 : memref<1x!tpu.dma_semaphore, #tpu.memory_space<semaphore_mem>> -> memref<!tpu.dma_semaphore, #tpu.memory_space<semaphore_mem>>
    tpu.wait_dma2 semaphore(%137 : memref<!tpu.dma_semaphore, #tpu.memory_space<semaphore_mem>>) src(%arg10 : memref<1024x14xbf16, #tpu.memory_space<any>>) dst(%arg15 : memref<1024x14xbf16, #tpu.memory_space<vmem>>)
    %c0_77 = arith.constant 0 : index
    %c0_78 = arith.constant 0 : index
    %138 = vector.load %arg15[%c0_77, %c0_78] : memref<1024x14xbf16, #tpu.memory_space<vmem>>, vector<1024x14xbf16>
    %cst_79 = arith.constant dense<0.000000e+00> : vector<2x14xf32>
    %139 = tpu.matmul %135, %138, %cst_79 {dimension_numbers = #tpu.dot_dimension_numbers<[1], [0], [0], [1], [0, 0, 1, 1], [], []>} : vector<2x1024xbf16>, vector<1024x14xbf16>, vector<2x14xf32> -> vector<2x14xf32>
    %c0_80 = arith.constant 0 : index
    %c0_81 = arith.constant 0 : index
    %140 = vector.load %arg8[%c0_80, %c0_81] : memref<1x14xf32, #tpu.memory_space<vmem>>, vector<1x14xf32>
    %141 = vector.broadcast %140 : vector<1x14xf32> to vector<2x14xf32>
    %142 = arith.addf %139, %141 : vector<2x14xf32>
    %143 = vector.extract_strided_slice %142 {offsets = [0, 0], sizes = [2, 7], strides = [1, 1]} : vector<2x14xf32> to vector<2x7xf32>
    %c0_82 = arith.constant 0 : index
    %c0_83 = arith.constant 0 : index
    %144 = vector.load %arg11[%c0_82, %c0_83] : memref<2x7xf32, #tpu.memory_space<vmem>>, vector<2x7xf32>
    tpu.vector_store %arg11[%c0_82, %c0_83], %143 {strides = array<i32>} : memref<2x7xf32, #tpu.memory_space<vmem>>, vector<2x7xf32>,
    %145 = vector.extract_strided_slice %142 {offsets = [0, 7], sizes = [2, 7], strides = [1, 1]} : vector<2x14xf32> to vector<2x7xf32>
    %c0_84 = arith.constant 0 : index
    %c0_85 = arith.constant 0 : index
    %146 = vector.load %arg12[%c0_84, %c0_85] : memref<2x7xf32, #tpu.memory_space<vmem>>, vector<2x7xf32>
    tpu.vector_store %arg12[%c0_84, %c0_85], %145 {strides = array<i32>} : memref<2x7xf32, #tpu.memory_space<vmem>>, vector<2x7xf32>,
    return
  }
  func.func @transform_0(%arg0: i32) -> (i32, i32) {
    %c0_i32 = arith.constant 0 : i32
    %c0_i32_0 = arith.constant 0 : i32
    %c0_i32_1 = arith.constant 0 : i32
    return %c0_i32, %c0_i32_0 : i32, i32
  }
  func.func @transform_1(%arg0: i32) -> (i32, i32) {
    %c0_i32 = arith.constant 0 : i32
    %c0_i32_0 = arith.constant 0 : i32
    %c0_i32_1 = arith.constant 0 : i32
    return %c0_i32, %c0_i32_0 : i32, i32
  }
  func.func @transform_2(%arg0: i32) -> (i32, i32) {
    %c0_i32 = arith.constant 0 : i32
    %c0_i32_0 = arith.constant 0 : i32
    %c0_i32_1 = arith.constant 0 : i32
    return %c0_i32, %c0_i32_0 : i32, i32
  }
  func.func @transform_3(%arg0: i32) -> (i32, i32) {
    %c0_i32 = arith.constant 0 : i32
    %c0_i32_0 = arith.constant 0 : i32
    %c0_i32_1 = arith.constant 0 : i32
    return %c0_i32, %c0_i32_0 : i32, i32
  }
  func.func @transform_4(%arg0: i32) -> (i32, i32) {
    %c0_i32 = arith.constant 0 : i32
    %c0_i32_0 = arith.constant 0 : i32
    %c0_i32_1 = arith.constant 0 : i32
    return %c0_i32, %c0_i32_0 : i32, i32
  }
  func.func @transform_5(%arg0: i32) -> (i32, i32) {
    %c0_i32 = arith.constant 0 : i32
    %c0_i32_0 = arith.constant 0 : i32
    %c0_i32_1 = arith.constant 0 : i32
    return %c0_i32, %c0_i32_0 : i32, i32
  }
  func.func @transform_6(%arg0: i32) -> (i32, i32) {
    %c0_i32 = arith.constant 0 : i32
    %c0_i32_0 = arith.constant 0 : i32
    %c0_i32_1 = arith.constant 0 : i32
    return %c0_i32, %c0_i32_0 : i32, i32
  }
  func.func @transform_7(%arg0: i32) -> (i32, i32) {
    %c0_i32 = arith.constant 0 : i32
    %c0_i32_0 = arith.constant 0 : i32
    %c0_i32_1 = arith.constant 0 : i32
    return %c0_i32, %c0_i32_0 : i32, i32
  }
  func.func @transform_10(%arg0: i32) -> (i32, i32) {
    %c0_i32 = arith.constant 0 : i32
    %c0_i32_0 = arith.constant 0 : i32
    %c0_i32_1 = arith.constant 0 : i32
    return %c0_i32, %c0_i32_0 : i32, i32
  }
  func.func @transform_11(%arg0: i32) -> (i32, i32) {
    %c0_i32 = arith.constant 0 : i32
    %c0_i32_0 = arith.constant 0 : i32
    %c0_i32_1 = arith.constant 0 : i32
    return %c0_i32, %c0_i32_0 : i32, i32
  }
}

</mosaic_0001>

<llo_original>
// kernel: state_of_art_fer_forward.1
$region0: #{state_of_art_fer_forward.1}
  #allocation0 [shape = 'u32[]', space=smem, size = 0x4, offset = 0x4, fixed_abs, tag = 'smem constant byte address 0x4 - core index']
  #allocation1 [shape = 'u32[144,128]{1,0:T(1,128)}', space=vmem, size = 0x12000, scoped, tag = 'internal scratch']
  #allocation2 [shape = 'f32[2,480]{1,0:T(2,128)}', space=vmem, size = 0x1000, scoped, tag = 'scratch operand']
  #allocation3 [shape = 'bf16[480,1024]{1,0:T(8,128)(2,1)}', space=vmem, size = 0xf0000, scoped, tag = 'scratch operand']
  #allocation4 [shape = 'bf16[1024,14]{1,0:T(8,128)(2,1)}', space=vmem, size = 0x40000, scoped, tag = 'scratch operand']
  #allocation5 [shape = 's32[2]{0}', space=sflag, size = 0x8, scoped, tag = 'scratch operand']
  #allocation6 [shape = 'f32[1,1]{1,0:T(1,128)S(1)}', space=vmem, size = 0x200, scoped, tag = 'scoped memory for state_of_art_fer_forward.1']
  #allocation11 [shape = 's32[]', space=sflag, size = 0x4, offset = 0, fixed_abs, tag = 'sflag constant byte address 0x0 - dummy sync flag']
  #allocation12 [shape = 's32[]', space=sflag, size = 0x4, offset = 0, fixed_abs, tag = 'sflag constant byte address 0x0 - dummy sync flag']
  #allocation13 [shape = 'u32[]', space=smem, size = 0x4, offset = 0x44, fixed_abs, tag = 'smem constant byte address 0x44 - assertion arg 0']
  #allocation14 [shape = 'u32[]', space=smem, size = 0x4, offset = 0x48, fixed_abs, tag = 'smem constant byte address 0x48 - assertion arg 1']
  #allocation15 [shape = 's32[]', space=sflag, size = 0x4, offset = 0, fixed_abs, tag = 'sflag constant byte address 0x0 - dummy sync flag']
  %s0 = inlined_call_operand.vmem [shape: bf16[4,512], index: 0, kind: input, shape index: {}]
  %s1 = inlined_call_operand.vmem [shape: bf16[32,4], index: 1, kind: input, shape index: {}]
  %s2 = inlined_call_operand.vmem [shape: f32[32,1], index: 2, kind: input, shape index: {}]
  %s3 = inlined_call_operand.vmem [shape: f32[32,1], index: 3, kind: input, shape index: {}]
  %s4 = inlined_call_operand.<no memory space> [shape: f32[1,1], index: 4, kind: input, shape index: {}]
  %s5 = inlined_call_operand.vmem [shape: bf16[15,256], index: 5, kind: input, shape index: {}]
  %s6 = inlined_call_operand.vmem [shape: f32[1,1024], index: 6, kind: input, shape index: {}]
  %s7 = inlined_call_operand.vmem [shape: f32[1,14], index: 7, kind: input, shape index: {}]
  %s8 = inlined_call_operand.hbm [shape: bf16[480,1024], index: 8, kind: input, shape index: {}]
  %s9 = inlined_call_operand.vmem [shape: bf16[1024,14], index: 9, kind: input, shape index: {}]
  %s10 = inlined_call_operand.hbm [shape: f32[2,7], index: 10, kind: output, shape index: {0}]
  %s11 = inlined_call_operand.hbm [shape: f32[2,7], index: 11, kind: output, shape index: {1}]
  %12 = xla_tuple %s10, %s11
  %s13 = sld [smem:[#allocation0]]
  $region88: #{state_of_art_fer_forward.1} parent=0
    _
  %s15 = ssub.s32 1, %s13
  %s16 = scalar_select 0, %s15, %s13
  %v17 = vstv %s4
  %18 = vst [vmem:[#allocation6] sm:$0x1] %v17
  $region1: #{state_of_art_fer_forward.1} parent=0
    #allocation7 [shape = 'u8[1024]{0}', space=vmem, size = 0x400, scoped, tag = 'output window, operand 0, single buffered']
    #allocation8 [shape = 's32[1]{0}', space=sflag, size = 0x4, scoped, tag = 'scoped memory for state_of_art_fer_forward.1']
    #allocation9 [shape = 'u8[1024]{0}', space=vmem, size = 0x400, scoped, tag = 'output window, operand 1, single buffered']
    #allocation10 [shape = 's32[1]{0}', space=sflag, size = 0x4, scoped, tag = 'scoped memory for state_of_art_fer_forward.1']
    %19 = vsyncpa [#allocation8], 0
    %20 = vsyncpa [#allocation10], 0
    // Predicated region
    $region2: #{state_of_art_fer_forward.1} parent=1 // pred_check
      _
    $region3: #{state_of_art_fer_forward.1} parent=1 // pred_check_branch
      %22 = sbr.rel (0) target = $region5
    $region4: #{state_of_art_fer_forward.1} parent=1 // pred_region
      _
    $region5: #{state_of_art_fer_forward.1} parent=1 // pred_fallthru
      _
    // Predicated region
    $region6: #{state_of_art_fer_forward.1} parent=1 // pred_check
      _
    $region7: #{state_of_art_fer_forward.1} parent=1 // pred_check_branch
      %24 = sbr.rel (0) target = $region9
    $region8: #{state_of_art_fer_forward.1} parent=1 // pred_region
      _
    $region9: #{state_of_art_fer_forward.1} parent=1 // pred_fallthru
      _
    // Predicated region
    $region10: #{state_of_art_fer_forward.1} parent=1 // pred_check
      _
    $region11: #{state_of_art_fer_forward.1} parent=1 // pred_check_branch
      %26 = sbr.rel (0) target = $region13
    $region12: #{state_of_art_fer_forward.1} parent=1 // pred_region
      _
    $region13: #{state_of_art_fer_forward.1} parent=1 // pred_fallthru
      _
    // Predicated region
    $region14: #{state_of_art_fer_forward.1} parent=1 // pred_check
      _
    $region15: #{state_of_art_fer_forward.1} parent=1 // pred_check_branch
      %28 = sbr.rel (0) target = $region17
    $region16: #{state_of_art_fer_forward.1} parent=1 // pred_region
      _
    $region17: #{state_of_art_fer_forward.1} parent=1 // pred_fallthru
      _
    // Predicated region
    $region18: #{state_of_art_fer_forward.1} parent=1 // pred_check
      _
    $region19: #{state_of_art_fer_forward.1} parent=1 // pred_check_branch
      %30 = sbr.rel (0) target = $region21
    $region20: #{state_of_art_fer_forward.1} parent=1 // pred_region
      _
    $region21: #{state_of_art_fer_forward.1} parent=1 // pred_fallthru
      _
    // Predicated region
    $region22: #{state_of_art_fer_forward.1} parent=1 // pred_check
      _
    $region23: #{state_of_art_fer_forward.1} parent=1 // pred_check_branch
      %32 = sbr.rel (0) target = $region25
    $region24: #{state_of_art_fer_forward.1} parent=1 // pred_region
      _
    $region25: #{state_of_art_fer_forward.1} parent=1 // pred_fallthru
      _
    // Predicated region
    $region26: #{state_of_art_fer_forward.1} parent=1 // pred_check
      _
    $region27: #{state_of_art_fer_forward.1} parent=1 // pred_check_branch
      %34 = sbr.rel (0) target = $region29
    $region28: #{state_of_art_fer_forward.1} parent=1 // pred_region
      _
    $region29: #{state_of_art_fer_forward.1} parent=1 // pred_fallthru
      _
    // Predicated region
    $region30: #{state_of_art_fer_forward.1} parent=1 // pred_check
      _
    $region31: #{state_of_art_fer_forward.1} parent=1 // pred_check_branch
      %36 = sbr.rel (0) target = $region33
    $region32: #{state_of_art_fer_forward.1} parent=1 // pred_region
      _
    $region33: #{state_of_art_fer_forward.1} parent=1 // pred_fallthru
      _
    // Predicated region
    $region34: #{state_of_art_fer_forward.1} parent=1 // pred_check
      _
    $region35: #{state_of_art_fer_forward.1} parent=1 // pred_check_branch
      %41 = sbr.rel target = $region37
    $region36: #{state_of_art_fer_forward.1} parent=1 // pred_region
      %42 = sst [smem:[#allocation13]] [#allocation12]
      %43 = sst [smem:[#allocation14]] [#allocation11]
    $region37: #{state_of_art_fer_forward.1} parent=1 // pred_fallthru
      _
    %45 = shalt.err (0)
    %s47 = sshll.u32 [#allocation3], 4
    %s48 = int_to_ptr.vmem [resolvable:$true] %s47
    %50 = dma.hbm_to_vmem [thread:$0]  %s8, 30720, %s48, [#allocation5]
    %s51 = scalar_lea.sflag [#allocation5], 1
    %p53 = scmp.lt.u32.totalorder 512, 8
    %p54 = pneg %p53
    // Predicated region
    $region38: #{state_of_art_fer_forward.1} parent=1 // pred_check
      _
    $region39: #{state_of_art_fer_forward.1} parent=1 // pred_check_branch
      %56 = sbr.rel (%p53) target = $region41
    $region40: #{state_of_art_fer_forward.1} parent=1 // pred_region
      %s72 = sand.u32 512, 7
      %p73 = scmp.eq.s32.totalorder %s72, 0
      // Predicated region
      $region53: #{state_of_art_fer_forward.1} parent=40 // pred_check
        %p74 = pneg %p73
      $region54: #{state_of_art_fer_forward.1} parent=40 // pred_check_branch
        %76 = sbr.rel (%p74) target = $region56
      $region55: #{state_of_art_fer_forward.1} parent=40 // pred_region
        loop: start=0, step=1, limit=1
        $region57: #{state_of_art_fer_forward.1} parent=55 // loop_pre_header
          _
        $region58: #{state_of_art_fer_forward.1} parent=55 // loop_header
          %s78 = sphi 0, %s82
          %p79 = scmp.ge.s32.totalorder %s78, 1
          %s83 = sphi %s9, %s9
          %s84 = sphi [#allocation4], [#allocation4]
        $region59: #{state_of_art_fer_forward.1} parent=55 // loop_header_branch
          %81 = sbr.rel (%p79) target = $region63
        $region60: #{state_of_art_fer_forward.1} parent=55 // loop_body
          %v85 = vld [vmem:[%s83] sm:$0xff]
          %86 = vst [vmem:[%s84] sm:$0xff] %v85
          %v87 = vld [vmem:[%s83 + $0x8] sm:$0xff]
          %88 = vst [vmem:[%s84 + $0x8] sm:$0xff] %v87
          %v89 = vld [vmem:[%s83 + $0x10] sm:$0xff]
          %90 = vst [vmem:[%s84 + $0x10] sm:$0xff] %v89
          %v91 = vld [vmem:[%s83 + $0x18] sm:$0xff]
          %92 = vst [vmem:[%s84 + $0x18] sm:$0xff] %v91
          %v93 = vld [vmem:[%s83 + $0x20] sm:$0xff]
          %94 = vst [vmem:[%s84 + $0x20] sm:$0xff] %v93
          %v95 = vld [vmem:[%s83 + $0x28] sm:$0xff]
          %96 = vst [vmem:[%s84 + $0x28] sm:$0xff] %v95
          %v97 = vld [vmem:[%s83 + $0x30] sm:$0xff]
          %98 = vst [vmem:[%s84 + $0x30] sm:$0xff] %v97
          %v99 = vld [vmem:[%s83 + $0x38] sm:$0xff]
          %100 = vst [vmem:[%s84 + $0x38] sm:$0xff] %v99
          %v101 = vld [vmem:[%s83 + $0x40] sm:$0xff]
          %102 = vst [vmem:[%s84 + $0x40] sm:$0xff] %v101
          %v103 = vld [vmem:[%s83 + $0x48] sm:$0xff]
          %104 = vst [vmem:[%s84 + $0x48] sm:$0xff] %v103
          %v105 = vld [vmem:[%s83 + $0x50] sm:$0xff]
          %106 = vst [vmem:[%s84 + $0x50] sm:$0xff] %v105
          %v107 = vld [vmem:[%s83 + $0x58] sm:$0xff]
          %108 = vst [vmem:[%s84 + $0x58] sm:$0xff] %v107
          %v109 = vld [vmem:[%s83 + $0x60] sm:$0xff]
          %110 = vst [vmem:[%s84 + $0x60] sm:$0xff] %v109
          %v111 = vld [vmem:[%s83 + $0x68] sm:$0xff]
          %112 = vst [vmem:[%s84 + $0x68] sm:$0xff] %v111
          %v113 = vld [vmem:[%s83 + $0x70] sm:$0xff]
          %114 = vst [vmem:[%s84 + $0x70] sm:$0xff] %v113
          %v115 = vld [vmem:[%s83 + $0x78] sm:$0xff]
          %116 = vst [vmem:[%s84 + $0x78] sm:$0xff] %v115
          %v117 = vld [vmem:[%s83 + $0x80] sm:$0xff]
          %118 = vst [vmem:[%s84 + $0x80] sm:$0xff] %v117
          %v119 = vld [vmem:[%s83 + $0x88] sm:$0xff]
          %120 = vst [vmem:[%s84 + $0x88] sm:$0xff] %v119
          %v121 = vld [vmem:[%s83 + $0x90] sm:$0xff]
          %122 = vst [vmem:[%s84 + $0x90] sm:$0xff] %v121
          %v123 = vld [vmem:[%s83 + $0x98] sm:$0xff]
          %124 = vst [vmem:[%s84 + $0x98] sm:$0xff] %v123
          %v125 = vld [vmem:[%s83 + $0xa0] sm:$0xff]
          %126 = vst [vmem:[%s84 + $0xa0] sm:$0xff] %v125
          %v127 = vld [vmem:[%s83 + $0xa8] sm:$0xff]
          %128 = vst [vmem:[%s84 + $0xa8] sm:$0xff] %v127
          %v129 = vld [vmem:[%s83 + $0xb0] sm:$0xff]
          %130 = vst [vmem:[%s84 + $0xb0] sm:$0xff] %v129
          %v131 = vld [vmem:[%s83 + $0xb8] sm:$0xff]
          %132 = vst [vmem:[%s84 + $0xb8] sm:$0xff] %v131
          %v133 = vld [vmem:[%s83 + $0xc0] sm:$0xff]
          %134 = vst [vmem:[%s84 + $0xc0] sm:$0xff] %v133
          %v135 = vld [vmem:[%s83 + $0xc8] sm:$0xff]
          %136 = vst [vmem:[%s84 + $0xc8] sm:$0xff] %v135
          %v137 = vld [vmem:[%s83 + $0xd0] sm:$0xff]
          %138 = vst [vmem:[%s84 + $0xd0] sm:$0xff] %v137
          %v139 = vld [vmem:[%s83 + $0xd8] sm:$0xff]
          %140 = vst [vmem:[%s84 + $0xd8] sm:$0xff] %v139
          %v141 = vld [vmem:[%s83 + $0xe0] sm:$0xff]
          %142 = vst [vmem:[%s84 + $0xe0] sm:$0xff] %v141
          %v143 = vld [vmem:[%s83 + $0xe8] sm:$0xff]
          %144 = vst [vmem:[%s84 + $0xe8] sm:$0xff] %v143
          %v145 = vld [vmem:[%s83 + $0xf0] sm:$0xff]
          %146 = vst [vmem:[%s84 + $0xf0] sm:$0xff] %v145
          %v147 = vld [vmem:[%s83 + $0xf8] sm:$0xff]
          %148 = vst [vmem:[%s84 + $0xf8] sm:$0xff] %v147
          %v149 = vld [vmem:[%s83 + $0x100] sm:$0xff]
          %150 = vst [vmem:[%s84 + $0x100] sm:$0xff] %v149
          %v151 = vld [vmem:[%s83 + $0x108] sm:$0xff]
          %152 = vst [vmem:[%s84 + $0x108] sm:$0xff] %v151
          %v153 = vld [vmem:[%s83 + $0x110] sm:$0xff]
          %154 = vst [vmem:[%s84 + $0x110] sm:$0xff] %v153
          %v155 = vld [vmem:[%s83 + $0x118] sm:$0xff]
          %156 = vst [vmem:[%s84 + $0x118] sm:$0xff] %v155
          %v157 = vld [vmem:[%s83 + $0x120] sm:$0xff]
          %158 = vst [vmem:[%s84 + $0x120] sm:$0xff] %v157
          %v159 = vld [vmem:[%s83 + $0x128] sm:$0xff]
          %160 = vst [vmem:[%s84 + $0x128] sm:$0xff] %v159
          %v161 = vld [vmem:[%s83 + $0x130] sm:$0xff]
          %162 = vst [vmem:[%s84 + $0x130] sm:$0xff] %v161
          %v163 = vld [vmem:[%s83 + $0x138] sm:$0xff]
          %164 = vst [vmem:[%s84 + $0x138] sm:$0xff] %v163
          %v165 = vld [vmem:[%s83 + $0x140] sm:$0xff]
          %166 = vst [vmem:[%s84 + $0x140] sm:$0xff] %v165
          %v167 = vld [vmem:[%s83 + $0x148] sm:$0xff]
          %168 = vst [vmem:[%s84 + $0x148] sm:$0xff] %v167
          %v169 = vld [vmem:[%s83 + $0x150] sm:$0xff]
          %170 = vst [vmem:[%s84 + $0x150] sm:$0xff] %v169
          %v171 = vld [vmem:[%s83 + $0x158] sm:$0xff]
          %172 = vst [vmem:[%s84 + $0x158] sm:$0xff] %v171
          %v173 = vld [vmem:[%s83 + $0x160] sm:$0xff]
          %174 = vst [vmem:[%s84 + $0x160] sm:$0xff] %v173
          %v175 = vld [vmem:[%s83 + $0x168] sm:$0xff]
          %176 = vst [vmem:[%s84 + $0x168] sm:$0xff] %v175
          %v177 = vld [vmem:[%s83 + $0x170] sm:$0xff]
          %178 = vst [vmem:[%s84 + $0x170] sm:$0xff] %v177
          %v179 = vld [vmem:[%s83 + $0x178] sm:$0xff]
          %180 = vst [vmem:[%s84 + $0x178] sm:$0xff] %v179
          %v181 = vld [vmem:[%s83 + $0x180] sm:$0xff]
          %182 = vst [vmem:[%s84 + $0x180] sm:$0xff] %v181
          %v183 = vld [vmem:[%s83 + $0x188] sm:$0xff]
          %184 = vst [vmem:[%s84 + $0x188] sm:$0xff] %v183
          %v185 = vld [vmem:[%s83 + $0x190] sm:$0xff]
          %186 = vst [vmem:[%s84 + $0x190] sm:$0xff] %v185
          %v187 = vld [vmem:[%s83 + $0x198] sm:$0xff]
          %188 = vst [vmem:[%s84 + $0x198] sm:$0xff] %v187
          %v189 = vld [vmem:[%s83 + $0x1a0] sm:$0xff]
          %190 = vst [vmem:[%s84 + $0x1a0] sm:$0xff] %v189
          %v191 = vld [vmem:[%s83 + $0x1a8] sm:$0xff]
          %192 = vst [vmem:[%s84 + $0x1a8] sm:$0xff] %v191
          %v193 = vld [vmem:[%s83 + $0x1b0] sm:$0xff]
          %194 = vst [vmem:[%s84 + $0x1b0] sm:$0xff] %v193
          %v195 = vld [vmem:[%s83 + $0x1b8] sm:$0xff]
          %196 = vst [vmem:[%s84 + $0x1b8] sm:$0xff] %v195
          %v197 = vld [vmem:[%s83 + $0x1c0] sm:$0xff]
          %198 = vst [vmem:[%s84 + $0x1c0] sm:$0xff] %v197
          %v199 = vld [vmem:[%s83 + $0x1c8] sm:$0xff]
          %200 = vst [vmem:[%s84 + $0x1c8] sm:$0xff] %v199
          %v201 = vld [vmem:[%s83 + $0x1d0] sm:$0xff]
          %202 = vst [vmem:[%s84 + $0x1d0] sm:$0xff] %v201
          %v203 = vld [vmem:[%s83 + $0x1d8] sm:$0xff]
          %204 = vst [vmem:[%s84 + $0x1d8] sm:$0xff] %v203
          %v205 = vld [vmem:[%s83 + $0x1e0] sm:$0xff]
          %206 = vst [vmem:[%s84 + $0x1e0] sm:$0xff] %v205
          %v207 = vld [vmem:[%s83 + $0x1e8] sm:$0xff]
          %208 = vst [vmem:[%s84 + $0x1e8] sm:$0xff] %v207
          %v209 = vld [vmem:[%s83 + $0x1f0] sm:$0xff]
          %210 = vst [vmem:[%s84 + $0x1f0] sm:$0xff] %v209
          %v211 = vld [vmem:[%s83 + $0x1f8] sm:$0xff]
          %212 = vst [vmem:[%s84 + $0x1f8] sm:$0xff] %v211
        $region61: #{state_of_art_fer_forward.1} parent=55 // loop_footer
          %s82 = sadd.s32 1, %s78
        $region62: #{state_of_art_fer_forward.1} parent=55 // loop_footer_branch
          %77 = sbr.rel target = $region58
        $region63: #{state_of_art_fer_forward.1} parent=55 // loop_exit
          _
      $region56: #{state_of_art_fer_forward.1} parent=40 // pred_fallthru
        _
      %p213 = pneg %p73
      // Predicated region
      $region64: #{state_of_art_fer_forward.1} parent=40 // pred_check
        _
      $region65: #{state_of_art_fer_forward.1} parent=40 // pred_check_branch
        %215 = sbr.rel (%p73) target = $region67
      $region66: #{state_of_art_fer_forward.1} parent=40 // pred_region
        %s216 = sand.u32 512, 7
      $region67: #{state_of_art_fer_forward.1} parent=40 // pred_fallthru
        _
    $region41: #{state_of_art_fer_forward.1} parent=1 // pred_fallthru
      _
    // Predicated region
    $region42: #{state_of_art_fer_forward.1} parent=1 // pred_check
      %p57 = pneg %p53
    $region43: #{state_of_art_fer_forward.1} parent=1 // pred_check_branch
      %59 = sbr.rel (%p57) target = $region45
    $region44: #{state_of_art_fer_forward.1} parent=1 // pred_region
      %s60 = sshll.u32 1, 512
      %s61 = ssub.s32 %s60, 1
      loop: start=0, step=1, limit=1
      $region46: #{state_of_art_fer_forward.1} parent=44 // loop_pre_header
        _
      $region47: #{state_of_art_fer_forward.1} parent=44 // loop_header
        %s63 = sphi 0, %s67
        %p64 = scmp.ge.s32.totalorder %s63, 1
        %s68 = sphi %s9, %s9
        %s69 = sphi [#allocation4], [#allocation4]
      $region48: #{state_of_art_fer_forward.1} parent=44 // loop_header_branch
        %66 = sbr.rel (%p64) target = $region52
      $region49: #{state_of_art_fer_forward.1} parent=44 // loop_body
        %v70 = vld [vmem:[%s68] sm:%s61]
        %71 = vst [vmem:[%s69] sm:%s61] %v70
      $region50: #{state_of_art_fer_forward.1} parent=44 // loop_footer
        %s67 = sadd.s32 1, %s63
      $region51: #{state_of_art_fer_forward.1} parent=44 // loop_footer_branch
        %62 = sbr.rel target = $region47
      $region52: #{state_of_art_fer_forward.1} parent=44 // loop_exit
        _
    $region45: #{state_of_art_fer_forward.1} parent=1 // pred_fallthru
      _
    // Predicated region
    $region68: #{state_of_art_fer_forward.1} parent=1 // pred_check
      _
    $region69: #{state_of_art_fer_forward.1} parent=1 // pred_check_branch
      %219 = sbr.rel (0) target = $region71
    $region70: #{state_of_art_fer_forward.1} parent=1 // pred_region
      %220 = vsyncadd %s51, 8192
    $region71: #{state_of_art_fer_forward.1} parent=1 // pred_fallthru
      _
    %v221 = vld [vmem:[%s1] sm:$0xf]
    %v222 = vld [vmem:[%s1 + $0x4] sm:$0xf]
    %v223 = vld [vmem:[%s1 + $0x8] sm:$0xf]
    %v224 = vld [vmem:[%s1 + $0xc] sm:$0xf]
    %v225 = vld [vmem:[%s0] sm:$0xff]
    %v226 = vld [vmem:[%s2] sm:$0xff]
    %v227 = vld [vmem:[%s2 + $0x8] sm:$0xff]
    %v228 = vld [vmem:[%s2 + $0x10] sm:$0xff]
    %v229 = vld [vmem:[%s2 + $0x18] sm:$0xff]
    %231 = vset.pattern.permute.xlu0 0
    %232 = vperm.xlu0 %231, %v226
    %v233 = vpop.permute.xlu0 %232
    %236 = vset.pattern.permute.xlu0 0
    %237 = vperm.xlu0 %236, %v227
    %v238 = vpop.permute.xlu0 %237
    %241 = vset.pattern.permute.xlu0 0
    %242 = vperm.xlu0 %241, %v228
    %v243 = vpop.permute.xlu0 %242
    %246 = vset.pattern.permute.xlu0 0
    %247 = vperm.xlu0 %246, %v229
    %v248 = vpop.permute.xlu0 %247
    %v254 = vunpack.c.l.b16 %v221
    %v255 = vunpack.c.l.b16 %v222
    %v256 = vunpack.c.l.b16 %v223
    %v257 = vunpack.c.l.b16 %v224
    %v258 = vpack.c.b16 %v255, %v254
    %v259 = vpack.c.b16 %v257, %v256
    %v261 = vcombine.high %v225, %v225
    %v263 = vunpack.c.l.s4 1983009808
    %v264 = vunpack.c.0.s8 %v263
    %v265 = vlaneseq
    %v266 = vshrl.u32 %v265, 7
    %v267 = vsub.s32 %v264, %v266
    %v268 = vrot.slane %v225, %v267
    %v270 = vunpack.c.l.s4 1983009808
    %v271 = vunpack.c.0.s8 %v270
    %v272 = vlaneseq
    %v273 = vshrl.u32 %v272, 7
    %v274 = vsub.s32 %v271, %v273
    %v275 = vrot.slane %v261, %v274
    %v276 = vcombine.high %v268, %v268
    %v277 = vcombine.high %v275, %v275
    %vm278 = vcmask 31744
    %v280 = vsel %vm278, %v258, 0
    %v283 = vsel %vm278, %v259, 0
    %vm285 = vcmask 1041408
    %v287 = vsel %vm285, %v268, 0
    %v290 = vsel %vm285, %v276, 0
    %v293 = vsel %vm285, %v275, 0
    %v296 = vsel %vm285, %v277, 0
    %298 = vmatprep.subr.bf16.mxu0 0
    %299 = vmatpush1.bf16.msra.mxu0 0
    %300 = vmatprep.subr.bf16.mxu0 0
    %301 = vmatpush1.bf16.msra.mxu0 0
    %302 = vmatprep.subr.bf16.mxu0 0
    %303 = vmatpush1.bf16.msra.mxu0 0
    %304 = vmatprep.subr.bf16.mxu0 0
    %305 = vmatpush1.bf16.msra.mxu0 0
    %306 = vmatprep.subr.bf16.mxu0 0
    %307 = vmatpush1.bf16.msra.mxu0 0
    %308 = vmatprep.subr.bf16.mxu0 0
    %309 = vmatpush1.bf16.msra.mxu0 0
    %310 = vmatprep.subr.bf16.mxu0 0
    %311 = vmatpush1.bf16.msra.mxu0 0
    %312 = vmatprep.subr.bf16.mxu0 %v290
    %313 = vmatpush1.bf16.msra.mxu0 %v287
    %314 = vmatprep.subr.bf16.mxu0 0
    %315 = vmatpush2.bf16.msra.mxu0 0
    %316 = vmatprep.subr.bf16.mxu0 0
    %317 = vmatpush2.bf16.msra.mxu0 0
    %318 = vmatprep.subr.bf16.mxu0 0
    %319 = vmatpush2.bf16.msra.mxu0 0
    %320 = vmatprep.subr.bf16.mxu0 0
    %321 = vmatpush2.bf16.msra.mxu0 0
    %322 = vmatprep.subr.bf16.mxu0 0
    %323 = vmatpush2.bf16.msra.mxu0 0
    %324 = vmatprep.subr.bf16.mxu0 0
    %325 = vmatpush2.bf16.msra.mxu0 0
    %326 = vmatprep.subr.bf16.mxu0 0
    %327 = vmatpush2.bf16.msra.mxu0 0
    %328 = vmatprep.subr.bf16.mxu0 0
    %329 = vmatpush2.bf16.msra.mxu0 0
    %330 = vmatprep.mubr.bf16.mxu0 0
    %331 = vmatmul.mubr.bf16.gmra.mxu0 %v280
    %v332 = vpop.f32.mrf.mxu0
    %v333 = vadd.f32 %v233, %v332
    %v334 = vpop.f32.mrf.mxu0
    %v335 = vadd.f32 %v233, %v334
    %v336 = vpop.f32.mrf.mxu0
    %v337 = vadd.f32 %v238, %v336
    %v338 = vpop.f32.mrf.mxu0
    %v339 = vadd.f32 %v238, %v338
    %340 = vmatprep.mubr.bf16.mxu0 0
    %341 = vmatmul.mubr.bf16.gmra.mxu0 %v283
    %v342 = vpop.f32.mrf.mxu0
    %v343 = vadd.f32 %v243, %v342
    %v344 = vpop.f32.mrf.mxu0
    %v345 = vadd.f32 %v243, %v344
    %v346 = vpop.f32.mrf.mxu0
    %v347 = vadd.f32 %v248, %v346
    %v348 = vpop.f32.mrf.mxu0
    %v349 = vadd.f32 %v248, %v348
    %350 = vdwg.mxu0
    %351 = vmatprep.subr.bf16.mxu0 0
    %352 = vmatpush1.bf16.msra.mxu0 0
    %353 = vmatprep.subr.bf16.mxu0 0
    %354 = vmatpush1.bf16.msra.mxu0 0
    %355 = vmatprep.subr.bf16.mxu0 0
    %356 = vmatpush1.bf16.msra.mxu0 0
    %357 = vmatprep.subr.bf16.mxu0 0
    %358 = vmatpush1.bf16.msra.mxu0 0
    %359 = vmatprep.subr.bf16.mxu0 0
    %360 = vmatpush1.bf16.msra.mxu0 0
    %361 = vmatprep.subr.bf16.mxu0 0
    %362 = vmatpush1.bf16.msra.mxu0 0
    %363 = vmatprep.subr.bf16.mxu0 0
    %364 = vmatpush1.bf16.msra.mxu0 0
    %365 = vmatprep.subr.bf16.mxu0 %v296
    %366 = vmatpush1.bf16.msra.mxu0 %v293
    %367 = vmatprep.subr.bf16.mxu0 0
    %368 = vmatpush2.bf16.msra.mxu0 0
    %369 = vmatprep.subr.bf16.mxu0 0
    %370 = vmatpush2.bf16.msra.mxu0 0
    %371 = vmatprep.subr.bf16.mxu0 0
    %372 = vmatpush2.bf16.msra.mxu0 0
    %373 = vmatprep.subr.bf16.mxu0 0
    %374 = vmatpush2.bf16.msra.mxu0 0
    %375 = vmatprep.subr.bf16.mxu0 0
    %376 = vmatpush2.bf16.msra.mxu0 0
    %377 = vmatprep.subr.bf16.mxu0 0
    %378 = vmatpush2.bf16.msra.mxu0 0
    %379 = vmatprep.subr.bf16.mxu0 0
    %380 = vmatpush2.bf16.msra.mxu0 0
    %381 = vmatprep.subr.bf16.mxu0 0
    %382 = vmatpush2.bf16.msra.mxu0 0
    %383 = vmatprep.mubr.bf16.mxu0 0
    %384 = vmatmul.mubr.bf16.gmra.mxu0 %v280
    %v385 = vpop.f32.mrf.mxu0
    %v386 = vadd.f32 %v233, %v385
    %v387 = vpop.f32.mrf.mxu0
    %v388 = vadd.f32 %v233, %v387
    %v389 = vpop.f32.mrf.mxu0
    %v390 = vadd.f32 %v238, %v389
    %v391 = vpop.f32.mrf.mxu0
    %v392 = vadd.f32 %v238, %v391
    %393 = vmatprep.mubr.bf16.mxu0 0
    %394 = vmatmul.mubr.bf16.gmra.mxu0 %v283
    %v395 = vpop.f32.mrf.mxu0
    %v396 = vadd.f32 %v243, %v395
    %v397 = vpop.f32.mrf.mxu0
    %v398 = vadd.f32 %v243, %v397
    %v399 = vpop.f32.mrf.mxu0
    %v400 = vadd.f32 %v248, %v399
    %v401 = vpop.f32.mrf.mxu0
    %v402 = vadd.f32 %v248, %v401
    %403 = vdwg.mxu0
    %v404 = vmax.f32 %v333, 0.0
    %v405 = vmax.f32 %v335, 0.0
    %v406 = vmax.f32 %v386, 0.0
    %v407 = vmax.f32 %v388, 0.0
    %v408 = vmax.f32 %v337, 0.0
    %v409 = vmax.f32 %v339, 0.0
    %v410 = vmax.f32 %v390, 0.0
    %v411 = vmax.f32 %v392, 0.0
    %v412 = vmax.f32 %v343, 0.0
    %v413 = vmax.f32 %v345, 0.0
    %v414 = vmax.f32 %v396, 0.0
    %v415 = vmax.f32 %v398, 0.0
    %v416 = vmax.f32 %v347, 0.0
    %v417 = vmax.f32 %v349, 0.0
    %v418 = vmax.f32 %v400, 0.0
    %v419 = vmax.f32 %v402, 0.0
    %v420 = vld [vmem:[%s3] sm:$0xff]
    %v421 = vld [vmem:[%s3 + $0x8] sm:$0xff]
    %v422 = vld [vmem:[%s3 + $0x10] sm:$0xff]
    %v423 = vld [vmem:[%s3 + $0x18] sm:$0xff]
    %425 = vset.pattern.permute.xlu0 0
    %426 = vperm.xlu0 %425, %v420
    %v427 = vpop.permute.xlu0 %426
    %430 = vset.pattern.permute.xlu0 0
    %431 = vperm.xlu0 %430, %v421
    %v432 = vpop.permute.xlu0 %431
    %435 = vset.pattern.permute.xlu0 0
    %436 = vperm.xlu0 %435, %v422
    %v437 = vpop.permute.xlu0 %436
    %440 = vset.pattern.permute.xlu0 0
    %441 = vperm.xlu0 %440, %v423
    %v442 = vpop.permute.xlu0 %441
    %v444 = vmul.f32 %v427, %v404
    %v445 = vmul.f32 %v427, %v405
    %v446 = vmul.f32 %v427, %v406
    %v447 = vmul.f32 %v427, %v407
    %v448 = vmul.f32 %v432, %v408
    %v449 = vmul.f32 %v432, %v409
    %v450 = vmul.f32 %v432, %v410
    %v451 = vmul.f32 %v432, %v411
    %v452 = vmul.f32 %v437, %v412
    %v453 = vmul.f32 %v437, %v413
    %v454 = vmul.f32 %v437, %v414
    %v455 = vmul.f32 %v437, %v415
    %v456 = vmul.f32 %v442, %v416
    %v457 = vmul.f32 %v442, %v417
    %v458 = vmul.f32 %v442, %v418
    %v459 = vmul.f32 %v442, %v419
    %v460 = vadd.f32 %v444, %v448
    %v461 = vadd.f32 %v460, %v452
    %v462 = vadd.f32 %v461, %v456
    %v463 = vrot.slane %v462, 4
    %v464 = vadd.f32 %v462, %v463
    %v465 = vrot.slane %v464, 2
    %v466 = vadd.f32 %v464, %v465
    %v467 = vrot.slane %v466, 1
    %v468 = vadd.f32 %v466, %v467
    %v469 = vadd.f32 %v445, %v449
    %v470 = vadd.f32 %v469, %v453
    %v471 = vadd.f32 %v470, %v457
    %v472 = vrot.slane %v471, 4
    %v473 = vadd.f32 %v471, %v472
    %v474 = vrot.slane %v473, 2
    %v475 = vadd.f32 %v473, %v474
    %v476 = vrot.slane %v475, 1
    %v477 = vadd.f32 %v475, %v476
    %v478 = vadd.f32 %v446, %v450
    %v479 = vadd.f32 %v478, %v454
    %v480 = vadd.f32 %v479, %v458
    %v481 = vrot.slane %v480, 4
    %v482 = vadd.f32 %v480, %v481
    %v483 = vrot.slane %v482, 2
    %v484 = vadd.f32 %v482, %v483
    %v485 = vrot.slane %v484, 1
    %v486 = vadd.f32 %v484, %v485
    %v487 = vadd.f32 %v447, %v451
    %v488 = vadd.f32 %v487, %v455
    %v489 = vadd.f32 %v488, %v459
    %v490 = vrot.slane %v489, 4
    %v491 = vadd.f32 %v489, %v490
    %v492 = vrot.slane %v491, 2
    %v493 = vadd.f32 %v491, %v492
    %v494 = vrot.slane %v493, 1
    %v495 = vadd.f32 %v493, %v494
    %v496 = vld [vmem:[#allocation6] sm:$0x1]
    %498 = vset.pattern.permute.xlu0 0
    %499 = vperm.xlu0 %498, %v496
    %v500 = vpop.permute.xlu0 %499
    %v502 = vlaneseq
    %v503 = vshrl.u32 %v502, 7
    %v504 = vsub.s32 0, %v503
    %v505 = vrot.slane %v500, %v504
    %v506 = vadd.f32 %v468, %v505
    %v507 = vadd.f32 %v477, %v505
    %v508 = vadd.f32 %v486, %v505
    %v509 = vadd.f32 %v495, %v505
    %v510 = vpack.c.bf16 %v408, %v404
    %v511 = vpack.c.bf16 %v409, %v405
    %v512 = vpack.c.bf16 %v410, %v406
    %v513 = vpack.c.bf16 %v411, %v407
    %v514 = vpack.c.bf16 %v416, %v412
    %v515 = vpack.c.bf16 %v417, %v413
    %v516 = vpack.c.bf16 %v418, %v414
    %v517 = vpack.c.bf16 %v419, %v415
    %v518 = vlaneseq
    %v519 = vshrl.u32 %v518, 7
    %v520 = vadd.s32 %v519, 8
    %v521 = vmax.f32 %v506, %v507
    %522 = vmax.xlane.f32.xlu0 %v521
    %v523 = vpop.xlane.xlu0 %522
    %v524 = vsub.f32 %v506, %v523
    %v525 = vsub.f32 %v507, %v523
    %v526 = vmul.f32 %v524, 1.442695
    %v527 = vpow.pop %v526
    %v528 = vmul.f32 %v525, 1.442695
    %v529 = vpow.pop %v528
    %v530 = vadd.f32 %v527, %v529
    %531 = vadd.xlane.f32.xlu0 %v530
    %v532 = vpop.xlane.xlu0 %531
    %v533 = vrcp.pop %v532
    %v534 = vmul.f32 %v527, %v533
    %v535 = vmul.f32 %v529, %v533
    %vm536 = vcmp.eq.s32.totalorder %v519, 14
    %vm537 = vcmp.eq.s32.totalorder %v520, 14
    %v538 = vpack.c.bf16 %v534, %v534
    %v539 = vpack.c.bf16 %v535, %v535
    %v540 = vld [vmem:[%s5] sm:$0xff]
    %v541 = vld [vmem:[%s5 + $0x8] sm:$0xff]
    %v542 = vsel %vm536, 1, 0
    %v543 = vsel %vm537, 1, 0
    %vm544 = vcmp.eq.s32.totalorder %v542, 1
    %vm545 = vcmp.eq.s32.totalorder %v543, 1
    %vm546 = vmpackc.low %vm544, %vm544
    %vm547 = vmpackc.low %vm545, %vm545
    %v548 = vsel %vm546, 65537, 0
    %v549 = vsel %vm547, 65537, 0
    %v550 = vunpack.c.l.b16 %v548
    %v551 = vunpack.c.l.b16 %v549
    %v552 = vpack.c.b16 %v551, %v550
    %vm553 = vcmp.ne.s16.totalorder %v552, 0
    %v556 = vunpack.c.l.b16 %v540
    %v557 = vunpack.c.h.b16 %v540
    %v558 = vunpack.c.l.b16 %v541
    %v559 = vunpack.c.h.b16 %v541
    %v560 = vpack.c.b16 %v558, %v556
    %v561 = vpack.c.b16 %v559, %v557
    %v564 = vsel %vm553, %v538, %v560
    %v565 = vsel %vm553, %v539, %v561
    %566 = vmatprep.subr.bf16.mxu0 0
    %567 = vmatpush1.bf16.xpose.msra.mxu0 0
    %568 = vmatprep.subr.bf16.mxu0 0
    %569 = vmatpush1.bf16.xpose.msra.mxu0 0
    %570 = vmatprep.subr.bf16.mxu0 0
    %571 = vmatpush1.bf16.xpose.msra.mxu0 0
    %572 = vmatprep.subr.bf16.mxu0 0
    %573 = vmatpush1.bf16.xpose.msra.mxu0 0
    %574 = vmatprep.subr.bf16.mxu0 0
    %575 = vmatpush1.bf16.xpose.msra.mxu0 0
    %576 = vmatprep.subr.bf16.mxu0 0
    %577 = vmatpush1.bf16.xpose.msra.mxu0 0
    %578 = vmatprep.subr.bf16.mxu0 %v515
    %579 = vmatpush1.bf16.xpose.msra.mxu0 %v514
    %580 = vmatprep.subr.bf16.mxu0 %v511
    %581 = vmatpush1.bf16.xpose.msra.mxu0 %v510
    %582 = vmatprep.subr.bf16.mxu0 0
    %583 = vmatpush2.bf16.xpose.msra.mxu0 0
    %584 = vmatprep.subr.bf16.mxu0 0
    %585 = vmatpush2.bf16.xpose.msra.mxu0 0
    %586 = vmatprep.subr.bf16.mxu0 0
    %587 = vmatpush2.bf16.xpose.msra.mxu0 0
    %588 = vmatprep.subr.bf16.mxu0 0
    %589 = vmatpush2.bf16.xpose.msra.mxu0 0
    %590 = vmatprep.subr.bf16.mxu0 0
    %591 = vmatpush2.bf16.xpose.msra.mxu0 0
    %592 = vmatprep.subr.bf16.mxu0 0
    %593 = vmatpush2.bf16.xpose.msra.mxu0 0
    %594 = vmatprep.subr.bf16.mxu0 0
    %595 = vmatpush2.bf16.xpose.msra.mxu0 0
    %596 = vmatprep.subr.bf16.mxu0 0
    %597 = vmatpush2.bf16.xpose.msra.mxu0 0
    %598 = vmatprep.mubr.bf16.mxu0 %v565
    %599 = vmatmul.mubr.bf16.gmra.mxu0 %v564
    %v600 = vpop.f32.mrf.mxu0
    %v601 = vadd.f32 0.0, %v600
    %v602 = vpop.f32.mrf.mxu0
    %v603 = vpop.f32.mrf.mxu0
    %v604 = vadd.f32 0.0, %v603
    %v605 = vpop.f32.mrf.mxu0
    %606 = vdwg.mxu0
    %vm607 = vcmask 253952
    %608 = vst.msk [vmem:[#allocation2] sm:$0x1] %vm607, %v601
    %v611 = vunpack.c.l.s4 1983009808
    %v612 = vunpack.c.0.s8 %v611
    %v613 = vlaneseq
    %v614 = vshrl.u32 %v613, 7
    %v615 = vsub.s32 %v612, %v614
    %v616 = vrot.slane %v601, %v615
    %v617 = vrot.slane %v616, 7
    %v618 = vrot.slane %v617, 2
    %619 = vrot.lane.b32.xlu0 %v618, 32
    %v620 = vpop.permute.xlu0 %619
    %vm622 = vcmask 516352
    %623 = vst.msk [vmem:[#allocation2] sm:$0x1] %vm622, %v620
    %v624 = vcombine.high %v616, %v616
    %625 = vrot.lane.b32.xlu0 %v624, 64
    %v626 = vpop.permute.xlu0 %625
    %vm628 = vcmask 778752
    %629 = vst.msk [vmem:[#allocation2] sm:$0x1] %vm628, %v626
    %v630 = vrot.slane %v624, 7
    %v631 = vrot.slane %v630, 2
    %632 = vrot.lane.b32.xlu0 %v631, 96
    %v633 = vpop.permute.xlu0 %632
    %vm635 = vcmask 1041152
    %636 = vst.msk [vmem:[#allocation2] sm:$0x1] %vm635, %v633
    %v637 = vcombine.high %v601, %v601
    %v639 = vunpack.c.l.s4 1983009808
    %v640 = vunpack.c.0.s8 %v639
    %v641 = vlaneseq
    %v642 = vshrl.u32 %v641, 7
    %v643 = vsub.s32 %v640, %v642
    %v644 = vrot.slane %v637, %v643
    %646 = vst.msk [vmem:[#allocation2 + $0x2] sm:$0x1] %vm607, %v644
    %v647 = vrot.slane %v644, 7
    %v648 = vrot.slane %v647, 2
    %649 = vrot.lane.b32.xlu0 %v648, 32
    %v650 = vpop.permute.xlu0 %649
    %652 = vst.msk [vmem:[#allocation2 + $0x2] sm:$0x1] %vm622, %v650
    %v653 = vcombine.high %v644, %v644
    %654 = vrot.lane.b32.xlu0 %v653, 64
    %v655 = vpop.permute.xlu0 %654
    %657 = vst.msk [vmem:[#allocation2 + $0x2] sm:$0x1] %vm628, %v655
    %v658 = vrot.slane %v653, 7
    %v659 = vrot.slane %v658, 2
    %660 = vrot.lane.b32.xlu0 %v659, 96
    %v661 = vpop.permute.xlu0 %660
    %663 = vst.msk [vmem:[#allocation2 + $0x2] sm:$0x1] %vm635, %v661
    %664 = vst.msk [vmem:[#allocation2 + $0x4] sm:$0x1] %vm607, %v604
    %v667 = vunpack.c.l.s4 1983009808
    %v668 = vunpack.c.0.s8 %v667
    %v669 = vlaneseq
    %v670 = vshrl.u32 %v669, 7
    %v671 = vsub.s32 %v668, %v670
    %v672 = vrot.slane %v604, %v671
    %v673 = vrot.slane %v672, 7
    %v674 = vrot.slane %v673, 2
    %675 = vrot.lane.b32.xlu0 %v674, 32
    %v676 = vpop.permute.xlu0 %675
    %678 = vst.msk [vmem:[#allocation2 + $0x4] sm:$0x1] %vm622, %v676
    %v679 = vcombine.high %v672, %v672
    %680 = vrot.lane.b32.xlu0 %v679, 64
    %v681 = vpop.permute.xlu0 %680
    %683 = vst.msk [vmem:[#allocation2 + $0x4] sm:$0x1] %vm628, %v681
    %v684 = vrot.slane %v679, 7
    %v685 = vrot.slane %v684, 2
    %686 = vrot.lane.b32.xlu0 %v685, 96
    %v687 = vpop.permute.xlu0 %686
    %689 = vst.msk [vmem:[#allocation2 + $0x4] sm:$0x1] %vm635, %v687
    %v690 = vcombine.high %v604, %v604
    %v692 = vunpack.c.l.s4 1983009808
    %v693 = vunpack.c.0.s8 %v692
    %v694 = vlaneseq
    %v695 = vshrl.u32 %v694, 7
    %v696 = vsub.s32 %v693, %v695
    %v697 = vrot.slane %v690, %v696
    %699 = vst.msk [vmem:[#allocation2 + $0x6] sm:$0x1] %vm607, %v697
    %v700 = vrot.slane %v697, 7
    %v701 = vrot.slane %v700, 2
    %702 = vrot.lane.b32.xlu0 %v701, 32
    %v703 = vpop.permute.xlu0 %702
    %705 = vst.msk [vmem:[#allocation2 + $0x6] sm:$0x1] %vm622, %v703
    %v706 = vcombine.high %v697, %v697
    %707 = vrot.lane.b32.xlu0 %v706, 64
    %v708 = vpop.permute.xlu0 %707
    %710 = vst.msk [vmem:[#allocation2 + $0x6] sm:$0x1] %vm628, %v708
    %v711 = vmax.f32 %v508, %v509
    %712 = vmax.xlane.f32.xlu0 %v711
    %v713 = vpop.xlane.xlu0 %712
    %v714 = vsub.f32 %v508, %v713
    %v715 = vsub.f32 %v509, %v713
    %v716 = vmul.f32 %v714, 1.442695
    %v717 = vpow.pop %v716
    %v718 = vmul.f32 %v715, 1.442695
    %v719 = vpow.pop %v718
    %v720 = vadd.f32 %v717, %v719
    %721 = vadd.xlane.f32.xlu0 %v720
    %v722 = vpop.xlane.xlu0 %721
    %v723 = vrcp.pop %v722
    %v724 = vmul.f32 %v717, %v723
    %v725 = vmul.f32 %v719, %v723
    %v726 = vpack.c.bf16 %v724, %v724
    %v727 = vpack.c.bf16 %v725, %v725
    %v728 = vld [vmem:[%s5] sm:$0xff]
    %v729 = vld [vmem:[%s5 + $0x8] sm:$0xff]
    %v732 = vunpack.c.l.b16 %v728
    %v733 = vunpack.c.h.b16 %v728
    %v734 = vunpack.c.l.b16 %v729
    %v735 = vunpack.c.h.b16 %v729
    %v736 = vpack.c.b16 %v734, %v732
    %v737 = vpack.c.b16 %v735, %v733
    %v740 = vsel %vm553, %v726, %v736
    %v741 = vsel %vm553, %v727, %v737
    %742 = vmatprep.subr.bf16.mxu0 0
    %743 = vmatpush1.bf16.xpose.msra.mxu0 0
    %744 = vmatprep.subr.bf16.mxu0 0
    %745 = vmatpush1.bf16.xpose.msra.mxu0 0
    %746 = vmatprep.subr.bf16.mxu0 0
    %747 = vmatpush1.bf16.xpose.msra.mxu0 0
    %748 = vmatprep.subr.bf16.mxu0 0
    %749 = vmatpush1.bf16.xpose.msra.mxu0 0
    %750 = vmatprep.subr.bf16.mxu0 0
    %751 = vmatpush1.bf16.xpose.msra.mxu0 0
    %752 = vmatprep.subr.bf16.mxu0 0
    %753 = vmatpush1.bf16.xpose.msra.mxu0 0
    %754 = vmatprep.subr.bf16.mxu0 %v517
    %755 = vmatpush1.bf16.xpose.msra.mxu0 %v516
    %756 = vmatprep.subr.bf16.mxu0 %v513
    %757 = vmatpush1.bf16.xpose.msra.mxu0 %v512
    %758 = vmatprep.subr.bf16.mxu0 0
    %759 = vmatpush2.bf16.xpose.msra.mxu0 0
    %760 = vmatprep.subr.bf16.mxu0 0
    %761 = vmatpush2.bf16.xpose.msra.mxu0 0
    %762 = vmatprep.subr.bf16.mxu0 0
    %763 = vmatpush2.bf16.xpose.msra.mxu0 0
    %764 = vmatprep.subr.bf16.mxu0 0
    %765 = vmatpush2.bf16.xpose.msra.mxu0 0
    %766 = vmatprep.subr.bf16.mxu0 0
    %767 = vmatpush2.bf16.xpose.msra.mxu0 0
    %768 = vmatprep.subr.bf16.mxu0 0
    %769 = vmatpush2.bf16.xpose.msra.mxu0 0
    %770 = vmatprep.subr.bf16.mxu0 0
    %771 = vmatpush2.bf16.xpose.msra.mxu0 0
    %772 = vmatprep.subr.bf16.mxu0 0
    %773 = vmatpush2.bf16.xpose.msra.mxu0 0
    %774 = vmatprep.mubr.bf16.mxu0 %v741
    %775 = vmatmul.mubr.bf16.gmra.mxu0 %v740
    %v776 = vpop.f32.mrf.mxu0
    %v777 = vadd.f32 0.0, %v776
    %v778 = vpop.f32.mrf.mxu0
    %v779 = vpop.f32.mrf.mxu0
    %v780 = vadd.f32 0.0, %v779
    %v781 = vpop.f32.mrf.mxu0
    %782 = vdwg.mxu0
    %783 = vst.msk [vmem:[#allocation2 + $0x1] sm:$0x1] %vm607, %v777
    %v786 = vunpack.c.l.s4 1983009808
    %v787 = vunpack.c.0.s8 %v786
    %v788 = vlaneseq
    %v789 = vshrl.u32 %v788, 7
    %v790 = vsub.s32 %v787, %v789
    %v791 = vrot.slane %v777, %v790
    %v792 = vrot.slane %v791, 7
    %v793 = vrot.slane %v792, 2
    %794 = vrot.lane.b32.xlu0 %v793, 32
    %v795 = vpop.permute.xlu0 %794
    %797 = vst.msk [vmem:[#allocation2 + $0x1] sm:$0x1] %vm622, %v795
    %v798 = vcombine.high %v791, %v791
    %799 = vrot.lane.b32.xlu0 %v798, 64
    %v800 = vpop.permute.xlu0 %799
    %802 = vst.msk [vmem:[#allocation2 + $0x1] sm:$0x1] %vm628, %v800
    %v803 = vrot.slane %v798, 7
    %v804 = vrot.slane %v803, 2
    %805 = vrot.lane.b32.xlu0 %v804, 96
    %v806 = vpop.permute.xlu0 %805
    %808 = vst.msk [vmem:[#allocation2 + $0x1] sm:$0x1] %vm635, %v806
    %v809 = vcombine.high %v777, %v777
    %v811 = vunpack.c.l.s4 1983009808
    %v812 = vunpack.c.0.s8 %v811
    %v813 = vlaneseq
    %v814 = vshrl.u32 %v813, 7
    %v815 = vsub.s32 %v812, %v814
    %v816 = vrot.slane %v809, %v815
    %818 = vst.msk [vmem:[#allocation2 + $0x3] sm:$0x1] %vm607, %v816
    %v819 = vrot.slane %v816, 7
    %v820 = vrot.slane %v819, 2
    %821 = vrot.lane.b32.xlu0 %v820, 32
    %v822 = vpop.permute.xlu0 %821
    %824 = vst.msk [vmem:[#allocation2 + $0x3] sm:$0x1] %vm622, %v822
    %v825 = vcombine.high %v816, %v816
    %826 = vrot.lane.b32.xlu0 %v825, 64
    %v827 = vpop.permute.xlu0 %826
    %829 = vst.msk [vmem:[#allocation2 + $0x3] sm:$0x1] %vm628, %v827
    %v830 = vrot.slane %v825, 7
    %v831 = vrot.slane %v830, 2
    %832 = vrot.lane.b32.xlu0 %v831, 96
    %v833 = vpop.permute.xlu0 %832
    %835 = vst.msk [vmem:[#allocation2 + $0x3] sm:$0x1] %vm635, %v833
    %836 = vst.msk [vmem:[#allocation2 + $0x5] sm:$0x1] %vm607, %v780
    %v839 = vunpack.c.l.s4 1983009808
    %v840 = vunpack.c.0.s8 %v839
    %v841 = vlaneseq
    %v842 = vshrl.u32 %v841, 7
    %v843 = vsub.s32 %v840, %v842
    %v844 = vrot.slane %v780, %v843
    %v845 = vrot.slane %v844, 7
    %v846 = vrot.slane %v845, 2
    %847 = vrot.lane.b32.xlu0 %v846, 32
    %v848 = vpop.permute.xlu0 %847
    %850 = vst.msk [vmem:[#allocation2 + $0x5] sm:$0x1] %vm622, %v848
    %v851 = vcombine.high %v844, %v844
    %852 = vrot.lane.b32.xlu0 %v851, 64
    %v853 = vpop.permute.xlu0 %852
    %855 = vst.msk [vmem:[#allocation2 + $0x5] sm:$0x1] %vm628, %v853
    %v856 = vrot.slane %v851, 7
    %v857 = vrot.slane %v856, 2
    %858 = vrot.lane.b32.xlu0 %v857, 96
    %v859 = vpop.permute.xlu0 %858
    %861 = vst.msk [vmem:[#allocation2 + $0x5] sm:$0x1] %vm635, %v859
    %v862 = vcombine.high %v780, %v780
    %v864 = vunpack.c.l.s4 1983009808
    %v865 = vunpack.c.0.s8 %v864
    %v866 = vlaneseq
    %v867 = vshrl.u32 %v866, 7
    %v868 = vsub.s32 %v865, %v867
    %v869 = vrot.slane %v862, %v868
    %871 = vst.msk [vmem:[#allocation2 + $0x7] sm:$0x1] %vm607, %v869
    %v872 = vrot.slane %v869, 7
    %v873 = vrot.slane %v872, 2
    %874 = vrot.lane.b32.xlu0 %v873, 32
    %v875 = vpop.permute.xlu0 %874
    %877 = vst.msk [vmem:[#allocation2 + $0x7] sm:$0x1] %vm622, %v875
    %v878 = vcombine.high %v869, %v869
    %879 = vrot.lane.b32.xlu0 %v878, 64
    %v880 = vpop.permute.xlu0 %879
    %882 = vst.msk [vmem:[#allocation2 + $0x7] sm:$0x1] %vm628, %v880
    %s883 = smul.u32 4, 60
    %s884 = smul.u32 %s883, 8
    %s885 = sshll.u32 %s884, 4
    %886 = dma.done [#allocation5], %s885
    %v887 = vld [vmem:[#allocation2] sm:$0xff]
    %v889 = vcombine.high %v887, %v887
    %v891 = vunpack.c.l.s4 1983009808
    %v892 = vunpack.c.0.s8 %v891
    %v893 = vlaneseq
    %v894 = vshrl.u32 %v893, 7
    %v895 = vsub.s32 %v892, %v894
    %v896 = vrot.slane %v887, %v895
    %v898 = vunpack.c.l.s4 1983009808
    %v899 = vunpack.c.0.s8 %v898
    %v900 = vlaneseq
    %v901 = vshrl.u32 %v900, 7
    %v902 = vsub.s32 %v899, %v901
    %v903 = vrot.slane %v889, %v902
    %v904 = vcombine.high %v896, %v896
    %v905 = vcombine.high %v903, %v903
    %v910 = vpack.c.bf16 %v896, %v896
    %v911 = vpack.c.bf16 %v904, %v904
    %v912 = vpack.c.bf16 %v903, %v903
    %v913 = vpack.c.bf16 %v905, %v905
    %v914 = vld [vmem:[#allocation3] sm:$0xff]
    %v915 = vld [vmem:[#allocation3 + $0x8] sm:$0xff]
    %v916 = vld [vmem:[#allocation3 + $0x10] sm:$0xff]
    %v917 = vld [vmem:[#allocation3 + $0x18] sm:$0xff]
    %v918 = vld [vmem:[#allocation3 + $0x20] sm:$0xff]
    %v919 = vld [vmem:[#allocation3 + $0x28] sm:$0xff]
    %v920 = vld [vmem:[#allocation3 + $0x30] sm:$0xff]
    %v921 = vld [vmem:[#allocation3 + $0x38] sm:$0xff]
    %v922 = vld [vmem:[#allocation3 + $0x40] sm:$0xff]
    %v923 = vld [vmem:[#allocation3 + $0x48] sm:$0xff]
    %v924 = vld [vmem:[#allocation3 + $0x50] sm:$0xff]
    %v925 = vld [vmem:[#allocation3 + $0x58] sm:$0xff]
    %v926 = vld [vmem:[#allocation3 + $0x60] sm:$0xff]
    %v927 = vld [vmem:[#allocation3 + $0x68] sm:$0xff]
    %v928 = vld [vmem:[#allocation3 + $0x70] sm:$0xff]
    %v929 = vld [vmem:[#allocation3 + $0x78] sm:$0xff]
    %v930 = vld [vmem:[#allocation3 + $0x80] sm:$0xff]
    %v931 = vld [vmem:[#allocation3 + $0x88] sm:$0xff]
    %v932 = vld [vmem:[#allocation3 + $0x90] sm:$0xff]
    %v933 = vld [vmem:[#allocation3 + $0x98] sm:$0xff]
    %v934 = vld [vmem:[#allocation3 + $0xa0] sm:$0xff]
    %v935 = vld [vmem:[#allocation3 + $0xa8] sm:$0xff]
    %v936 = vld [vmem:[#allocation3 + $0xb0] sm:$0xff]
    %v937 = vld [vmem:[#allocation3 + $0xb8] sm:$0xff]
    %v938 = vld [vmem:[#allocation3 + $0xc0] sm:$0xff]
    %v939 = vld [vmem:[#allocation3 + $0xc8] sm:$0xff]
    %v940 = vld [vmem:[#allocation3 + $0xd0] sm:$0xff]
    %v941 = vld [vmem:[#allocation3 + $0xd8] sm:$0xff]
    %v942 = vld [vmem:[#allocation3 + $0xe0] sm:$0xff]
    %v943 = vld [vmem:[#allocation3 + $0xe8] sm:$0xff]
    %v944 = vld [vmem:[#allocation3 + $0xf0] sm:$0xff]
    %v945 = vld [vmem:[#allocation3 + $0xf8] sm:$0xff]
    %v946 = vld [vmem:[#allocation3 + $0x100] sm:$0xff]
    %v947 = vld [vmem:[#allocation3 + $0x108] sm:$0xff]
    %v948 = vld [vmem:[#allocation3 + $0x110] sm:$0xff]
    %v949 = vld [vmem:[#allocation3 + $0x118] sm:$0xff]
    %v950 = vld [vmem:[#allocation3 + $0x120] sm:$0xff]
    %v951 = vld [vmem:[#allocation3 + $0x128] sm:$0xff]
    %v952 = vld [vmem:[#allocation3 + $0x130] sm:$0xff]
    %v953 = vld [vmem:[#allocation3 + $0x138] sm:$0xff]
    %v954 = vld [vmem:[#allocation3 + $0x140] sm:$0xff]
    %v955 = vld [vmem:[#allocation3 + $0x148] sm:$0xff]
    %v956 = vld [vmem:[#allocation3 + $0x150] sm:$0xff]
    %v957 = vld [vmem:[#allocation3 + $0x158] sm:$0xff]
    %v958 = vld [vmem:[#allocation3 + $0x160] sm:$0xff]
    %v959 = vld [vmem:[#allocation3 + $0x168] sm:$0xff]
    %v960 = vld [vmem:[#allocation3 + $0x170] sm:$0xff]
    %v961 = vld [vmem:[#allocation3 + $0x178] sm:$0xff]
    %v962 = vld [vmem:[#allocation3 + $0x180] sm:$0xff]
    %v963 = vld [vmem:[#allocation3 + $0x188] sm:$0xff]
    %v964 = vld [vmem:[#allocation3 + $0x190] sm:$0xff]
    %v965 = vld [vmem:[#allocation3 + $0x198] sm:$0xff]
    %v966 = vld [vmem:[#allocation3 + $0x1a0] sm:$0xff]
    %v967 = vld [vmem:[#allocation3 + $0x1a8] sm:$0xff]
    %v968 = vld [vmem:[#allocation3 + $0x1b0] sm:$0xff]
    %v969 = vld [vmem:[#allocation3 + $0x1b8] sm:$0xff]
    %v970 = vld [vmem:[#allocation3 + $0x1c0] sm:$0xff]
    %v971 = vld [vmem:[#allocation3 + $0x1c8] sm:$0xff]
    %v972 = vld [vmem:[#allocation3 + $0x1d0] sm:$0xff]
    %v973 = vld [vmem:[#allocation3 + $0x1d8] sm:$0xff]
    %v974 = vld [vmem:[#allocation3 + $0x1e0] sm:$0xff]
    %v975 = vld [vmem:[#allocation3 + $0x1e8] sm:$0xff]
    %v976 = vld [vmem:[#allocation3 + $0x1f0] sm:$0xff]
    %v977 = vld [vmem:[#allocation3 + $0x1f8] sm:$0xff]
    %v978 = vld [vmem:[#allocation3 + $0x200] sm:$0xff]
    %v979 = vld [vmem:[#allocation3 + $0x208] sm:$0xff]
    %v980 = vld [vmem:[#allocation3 + $0x210] sm:$0xff]
    %v981 = vld [vmem:[#allocation3 + $0x218] sm:$0xff]
    %v982 = vld [vmem:[#allocation3 + $0x220] sm:$0xff]
    %v983 = vld [vmem:[#allocation3 + $0x228] sm:$0xff]
    %v984 = vld [vmem:[#allocation3 + $0x230] sm:$0xff]
    %v985 = vld [vmem:[#allocation3 + $0x238] sm:$0xff]
    %v986 = vld [vmem:[#allocation3 + $0x240] sm:$0xff]
    %v987 = vld [vmem:[#allocation3 + $0x248] sm:$0xff]
    %v988 = vld [vmem:[#allocation3 + $0x250] sm:$0xff]
    %v989 = vld [vmem:[#allocation3 + $0x258] sm:$0xff]
    %v990 = vld [vmem:[#allocation3 + $0x260] sm:$0xff]
    %v991 = vld [vmem:[#allocation3 + $0x268] sm:$0xff]
    %v992 = vld [vmem:[#allocation3 + $0x270] sm:$0xff]
    %v993 = vld [vmem:[#allocation3 + $0x278] sm:$0xff]
    %v994 = vld [vmem:[#allocation3 + $0x280] sm:$0xff]
    %v995 = vld [vmem:[#allocation3 + $0x288] sm:$0xff]
    %v996 = vld [vmem:[#allocation3 + $0x290] sm:$0xff]
    %v997 = vld [vmem:[#allocation3 + $0x298] sm:$0xff]
    %v998 = vld [vmem:[#allocation3 + $0x2a0] sm:$0xff]
    %v999 = vld [vmem:[#allocation3 + $0x2a8] sm:$0xff]
    %v1000 = vld [vmem:[#allocation3 + $0x2b0] sm:$0xff]
    %v1001 = vld [vmem:[#allocation3 + $0x2b8] sm:$0xff]
    %v1002 = vld [vmem:[#allocation3 + $0x2c0] sm:$0xff]
    %v1003 = vld [vmem:[#allocation3 + $0x2c8] sm:$0xff]
    %v1004 = vld [vmem:[#allocation3 + $0x2d0] sm:$0xff]
    %v1005 = vld [vmem:[#allocation3 + $0x2d8] sm:$0xff]
    %v1006 = vld [vmem:[#allocation3 + $0x2e0] sm:$0xff]
    %v1007 = vld [vmem:[#allocation3 + $0x2e8] sm:$0xff]
    %v1008 = vld [vmem:[#allocation3 + $0x2f0] sm:$0xff]
    %v1009 = vld [vmem:[#allocation3 + $0x2f8] sm:$0xff]
    %v1010 = vld [vmem:[#allocation3 + $0x300] sm:$0xff]
    %v1011 = vld [vmem:[#allocation3 + $0x308] sm:$0xff]
    %v1012 = vld [vmem:[#allocation3 + $0x310] sm:$0xff]
    %v1013 = vld [vmem:[#allocation3 + $0x318] sm:$0xff]
    %v1014 = vld [vmem:[#allocation3 + $0x320] sm:$0xff]
    %v1015 = vld [vmem:[#allocation3 + $0x328] sm:$0xff]
    %v1016 = vld [vmem:[#allocation3 + $0x330] sm:$0xff]
    %v1017 = vld [vmem:[#allocation3 + $0x338] sm:$0xff]
    %v1018 = vld [vmem:[#allocation3 + $0x340] sm:$0xff]
    %v1019 = vld [vmem:[#allocation3 + $0x348] sm:$0xff]
    %v1020 = vld [vmem:[#allocation3 + $0x350] sm:$0xff]
    %v1021 = vld [vmem:[#allocation3 + $0x358] sm:$0xff]
    %v1022 = vld [vmem:[#allocation3 + $0x360] sm:$0xff]
    %v1023 = vld [vmem:[#allocation3 + $0x368] sm:$0xff]
    %v1024 = vld [vmem:[#allocation3 + $0x370] sm:$0xff]
    %v1025 = vld [vmem:[#allocation3 + $0x378] sm:$0xff]
    %v1026 = vld [vmem:[#allocation3 + $0x380] sm:$0xff]
    %v1027 = vld [vmem:[#allocation3 + $0x388] sm:$0xff]
    %v1028 = vld [vmem:[#allocation3 + $0x390] sm:$0xff]
    %v1029 = vld [vmem:[#allocation3 + $0x398] sm:$0xff]
    %v1030 = vld [vmem:[#allocation3 + $0x3a0] sm:$0xff]
    %v1031 = vld [vmem:[#allocation3 + $0x3a8] sm:$0xff]
    %v1032 = vld [vmem:[#allocation3 + $0x3b0] sm:$0xff]
    %v1033 = vld [vmem:[#allocation3 + $0x3b8] sm:$0xff]
    %v1034 = vld [vmem:[#allocation3 + $0x3c0] sm:$0xff]
    %v1035 = vld [vmem:[#allocation3 + $0x3c8] sm:$0xff]
    %v1036 = vld [vmem:[#allocation3 + $0x3d0] sm:$0xff]
    %v1037 = vld [vmem:[#allocation3 + $0x3d8] sm:$0xff]
    %v1038 = vld [vmem:[#allocation3 + $0x3e0] sm:$0xff]
    %v1039 = vld [vmem:[#allocation3 + $0x3e8] sm:$0xff]
    %v1040 = vld [vmem:[#allocation3 + $0x3f0] sm:$0xff]
    %v1041 = vld [vmem:[#allocation3 + $0x3f8] sm:$0xff]
    %v1042 = vld [vmem:[#allocation3 + $0x400] sm:$0xff]
    %v1043 = vld [vmem:[#allocation3 + $0x408] sm:$0xff]
    %v1044 = vld [vmem:[#allocation3 + $0x410] sm:$0xff]
    %v1045 = vld [vmem:[#allocation3 + $0x418] sm:$0xff]
    %v1046 = vld [vmem:[#allocation3 + $0x420] sm:$0xff]
    %v1047 = vld [vmem:[#allocation3 + $0x428] sm:$0xff]
    %v1048 = vld [vmem:[#allocation3 + $0x430] sm:$0xff]
    %v1049 = vld [vmem:[#allocation3 + $0x438] sm:$0xff]
    %v1050 = vld [vmem:[#allocation3 + $0x440] sm:$0xff]
    %v1051 = vld [vmem:[#allocation3 + $0x448] sm:$0xff]
    %v1052 = vld [vmem:[#allocation3 + $0x450] sm:$0xff]
    %v1053 = vld [vmem:[#allocation3 + $0x458] sm:$0xff]
    %v1054 = vld [vmem:[#allocation3 + $0x460] sm:$0xff]
    %v1055 = vld [vmem:[#allocation3 + $0x468] sm:$0xff]
    %v1056 = vld [vmem:[#allocation3 + $0x470] sm:$0xff]
    %v1057 = vld [vmem:[#allocation3 + $0x478] sm:$0xff]
    %v1058 = vld [vmem:[#allocation3 + $0x480] sm:$0xff]
    %v1059 = vld [vmem:[#allocation3 + $0x488] sm:$0xff]
    %v1060 = vld [vmem:[#allocation3 + $0x490] sm:$0xff]
    %v1061 = vld [vmem:[#allocation3 + $0x498] sm:$0xff]
    %v1062 = vld [vmem:[#allocation3 + $0x4a0] sm:$0xff]
    %v1063 = vld [vmem:[#allocation3 + $0x4a8] sm:$0xff]
    %v1064 = vld [vmem:[#allocation3 + $0x4b0] sm:$0xff]
    %v1065 = vld [vmem:[#allocation3 + $0x4b8] sm:$0xff]
    %v1066 = vld [vmem:[#allocation3 + $0x4c0] sm:$0xff]
    %v1067 = vld [vmem:[#allocation3 + $0x4c8] sm:$0xff]
    %v1068 = vld [vmem:[#allocation3 + $0x4d0] sm:$0xff]
    %v1069 = vld [vmem:[#allocation3 + $0x4d8] sm:$0xff]
    %v1070 = vld [vmem:[#allocation3 + $0x4e0] sm:$0xff]
    %v1071 = vld [vmem:[#allocation3 + $0x4e8] sm:$0xff]
    %v1072 = vld [vmem:[#allocation3 + $0x4f0] sm:$0xff]
    %v1073 = vld [vmem:[#allocation3 + $0x4f8] sm:$0xff]
    %v1074 = vld [vmem:[#allocation3 + $0x500] sm:$0xff]
    %v1075 = vld [vmem:[#allocation3 + $0x508] sm:$0xff]
    %v1076 = vld [vmem:[#allocation3 + $0x510] sm:$0xff]
    %v1077 = vld [vmem:[#allocation3 + $0x518] sm:$0xff]
    %v1078 = vld [vmem:[#allocation3 + $0x520] sm:$0xff]
    %v1079 = vld [vmem:[#allocation3 + $0x528] sm:$0xff]
    %v1080 = vld [vmem:[#allocation3 + $0x530] sm:$0xff]
    %v1081 = vld [vmem:[#allocation3 + $0x538] sm:$0xff]
    %v1082 = vld [vmem:[#allocation3 + $0x540] sm:$0xff]
    %v1083 = vld [vmem:[#allocation3 + $0x548] sm:$0xff]
    %v1084 = vld [vmem:[#allocation3 + $0x550] sm:$0xff]
    %v1085 = vld [vmem:[#allocation3 + $0x558] sm:$0xff]
    %v1086 = vld [vmem:[#allocation3 + $0x560] sm:$0xff]
    %v1087 = vld [vmem:[#allocation3 + $0x568] sm:$0xff]
    %v1088 = vld [vmem:[#allocation3 + $0x570] sm:$0xff]
    %v1089 = vld [vmem:[#allocation3 + $0x578] sm:$0xff]
    %v1090 = vld [vmem:[#allocation3 + $0x580] sm:$0xff]
    %v1091 = vld [vmem:[#allocation3 + $0x588] sm:$0xff]
    %v1092 = vld [vmem:[#allocation3 + $0x590] sm:$0xff]
    %v1093 = vld [vmem:[#allocation3 + $0x598] sm:$0xff]
    %v1094 = vld [vmem:[#allocation3 + $0x5a0] sm:$0xff]
    %v1095 = vld [vmem:[#allocation3 + $0x5a8] sm:$0xff]
    %v1096 = vld [vmem:[#allocation3 + $0x5b0] sm:$0xff]
    %v1097 = vld [vmem:[#allocation3 + $0x5b8] sm:$0xff]
    %v1098 = vld [vmem:[#allocation3 + $0x5c0] sm:$0xff]
    %v1099 = vld [vmem:[#allocation3 + $0x5c8] sm:$0xff]
    %v1100 = vld [vmem:[#allocation3 + $0x5d0] sm:$0xff]
    %v1101 = vld [vmem:[#allocation3 + $0x5d8] sm:$0xff]
    %v1102 = vld [vmem:[#allocation3 + $0x5e0] sm:$0xff]
    %v1103 = vld [vmem:[#allocation3 + $0x5e8] sm:$0xff]
    %v1104 = vld [vmem:[#allocation3 + $0x5f0] sm:$0xff]
    %v1105 = vld [vmem:[#allocation3 + $0x5f8] sm:$0xff]
    %v1106 = vld [vmem:[#allocation3 + $0x600] sm:$0xff]
    %v1107 = vld [vmem:[#allocation3 + $0x608] sm:$0xff]
    %v1108 = vld [vmem:[#allocation3 + $0x610] sm:$0xff]
    %v1109 = vld [vmem:[#allocation3 + $0x618] sm:$0xff]
    %v1110 = vld [vmem:[#allocation3 + $0x620] sm:$0xff]
    %v1111 = vld [vmem:[#allocation3 + $0x628] sm:$0xff]
    %v1112 = vld [vmem:[#allocation3 + $0x630] sm:$0xff]
    %v1113 = vld [vmem:[#allocation3 + $0x638] sm:$0xff]
    %v1114 = vld [vmem:[#allocation3 + $0x640] sm:$0xff]
    %v1115 = vld [vmem:[#allocation3 + $0x648] sm:$0xff]
    %v1116 = vld [vmem:[#allocation3 + $0x650] sm:$0xff]
    %v1117 = vld [vmem:[#allocation3 + $0x658] sm:$0xff]
    %v1118 = vld [vmem:[#allocation3 + $0x660] sm:$0xff]
    %v1119 = vld [vmem:[#allocation3 + $0x668] sm:$0xff]
    %v1120 = vld [vmem:[#allocation3 + $0x670] sm:$0xff]
    %v1121 = vld [vmem:[#allocation3 + $0x678] sm:$0xff]
    %v1122 = vld [vmem:[#allocation3 + $0x680] sm:$0xff]
    %v1123 = vld [vmem:[#allocation3 + $0x688] sm:$0xff]
    %v1124 = vld [vmem:[#allocation3 + $0x690] sm:$0xff]
    %v1125 = vld [vmem:[#allocation3 + $0x698] sm:$0xff]
    %v1126 = vld [vmem:[#allocation3 + $0x6a0] sm:$0xff]
    %v1127 = vld [vmem:[#allocation3 + $0x6a8] sm:$0xff]
    %v1128 = vld [vmem:[#allocation3 + $0x6b0] sm:$0xff]
    %v1129 = vld [vmem:[#allocation3 + $0x6b8] sm:$0xff]
    %v1130 = vld [vmem:[#allocation3 + $0x6c0] sm:$0xff]
    %v1131 = vld [vmem:[#allocation3 + $0x6c8] sm:$0xff]
    %v1132 = vld [vmem:[#allocation3 + $0x6d0] sm:$0xff]
    %v1133 = vld [vmem:[#allocation3 + $0x6d8] sm:$0xff]
    %v1134 = vld [vmem:[#allocation3 + $0x6e0] sm:$0xff]
    %v1135 = vld [vmem:[#allocation3 + $0x6e8] sm:$0xff]
    %v1136 = vld [vmem:[#allocation3 + $0x6f0] sm:$0xff]
    %v1137 = vld [vmem:[#allocation3 + $0x6f8] sm:$0xff]
    %v1138 = vld [vmem:[#allocation3 + $0x700] sm:$0xff]
    %v1139 = vld [vmem:[#allocation3 + $0x708] sm:$0xff]
    %v1140 = vld [vmem:[#allocation3 + $0x710] sm:$0xff]
    %v1141 = vld [vmem:[#allocation3 + $0x718] sm:$0xff]
    %v1142 = vld [vmem:[#allocation3 + $0x720] sm:$0xff]
    %v1143 = vld [vmem:[#allocation3 + $0x728] sm:$0xff]
    %v1144 = vld [vmem:[#allocation3 + $0x730] sm:$0xff]
    %v1145 = vld [vmem:[#allocation3 + $0x738] sm:$0xff]
    %v1146 = vld [vmem:[#allocation3 + $0x740] sm:$0xff]
    %v1147 = vld [vmem:[#allocation3 + $0x748] sm:$0xff]
    %v1148 = vld [vmem:[#allocation3 + $0x750] sm:$0xff]
    %v1149 = vld [vmem:[#allocation3 + $0x758] sm:$0xff]
    %v1150 = vld [vmem:[#allocation3 + $0x760] sm:$0xff]
    %v1151 = vld [vmem:[#allocation3 + $0x768] sm:$0xff]
    %v1152 = vld [vmem:[#allocation3 + $0x770] sm:$0xff]
    %v1153 = vld [vmem:[#allocation3 + $0x778] sm:$0xff]
    %v1154 = vld [vmem:[%s6] sm:$0xff]
    %v1156 = vlaneseq
    %v1157 = vshrl.u32 %v1156, 7
    %v1158 = vsub.s32 0, %v1157
    %v1159 = vrot.slane %v1154, %v1158
    %v1160 = vlaneseq
    %v1161 = vshrl.u32 %v1160, 7
    %v1162 = vsub.s32 1, %v1161
    %v1163 = vrot.slane %v1154, %v1162
    %v1164 = vlaneseq
    %v1165 = vshrl.u32 %v1164, 7
    %v1166 = vsub.s32 2, %v1165
    %v1167 = vrot.slane %v1154, %v1166
    %v1168 = vlaneseq
    %v1169 = vshrl.u32 %v1168, 7
    %v1170 = vsub.s32 3, %v1169
    %v1171 = vrot.slane %v1154, %v1170
    %v1172 = vlaneseq
    %v1173 = vshrl.u32 %v1172, 7
    %v1174 = vsub.s32 4, %v1173
    %v1175 = vrot.slane %v1154, %v1174
    %v1176 = vlaneseq
    %v1177 = vshrl.u32 %v1176, 7
    %v1178 = vsub.s32 5, %v1177
    %v1179 = vrot.slane %v1154, %v1178
    %v1180 = vlaneseq
    %v1181 = vshrl.u32 %v1180, 7
    %v1182 = vsub.s32 6, %v1181
    %v1183 = vrot.slane %v1154, %v1182
    %v1184 = vlaneseq
    %v1185 = vshrl.u32 %v1184, 7
    %v1186 = vsub.s32 7, %v1185
    %v1187 = vrot.slane %v1154, %v1186
    %v1436 = vunpack.c.l.b16 %v914
    %v1437 = vunpack.c.h.b16 %v914
    %v1438 = vunpack.c.l.b16 %v915
    %v1439 = vunpack.c.h.b16 %v915
    %v1440 = vunpack.c.l.b16 %v916
    %v1441 = vunpack.c.h.b16 %v916
    %v1442 = vunpack.c.l.b16 %v917
    %v1443 = vunpack.c.h.b16 %v917
    %v1444 = vunpack.c.l.b16 %v918
    %v1445 = vunpack.c.h.b16 %v918
    %v1446 = vunpack.c.l.b16 %v919
    %v1447 = vunpack.c.h.b16 %v919
    %v1448 = vunpack.c.l.b16 %v920
    %v1449 = vunpack.c.h.b16 %v920
    %v1450 = vunpack.c.l.b16 %v921
    %v1451 = vunpack.c.h.b16 %v921
    %v1452 = vunpack.c.l.b16 %v922
    %v1453 = vunpack.c.h.b16 %v922
    %v1454 = vunpack.c.l.b16 %v923
    %v1455 = vunpack.c.h.b16 %v923
    %v1456 = vunpack.c.l.b16 %v924
    %v1457 = vunpack.c.h.b16 %v924
    %v1458 = vunpack.c.l.b16 %v925
    %v1459 = vunpack.c.h.b16 %v925
    %v1460 = vunpack.c.l.b16 %v926
    %v1461 = vunpack.c.h.b16 %v926
    %v1462 = vunpack.c.l.b16 %v927
    %v1463 = vunpack.c.h.b16 %v927
    %v1464 = vunpack.c.l.b16 %v928
    %v1465 = vunpack.c.h.b16 %v928
    %v1466 = vunpack.c.l.b16 %v929
    %v1467 = vunpack.c.h.b16 %v929
    %v1468 = vunpack.c.l.b16 %v930
    %v1469 = vunpack.c.h.b16 %v930
    %v1470 = vunpack.c.l.b16 %v931
    %v1471 = vunpack.c.h.b16 %v931
    %v1472 = vunpack.c.l.b16 %v932
    %v1473 = vunpack.c.h.b16 %v932
    %v1474 = vunpack.c.l.b16 %v933
    %v1475 = vunpack.c.h.b16 %v933
    %v1476 = vunpack.c.l.b16 %v934
    %v1477 = vunpack.c.h.b16 %v934
    %v1478 = vunpack.c.l.b16 %v935
    %v1479 = vunpack.c.h.b16 %v935
    %v1480 = vunpack.c.l.b16 %v936
    %v1481 = vunpack.c.h.b16 %v936
    %v1482 = vunpack.c.l.b16 %v937
    %v1483 = vunpack.c.h.b16 %v937
    %v1484 = vunpack.c.l.b16 %v938
    %v1485 = vunpack.c.h.b16 %v938
    %v1486 = vunpack.c.l.b16 %v939
    %v1487 = vunpack.c.h.b16 %v939
    %v1488 = vunpack.c.l.b16 %v940
    %v1489 = vunpack.c.h.b16 %v940
    %v1490 = vunpack.c.l.b16 %v941
    %v1491 = vunpack.c.h.b16 %v941
    %v1492 = vunpack.c.l.b16 %v942
    %v1493 = vunpack.c.h.b16 %v942
    %v1494 = vunpack.c.l.b16 %v943
    %v1495 = vunpack.c.h.b16 %v943
    %v1496 = vunpack.c.l.b16 %v944
    %v1497 = vunpack.c.h.b16 %v944
    %v1498 = vunpack.c.l.b16 %v945
    %v1499 = vunpack.c.h.b16 %v945
    %v1500 = vunpack.c.l.b16 %v946
    %v1501 = vunpack.c.h.b16 %v946
    %v1502 = vunpack.c.l.b16 %v947
    %v1503 = vunpack.c.h.b16 %v947
    %v1504 = vunpack.c.l.b16 %v948
    %v1505 = vunpack.c.h.b16 %v948
    %v1506 = vunpack.c.l.b16 %v949
    %v1507 = vunpack.c.h.b16 %v949
    %v1508 = vunpack.c.l.b16 %v950
    %v1509 = vunpack.c.h.b16 %v950
    %v1510 = vunpack.c.l.b16 %v951
    %v1511 = vunpack.c.h.b16 %v951
    %v1512 = vunpack.c.l.b16 %v952
    %v1513 = vunpack.c.h.b16 %v952
    %v1514 = vunpack.c.l.b16 %v953
    %v1515 = vunpack.c.h.b16 %v953
    %v1516 = vunpack.c.l.b16 %v954
    %v1517 = vunpack.c.h.b16 %v954
    %v1518 = vunpack.c.l.b16 %v955
    %v1519 = vunpack.c.h.b16 %v955
    %v1520 = vunpack.c.l.b16 %v956
    %v1521 = vunpack.c.h.b16 %v956
    %v1522 = vunpack.c.l.b16 %v957
    %v1523 = vunpack.c.h.b16 %v957
    %v1524 = vunpack.c.l.b16 %v958
    %v1525 = vunpack.c.h.b16 %v958
    %v1526 = vunpack.c.l.b16 %v959
    %v1527 = vunpack.c.h.b16 %v959
    %v1528 = vunpack.c.l.b16 %v960
    %v1529 = vunpack.c.h.b16 %v960
    %v1530 = vunpack.c.l.b16 %v961
    %v1531 = vunpack.c.h.b16 %v961
    %v1532 = vunpack.c.l.b16 %v962
    %v1533 = vunpack.c.h.b16 %v962
    %v1534 = vunpack.c.l.b16 %v963
    %v1535 = vunpack.c.h.b16 %v963
    %v1536 = vunpack.c.l.b16 %v964
    %v1537 = vunpack.c.h.b16 %v964
    %v1538 = vunpack.c.l.b16 %v965
    %v1539 = vunpack.c.h.b16 %v965
    %v1540 = vunpack.c.l.b16 %v966
    %v1541 = vunpack.c.h.b16 %v966
    %v1542 = vunpack.c.l.b16 %v967
    %v1543 = vunpack.c.h.b16 %v967
    %v1544 = vunpack.c.l.b16 %v968
    %v1545 = vunpack.c.h.b16 %v968
    %v1546 = vunpack.c.l.b16 %v969
    %v1547 = vunpack.c.h.b16 %v969
    %v1548 = vunpack.c.l.b16 %v970
    %v1549 = vunpack.c.h.b16 %v970
    %v1550 = vunpack.c.l.b16 %v971
    %v1551 = vunpack.c.h.b16 %v971
    %v1552 = vunpack.c.l.b16 %v972
    %v1553 = vunpack.c.h.b16 %v972
    %v1554 = vunpack.c.l.b16 %v973
    %v1555 = vunpack.c.h.b16 %v973
    %v1556 = vunpack.c.l.b16 %v974
    %v1557 = vunpack.c.h.b16 %v974
    %v1558 = vunpack.c.l.b16 %v975
    %v1559 = vunpack.c.h.b16 %v975
    %v1560 = vunpack.c.l.b16 %v976
    %v1561 = vunpack.c.h.b16 %v976
    %v1562 = vunpack.c.l.b16 %v977
    %v1563 = vunpack.c.h.b16 %v977
    %v1564 = vunpack.c.l.b16 %v978
    %v1565 = vunpack.c.h.b16 %v978
    %v1566 = vunpack.c.l.b16 %v979
    %v1567 = vunpack.c.h.b16 %v979
    %v1568 = vunpack.c.l.b16 %v980
    %v1569 = vunpack.c.h.b16 %v980
    %v1570 = vunpack.c.l.b16 %v981
    %v1571 = vunpack.c.h.b16 %v981
    %v1572 = vunpack.c.l.b16 %v982
    %v1573 = vunpack.c.h.b16 %v982
    %v1574 = vunpack.c.l.b16 %v983
    %v1575 = vunpack.c.h.b16 %v983
    %v1576 = vunpack.c.l.b16 %v984
    %v1577 = vunpack.c.h.b16 %v984
    %v1578 = vunpack.c.l.b16 %v985
    %v1579 = vunpack.c.h.b16 %v985
    %v1580 = vunpack.c.l.b16 %v986
    %v1581 = vunpack.c.h.b16 %v986
    %v1582 = vunpack.c.l.b16 %v987
    %v1583 = vunpack.c.h.b16 %v987
    %v1584 = vunpack.c.l.b16 %v988
    %v1585 = vunpack.c.h.b16 %v988
    %v1586 = vunpack.c.l.b16 %v989
    %v1587 = vunpack.c.h.b16 %v989
    %v1588 = vunpack.c.l.b16 %v990
    %v1589 = vunpack.c.h.b16 %v990
    %v1590 = vunpack.c.l.b16 %v991
    %v1591 = vunpack.c.h.b16 %v991
    %v1592 = vunpack.c.l.b16 %v992
    %v1593 = vunpack.c.h.b16 %v992
    %v1594 = vunpack.c.l.b16 %v993
    %v1595 = vunpack.c.h.b16 %v993
    %v1596 = vunpack.c.l.b16 %v994
    %v1597 = vunpack.c.h.b16 %v994
    %v1598 = vunpack.c.l.b16 %v995
    %v1599 = vunpack.c.h.b16 %v995
    %v1600 = vunpack.c.l.b16 %v996
    %v1601 = vunpack.c.h.b16 %v996
    %v1602 = vunpack.c.l.b16 %v997
    %v1603 = vunpack.c.h.b16 %v997
    %v1604 = vunpack.c.l.b16 %v998
    %v1605 = vunpack.c.h.b16 %v998
    %v1606 = vunpack.c.l.b16 %v999
    %v1607 = vunpack.c.h.b16 %v999
    %v1608 = vunpack.c.l.b16 %v1000
    %v1609 = vunpack.c.h.b16 %v1000
    %v1610 = vunpack.c.l.b16 %v1001
    %v1611 = vunpack.c.h.b16 %v1001
    %v1612 = vunpack.c.l.b16 %v1002
    %v1613 = vunpack.c.h.b16 %v1002
    %v1614 = vunpack.c.l.b16 %v1003
    %v1615 = vunpack.c.h.b16 %v1003
    %v1616 = vunpack.c.l.b16 %v1004
    %v1617 = vunpack.c.h.b16 %v1004
    %v1618 = vunpack.c.l.b16 %v1005
    %v1619 = vunpack.c.h.b16 %v1005
    %v1620 = vunpack.c.l.b16 %v1006
    %v1621 = vunpack.c.h.b16 %v1006
    %v1622 = vunpack.c.l.b16 %v1007
    %v1623 = vunpack.c.h.b16 %v1007
    %v1624 = vunpack.c.l.b16 %v1008
    %v1625 = vunpack.c.h.b16 %v1008
    %v1626 = vunpack.c.l.b16 %v1009
    %v1627 = vunpack.c.h.b16 %v1009
    %v1628 = vunpack.c.l.b16 %v1010
    %v1629 = vunpack.c.h.b16 %v1010
    %v1630 = vunpack.c.l.b16 %v1011
    %v1631 = vunpack.c.h.b16 %v1011
    %v1632 = vunpack.c.l.b16 %v1012
    %v1633 = vunpack.c.h.b16 %v1012
    %v1634 = vunpack.c.l.b16 %v1013
    %v1635 = vunpack.c.h.b16 %v1013
    %v1636 = vunpack.c.l.b16 %v1014
    %v1637 = vunpack.c.h.b16 %v1014
    %v1638 = vunpack.c.l.b16 %v1015
    %v1639 = vunpack.c.h.b16 %v1015
    %v1640 = vunpack.c.l.b16 %v1016
    %v1641 = vunpack.c.h.b16 %v1016
    %v1642 = vunpack.c.l.b16 %v1017
    %v1643 = vunpack.c.h.b16 %v1017
    %v1644 = vunpack.c.l.b16 %v1018
    %v1645 = vunpack.c.h.b16 %v1018
    %v1646 = vunpack.c.l.b16 %v1019
    %v1647 = vunpack.c.h.b16 %v1019
    %v1648 = vunpack.c.l.b16 %v1020
    %v1649 = vunpack.c.h.b16 %v1020
    %v1650 = vunpack.c.l.b16 %v1021
    %v1651 = vunpack.c.h.b16 %v1021
    %v1652 = vunpack.c.l.b16 %v1022
    %v1653 = vunpack.c.h.b16 %v1022
    %v1654 = vunpack.c.l.b16 %v1023
    %v1655 = vunpack.c.h.b16 %v1023
    %v1656 = vunpack.c.l.b16 %v1024
    %v1657 = vunpack.c.h.b16 %v1024
    %v1658 = vunpack.c.l.b16 %v1025
    %v1659 = vunpack.c.h.b16 %v1025
    %v1660 = vunpack.c.l.b16 %v1026
    %v1661 = vunpack.c.h.b16 %v1026
    %v1662 = vunpack.c.l.b16 %v1027
    %v1663 = vunpack.c.h.b16 %v1027
    %v1664 = vunpack.c.l.b16 %v1028
    %v1665 = vunpack.c.h.b16 %v1028
    %v1666 = vunpack.c.l.b16 %v1029
    %v1667 = vunpack.c.h.b16 %v1029
    %v1668 = vunpack.c.l.b16 %v1030
    %v1669 = vunpack.c.h.b16 %v1030
    %v1670 = vunpack.c.l.b16 %v1031
    %v1671 = vunpack.c.h.b16 %v1031
    %v1672 = vunpack.c.l.b16 %v1032
    %v1673 = vunpack.c.h.b16 %v1032
    %v1674 = vunpack.c.l.b16 %v1033
    %v1675 = vunpack.c.h.b16 %v1033
    %v1676 = vunpack.c.l.b16 %v1034
    %v1677 = vunpack.c.h.b16 %v1034
    %v1678 = vunpack.c.l.b16 %v1035
    %v1679 = vunpack.c.h.b16 %v1035
    %v1680 = vunpack.c.l.b16 %v1036
    %v1681 = vunpack.c.h.b16 %v1036
    %v1682 = vunpack.c.l.b16 %v1037
    %v1683 = vunpack.c.h.b16 %v1037
    %v1684 = vunpack.c.l.b16 %v1038
    %v1685 = vunpack.c.h.b16 %v1038
    %v1686 = vunpack.c.l.b16 %v1039
    %v1687 = vunpack.c.h.b16 %v1039
    %v1688 = vunpack.c.l.b16 %v1040
    %v1689 = vunpack.c.h.b16 %v1040
    %v1690 = vunpack.c.l.b16 %v1041
    %v1691 = vunpack.c.h.b16 %v1041
    %v1692 = vunpack.c.l.b16 %v1042
    %v1693 = vunpack.c.h.b16 %v1042
    %v1694 = vunpack.c.l.b16 %v1043
    %v1695 = vunpack.c.h.b16 %v1043
    %v1696 = vunpack.c.l.b16 %v1044
    %v1697 = vunpack.c.h.b16 %v1044
    %v1698 = vunpack.c.l.b16 %v1045
    %v1699 = vunpack.c.h.b16 %v1045
    %v1700 = vunpack.c.l.b16 %v1046
    %v1701 = vunpack.c.h.b16 %v1046
    %v1702 = vunpack.c.l.b16 %v1047
    %v1703 = vunpack.c.h.b16 %v1047
    %v1704 = vunpack.c.l.b16 %v1048
    %v1705 = vunpack.c.h.b16 %v1048
    %v1706 = vunpack.c.l.b16 %v1049
    %v1707 = vunpack.c.h.b16 %v1049
    %v1708 = vunpack.c.l.b16 %v1050
    %v1709 = vunpack.c.h.b16 %v1050
    %v1710 = vunpack.c.l.b16 %v1051
    %v1711 = vunpack.c.h.b16 %v1051
    %v1712 = vunpack.c.l.b16 %v1052
    %v1713 = vunpack.c.h.b16 %v1052
    %v1714 = vunpack.c.l.b16 %v1053
    %v1715 = vunpack.c.h.b16 %v1053
    %v1716 = vunpack.c.l.b16 %v1054
    %v1717 = vunpack.c.h.b16 %v1054
    %v1718 = vunpack.c.l.b16 %v1055
    %v1719 = vunpack.c.h.b16 %v1055
    %v1720 = vunpack.c.l.b16 %v1056
    %v1721 = vunpack.c.h.b16 %v1056
    %v1722 = vunpack.c.l.b16 %v1057
    %v1723 = vunpack.c.h.b16 %v1057
    %v1724 = vunpack.c.l.b16 %v1058
    %v1725 = vunpack.c.h.b16 %v1058
    %v1726 = vunpack.c.l.b16 %v1059
    %v1727 = vunpack.c.h.b16 %v1059
    %v1728 = vunpack.c.l.b16 %v1060
    %v1729 = vunpack.c.h.b16 %v1060
    %v1730 = vunpack.c.l.b16 %v1061
    %v1731 = vunpack.c.h.b16 %v1061
    %v1732 = vunpack.c.l.b16 %v1062
    %v1733 = vunpack.c.h.b16 %v1062
    %v1734 = vunpack.c.l.b16 %v1063
    %v1735 = vunpack.c.h.b16 %v1063
    %v1736 = vunpack.c.l.b16 %v1064
    %v1737 = vunpack.c.h.b16 %v1064
    %v1738 = vunpack.c.l.b16 %v1065
    %v1739 = vunpack.c.h.b16 %v1065
    %v1740 = vunpack.c.l.b16 %v1066
    %v1741 = vunpack.c.h.b16 %v1066
    %v1742 = vunpack.c.l.b16 %v1067
    %v1743 = vunpack.c.h.b16 %v1067
    %v1744 = vunpack.c.l.b16 %v1068
    %v1745 = vunpack.c.h.b16 %v1068
    %v1746 = vunpack.c.l.b16 %v1069
    %v1747 = vunpack.c.h.b16 %v1069
    %v1748 = vunpack.c.l.b16 %v1070
    %v1749 = vunpack.c.h.b16 %v1070
    %v1750 = vunpack.c.l.b16 %v1071
    %v1751 = vunpack.c.h.b16 %v1071
    %v1752 = vunpack.c.l.b16 %v1072
    %v1753 = vunpack.c.h.b16 %v1072
    %v1754 = vunpack.c.l.b16 %v1073
    %v1755 = vunpack.c.h.b16 %v1073
    %v1756 = vunpack.c.l.b16 %v1074
    %v1757 = vunpack.c.h.b16 %v1074
    %v1758 = vunpack.c.l.b16 %v1075
    %v1759 = vunpack.c.h.b16 %v1075
    %v1760 = vunpack.c.l.b16 %v1076
    %v1761 = vunpack.c.h.b16 %v1076
    %v1762 = vunpack.c.l.b16 %v1077
    %v1763 = vunpack.c.h.b16 %v1077
    %v1764 = vunpack.c.l.b16 %v1078
    %v1765 = vunpack.c.h.b16 %v1078
    %v1766 = vunpack.c.l.b16 %v1079
    %v1767 = vunpack.c.h.b16 %v1079
    %v1768 = vunpack.c.l.b16 %v1080
    %v1769 = vunpack.c.h.b16 %v1080
    %v1770 = vunpack.c.l.b16 %v1081
    %v1771 = vunpack.c.h.b16 %v1081
    %v1772 = vunpack.c.l.b16 %v1082
    %v1773 = vunpack.c.h.b16 %v1082
    %v1774 = vunpack.c.l.b16 %v1083
    %v1775 = vunpack.c.h.b16 %v1083
    %v1776 = vunpack.c.l.b16 %v1084
    %v1777 = vunpack.c.h.b16 %v1084
    %v1778 = vunpack.c.l.b16 %v1085
    %v1779 = vunpack.c.h.b16 %v1085
    %v1780 = vunpack.c.l.b16 %v1086
    %v1781 = vunpack.c.h.b16 %v1086
    %v1782 = vunpack.c.l.b16 %v1087
    %v1783 = vunpack.c.h.b16 %v1087
    %v1784 = vunpack.c.l.b16 %v1088
    %v1785 = vunpack.c.h.b16 %v1088
    %v1786 = vunpack.c.l.b16 %v1089
    %v1787 = vunpack.c.h.b16 %v1089
    %v1788 = vunpack.c.l.b16 %v1090
    %v1789 = vunpack.c.h.b16 %v1090
    %v1790 = vunpack.c.l.b16 %v1091
    %v1791 = vunpack.c.h.b16 %v1091
    %v1792 = vunpack.c.l.b16 %v1092
    %v1793 = vunpack.c.h.b16 %v1092
    %v1794 = vunpack.c.l.b16 %v1093
    %v1795 = vunpack.c.h.b16 %v1093
    %v1796 = vunpack.c.l.b16 %v1094
    %v1797 = vunpack.c.h.b16 %v1094
    %v1798 = vunpack.c.l.b16 %v1095
    %v1799 = vunpack.c.h.b16 %v1095
    %v1800 = vunpack.c.l.b16 %v1096
    %v1801 = vunpack.c.h.b16 %v1096
    %v1802 = vunpack.c.l.b16 %v1097
    %v1803 = vunpack.c.h.b16 %v1097
    %v1804 = vunpack.c.l.b16 %v1098
    %v1805 = vunpack.c.h.b16 %v1098
    %v1806 = vunpack.c.l.b16 %v1099
    %v1807 = vunpack.c.h.b16 %v1099
    %v1808 = vunpack.c.l.b16 %v1100
    %v1809 = vunpack.c.h.b16 %v1100
    %v1810 = vunpack.c.l.b16 %v1101
    %v1811 = vunpack.c.h.b16 %v1101
    %v1812 = vunpack.c.l.b16 %v1102
    %v1813 = vunpack.c.h.b16 %v1102
    %v1814 = vunpack.c.l.b16 %v1103
    %v1815 = vunpack.c.h.b16 %v1103
    %v1816 = vunpack.c.l.b16 %v1104
    %v1817 = vunpack.c.h.b16 %v1104
    %v1818 = vunpack.c.l.b16 %v1105
    %v1819 = vunpack.c.h.b16 %v1105
    %v1820 = vunpack.c.l.b16 %v1106
    %v1821 = vunpack.c.h.b16 %v1106
    %v1822 = vunpack.c.l.b16 %v1107
    %v1823 = vunpack.c.h.b16 %v1107
    %v1824 = vunpack.c.l.b16 %v1108
    %v1825 = vunpack.c.h.b16 %v1108
    %v1826 = vunpack.c.l.b16 %v1109
    %v1827 = vunpack.c.h.b16 %v1109
    %v1828 = vunpack.c.l.b16 %v1110
    %v1829 = vunpack.c.h.b16 %v1110
    %v1830 = vunpack.c.l.b16 %v1111
    %v1831 = vunpack.c.h.b16 %v1111
    %v1832 = vunpack.c.l.b16 %v1112
    %v1833 = vunpack.c.h.b16 %v1112
    %v1834 = vunpack.c.l.b16 %v1113
    %v1835 = vunpack.c.h.b16 %v1113
    %v1836 = vunpack.c.l.b16 %v1114
    %v1837 = vunpack.c.h.b16 %v1114
    %v1838 = vunpack.c.l.b16 %v1115
    %v1839 = vunpack.c.h.b16 %v1115
    %v1840 = vunpack.c.l.b16 %v1116
    %v1841 = vunpack.c.h.b16 %v1116
    %v1842 = vunpack.c.l.b16 %v1117
    %v1843 = vunpack.c.h.b16 %v1117
    %v1844 = vunpack.c.l.b16 %v1118
    %v1845 = vunpack.c.h.b16 %v1118
    %v1846 = vunpack.c.l.b16 %v1119
    %v1847 = vunpack.c.h.b16 %v1119
    %v1848 = vunpack.c.l.b16 %v1120
    %v1849 = vunpack.c.h.b16 %v1120
    %v1850 = vunpack.c.l.b16 %v1121
    %v1851 = vunpack.c.h.b16 %v1121
    %v1852 = vunpack.c.l.b16 %v1122
    %v1853 = vunpack.c.h.b16 %v1122
    %v1854 = vunpack.c.l.b16 %v1123
    %v1855 = vunpack.c.h.b16 %v1123
    %v1856 = vunpack.c.l.b16 %v1124
    %v1857 = vunpack.c.h.b16 %v1124
    %v1858 = vunpack.c.l.b16 %v1125
    %v1859 = vunpack.c.h.b16 %v1125
    %v1860 = vunpack.c.l.b16 %v1126
    %v1861 = vunpack.c.h.b16 %v1126
    %v1862 = vunpack.c.l.b16 %v1127
    %v1863 = vunpack.c.h.b16 %v1127
    %v1864 = vunpack.c.l.b16 %v1128
    %v1865 = vunpack.c.h.b16 %v1128
    %v1866 = vunpack.c.l.b16 %v1129
    %v1867 = vunpack.c.h.b16 %v1129
    %v1868 = vunpack.c.l.b16 %v1130
    %v1869 = vunpack.c.h.b16 %v1130
    %v1870 = vunpack.c.l.b16 %v1131
    %v1871 = vunpack.c.h.b16 %v1131
    %v1872 = vunpack.c.l.b16 %v1132
    %v1873 = vunpack.c.h.b16 %v1132
    %v1874 = vunpack.c.l.b16 %v1133
    %v1875 = vunpack.c.h.b16 %v1133
    %v1876 = vunpack.c.l.b16 %v1134
    %v1877 = vunpack.c.h.b16 %v1134
    %v1878 = vunpack.c.l.b16 %v1135
    %v1879 = vunpack.c.h.b16 %v1135
    %v1880 = vunpack.c.l.b16 %v1136
    %v1881 = vunpack.c.h.b16 %v1136
    %v1882 = vunpack.c.l.b16 %v1137
    %v1883 = vunpack.c.h.b16 %v1137
    %v1884 = vunpack.c.l.b16 %v1138
    %v1885 = vunpack.c.h.b16 %v1138
    %v1886 = vunpack.c.l.b16 %v1139
    %v1887 = vunpack.c.h.b16 %v1139
    %v1888 = vunpack.c.l.b16 %v1140
    %v1889 = vunpack.c.h.b16 %v1140
    %v1890 = vunpack.c.l.b16 %v1141
    %v1891 = vunpack.c.h.b16 %v1141
    %v1892 = vunpack.c.l.b16 %v1142
    %v1893 = vunpack.c.h.b16 %v1142
    %v1894 = vunpack.c.l.b16 %v1143
    %v1895 = vunpack.c.h.b16 %v1143
    %v1896 = vunpack.c.l.b16 %v1144
    %v1897 = vunpack.c.h.b16 %v1144
    %v1898 = vunpack.c.l.b16 %v1145
    %v1899 = vunpack.c.h.b16 %v1145
    %v1900 = vunpack.c.l.b16 %v1146
    %v1901 = vunpack.c.h.b16 %v1146
    %v1902 = vunpack.c.l.b16 %v1147
    %v1903 = vunpack.c.h.b16 %v1147
    %v1904 = vunpack.c.l.b16 %v1148
    %v1905 = vunpack.c.h.b16 %v1148
    %v1906 = vunpack.c.l.b16 %v1149
    %v1907 = vunpack.c.h.b16 %v1149
    %v1908 = vunpack.c.l.b16 %v1150
    %v1909 = vunpack.c.h.b16 %v1150
    %v1910 = vunpack.c.l.b16 %v1151
    %v1911 = vunpack.c.h.b16 %v1151
    %v1912 = vunpack.c.l.b16 %v1152
    %v1913 = vunpack.c.h.b16 %v1152
    %v1914 = vunpack.c.l.b16 %v1153
    %v1915 = vunpack.c.h.b16 %v1153
    %v1916 = vpack.c.b16 %v1444, %v1436
    %v1917 = vpack.c.b16 %v1445, %v1437
    %v1918 = vpack.c.b16 %v1446, %v1438
    %v1919 = vpack.c.b16 %v1447, %v1439
    %v1920 = vpack.c.b16 %v1448, %v1440
    %v1921 = vpack.c.b16 %v1449, %v1441
    %v1922 = vpack.c.b16 %v1450, %v1442
    %v1923 = vpack.c.b16 %v1451, %v1443
    %v1924 = vpack.c.b16 %v1460, %v1452
    %v1925 = vpack.c.b16 %v1461, %v1453
    %v1926 = vpack.c.b16 %v1462, %v1454
    %v1927 = vpack.c.b16 %v1463, %v1455
    %v1928 = vpack.c.b16 %v1464, %v1456
    %v1929 = vpack.c.b16 %v1465, %v1457
    %v1930 = vpack.c.b16 %v1466, %v1458
    %v1931 = vpack.c.b16 %v1467, %v1459
    %v1932 = vpack.c.b16 %v1476, %v1468
    %v1933 = vpack.c.b16 %v1477, %v1469
    %v1934 = vpack.c.b16 %v1478, %v1470
    %v1935 = vpack.c.b16 %v1479, %v1471
    %v1936 = vpack.c.b16 %v1480, %v1472
    %v1937 = vpack.c.b16 %v1481, %v1473
    %v1938 = vpack.c.b16 %v1482, %v1474
    %v1939 = vpack.c.b16 %v1483, %v1475
    %v1940 = vpack.c.b16 %v1492, %v1484
    %v1941 = vpack.c.b16 %v1493, %v1485
    %v1942 = vpack.c.b16 %v1494, %v1486
    %v1943 = vpack.c.b16 %v1495, %v1487
    %v1944 = vpack.c.b16 %v1496, %v1488
    %v1945 = vpack.c.b16 %v1497, %v1489
    %v1946 = vpack.c.b16 %v1498, %v1490
    %v1947 = vpack.c.b16 %v1499, %v1491
    %v1948 = vpack.c.b16 %v1508, %v1500
    %v1949 = vpack.c.b16 %v1509, %v1501
    %v1950 = vpack.c.b16 %v1510, %v1502
    %v1951 = vpack.c.b16 %v1511, %v1503
    %v1952 = vpack.c.b16 %v1512, %v1504
    %v1953 = vpack.c.b16 %v1513, %v1505
    %v1954 = vpack.c.b16 %v1514, %v1506
    %v1955 = vpack.c.b16 %v1515, %v1507
    %v1956 = vpack.c.b16 %v1524, %v1516
    %v1957 = vpack.c.b16 %v1525, %v1517
    %v1958 = vpack.c.b16 %v1526, %v1518
    %v1959 = vpack.c.b16 %v1527, %v1519
    %v1960 = vpack.c.b16 %v1528, %v1520
    %v1961 = vpack.c.b16 %v1529, %v1521
    %v1962 = vpack.c.b16 %v1530, %v1522
    %v1963 = vpack.c.b16 %v1531, %v1523
    %v1964 = vpack.c.b16 %v1540, %v1532
    %v1965 = vpack.c.b16 %v1541, %v1533
    %v1966 = vpack.c.b16 %v1542, %v1534
    %v1967 = vpack.c.b16 %v1543, %v1535
    %v1968 = vpack.c.b16 %v1544, %v1536
    %v1969 = vpack.c.b16 %v1545, %v1537
    %v1970 = vpack.c.b16 %v1546, %v1538
    %v1971 = vpack.c.b16 %v1547, %v1539
    %v1972 = vpack.c.b16 %v1556, %v1548
    %v1973 = vpack.c.b16 %v1557, %v1549
    %v1974 = vpack.c.b16 %v1558, %v1550
    %v1975 = vpack.c.b16 %v1559, %v1551
    %v1976 = vpack.c.b16 %v1560, %v1552
    %v1977 = vpack.c.b16 %v1561, %v1553
    %v1978 = vpack.c.b16 %v1562, %v1554
    %v1979 = vpack.c.b16 %v1563, %v1555
    %v1980 = vpack.c.b16 %v1572, %v1564
    %v1981 = vpack.c.b16 %v1573, %v1565
    %v1982 = vpack.c.b16 %v1574, %v1566
    %v1983 = vpack.c.b16 %v1575, %v1567
    %v1984 = vpack.c.b16 %v1576, %v1568
    %v1985 = vpack.c.b16 %v1577, %v1569
    %v1986 = vpack.c.b16 %v1578, %v1570
    %v1987 = vpack.c.b16 %v1579, %v1571
    %v1988 = vpack.c.b16 %v1588, %v1580
    %v1989 = vpack.c.b16 %v1589, %v1581
    %v1990 = vpack.c.b16 %v1590, %v1582
    %v1991 = vpack.c.b16 %v1591, %v1583
    %v1992 = vpack.c.b16 %v1592, %v1584
    %v1993 = vpack.c.b16 %v1593, %v1585
    %v1994 = vpack.c.b16 %v1594, %v1586
    %v1995 = vpack.c.b16 %v1595, %v1587
    %v1996 = vpack.c.b16 %v1604, %v1596
    %v1997 = vpack.c.b16 %v1605, %v1597
    %v1998 = vpack.c.b16 %v1606, %v1598
    %v1999 = vpack.c.b16 %v1607, %v1599
    %v2000 = vpack.c.b16 %v1608, %v1600
    %v2001 = vpack.c.b16 %v1609, %v1601
    %v2002 = vpack.c.b16 %v1610, %v1602
    %v2003 = vpack.c.b16 %v1611, %v1603
    %v2004 = vpack.c.b16 %v1620, %v1612
    %v2005 = vpack.c.b16 %v1621, %v1613
    %v2006 = vpack.c.b16 %v1622, %v1614
    %v2007 = vpack.c.b16 %v1623, %v1615
    %v2008 = vpack.c.b16 %v1624, %v1616
    %v2009 = vpack.c.b16 %v1625, %v1617
    %v2010 = vpack.c.b16 %v1626, %v1618
    %v2011 = vpack.c.b16 %v1627, %v1619
    %v2012 = vpack.c.b16 %v1636, %v1628
    %v2013 = vpack.c.b16 %v1637, %v1629
    %v2014 = vpack.c.b16 %v1638, %v1630
    %v2015 = vpack.c.b16 %v1639, %v1631
    %v2016 = vpack.c.b16 %v1640, %v1632
    %v2017 = vpack.c.b16 %v1641, %v1633
    %v2018 = vpack.c.b16 %v1642, %v1634
    %v2019 = vpack.c.b16 %v1643, %v1635
    %v2020 = vpack.c.b16 %v1652, %v1644
    %v2021 = vpack.c.b16 %v1653, %v1645
    %v2022 = vpack.c.b16 %v1654, %v1646
    %v2023 = vpack.c.b16 %v1655, %v1647
    %v2024 = vpack.c.b16 %v1656, %v1648
    %v2025 = vpack.c.b16 %v1657, %v1649
    %v2026 = vpack.c.b16 %v1658, %v1650
    %v2027 = vpack.c.b16 %v1659, %v1651
    %v2028 = vpack.c.b16 %v1668, %v1660
    %v2029 = vpack.c.b16 %v1669, %v1661
    %v2030 = vpack.c.b16 %v1670, %v1662
    %v2031 = vpack.c.b16 %v1671, %v1663
    %v2032 = vpack.c.b16 %v1672, %v1664
    %v2033 = vpack.c.b16 %v1673, %v1665
    %v2034 = vpack.c.b16 %v1674, %v1666
    %v2035 = vpack.c.b16 %v1675, %v1667
    %v2036 = vpack.c.b16 %v1684, %v1676
    %v2037 = vpack.c.b16 %v1685, %v1677
    %v2038 = vpack.c.b16 %v1686, %v1678
    %v2039 = vpack.c.b16 %v1687, %v1679
    %v2040 = vpack.c.b16 %v1688, %v1680
    %v2041 = vpack.c.b16 %v1689, %v1681
    %v2042 = vpack.c.b16 %v1690, %v1682
    %v2043 = vpack.c.b16 %v1691, %v1683
    %v2044 = vpack.c.b16 %v1700, %v1692
    %v2045 = vpack.c.b16 %v1701, %v1693
    %v2046 = vpack.c.b16 %v1702, %v1694
    %v2047 = vpack.c.b16 %v1703, %v1695
    %v2048 = vpack.c.b16 %v1704, %v1696
    %v2049 = vpack.c.b16 %v1705, %v1697
    %v2050 = vpack.c.b16 %v1706, %v1698
    %v2051 = vpack.c.b16 %v1707, %v1699
    %v2052 = vpack.c.b16 %v1716, %v1708
    %v2053 = vpack.c.b16 %v1717, %v1709
    %v2054 = vpack.c.b16 %v1718, %v1710
    %v2055 = vpack.c.b16 %v1719, %v1711
    %v2056 = vpack.c.b16 %v1720, %v1712
    %v2057 = vpack.c.b16 %v1721, %v1713
    %v2058 = vpack.c.b16 %v1722, %v1714
    %v2059 = vpack.c.b16 %v1723, %v1715
    %v2060 = vpack.c.b16 %v1732, %v1724
    %v2061 = vpack.c.b16 %v1733, %v1725
    %v2062 = vpack.c.b16 %v1734, %v1726
    %v2063 = vpack.c.b16 %v1735, %v1727
    %v2064 = vpack.c.b16 %v1736, %v1728
    %v2065 = vpack.c.b16 %v1737, %v1729
    %v2066 = vpack.c.b16 %v1738, %v1730
    %v2067 = vpack.c.b16 %v1739, %v1731
    %v2068 = vpack.c.b16 %v1748, %v1740
    %v2069 = vpack.c.b16 %v1749, %v1741
    %v2070 = vpack.c.b16 %v1750, %v1742
    %v2071 = vpack.c.b16 %v1751, %v1743
    %v2072 = vpack.c.b16 %v1752, %v1744
    %v2073 = vpack.c.b16 %v1753, %v1745
    %v2074 = vpack.c.b16 %v1754, %v1746
    %v2075 = vpack.c.b16 %v1755, %v1747
    %v2076 = vpack.c.b16 %v1764, %v1756
    %v2077 = vpack.c.b16 %v1765, %v1757
    %v2078 = vpack.c.b16 %v1766, %v1758
    %v2079 = vpack.c.b16 %v1767, %v1759
    %v2080 = vpack.c.b16 %v1768, %v1760
    %v2081 = vpack.c.b16 %v1769, %v1761
    %v2082 = vpack.c.b16 %v1770, %v1762
    %v2083 = vpack.c.b16 %v1771, %v1763
    %v2084 = vpack.c.b16 %v1780, %v1772
    %v2085 = vpack.c.b16 %v1781, %v1773
    %v2086 = vpack.c.b16 %v1782, %v1774
    %v2087 = vpack.c.b16 %v1783, %v1775
    %v2088 = vpack.c.b16 %v1784, %v1776
    %v2089 = vpack.c.b16 %v1785, %v1777
    %v2090 = vpack.c.b16 %v1786, %v1778
    %v2091 = vpack.c.b16 %v1787, %v1779
    %v2092 = vpack.c.b16 %v1796, %v1788
    %v2093 = vpack.c.b16 %v1797, %v1789
    %v2094 = vpack.c.b16 %v1798, %v1790
    %v2095 = vpack.c.b16 %v1799, %v1791
    %v2096 = vpack.c.b16 %v1800, %v1792
    %v2097 = vpack.c.b16 %v1801, %v1793
    %v2098 = vpack.c.b16 %v1802, %v1794
    %v2099 = vpack.c.b16 %v1803, %v1795
    %v2100 = vpack.c.b16 %v1812, %v1804
    %v2101 = vpack.c.b16 %v1813, %v1805
    %v2102 = vpack.c.b16 %v1814, %v1806
    %v2103 = vpack.c.b16 %v1815, %v1807
    %v2104 = vpack.c.b16 %v1816, %v1808
    %v2105 = vpack.c.b16 %v1817, %v1809
    %v2106 = vpack.c.b16 %v1818, %v1810
    %v2107 = vpack.c.b16 %v1819, %v1811
    %v2108 = vpack.c.b16 %v1828, %v1820
    %v2109 = vpack.c.b16 %v1829, %v1821
    %v2110 = vpack.c.b16 %v1830, %v1822
    %v2111 = vpack.c.b16 %v1831, %v1823
    %v2112 = vpack.c.b16 %v1832, %v1824
    %v2113 = vpack.c.b16 %v1833, %v1825
    %v2114 = vpack.c.b16 %v1834, %v1826
    %v2115 = vpack.c.b16 %v1835, %v1827
    %v2116 = vpack.c.b16 %v1844, %v1836
    %v2117 = vpack.c.b16 %v1845, %v1837
    %v2118 = vpack.c.b16 %v1846, %v1838
    %v2119 = vpack.c.b16 %v1847, %v1839
    %v2120 = vpack.c.b16 %v1848, %v1840
    %v2121 = vpack.c.b16 %v1849, %v1841
    %v2122 = vpack.c.b16 %v1850, %v1842
    %v2123 = vpack.c.b16 %v1851, %v1843
    %v2124 = vpack.c.b16 %v1860, %v1852
    %v2125 = vpack.c.b16 %v1861, %v1853
    %v2126 = vpack.c.b16 %v1862, %v1854
    %v2127 = vpack.c.b16 %v1863, %v1855
    %v2128 = vpack.c.b16 %v1864, %v1856
    %v2129 = vpack.c.b16 %v1865, %v1857
    %v2130 = vpack.c.b16 %v1866, %v1858
    %v2131 = vpack.c.b16 %v1867, %v1859
    %v2132 = vpack.c.b16 %v1876, %v1868
    %v2133 = vpack.c.b16 %v1877, %v1869
    %v2134 = vpack.c.b16 %v1878, %v1870
    %v2135 = vpack.c.b16 %v1879, %v1871
    %v2136 = vpack.c.b16 %v1880, %v1872
    %v2137 = vpack.c.b16 %v1881, %v1873
    %v2138 = vpack.c.b16 %v1882, %v1874
    %v2139 = vpack.c.b16 %v1883, %v1875
    %v2140 = vpack.c.b16 %v1892, %v1884
    %v2141 = vpack.c.b16 %v1893, %v1885
    %v2142 = vpack.c.b16 %v1894, %v1886
    %v2143 = vpack.c.b16 %v1895, %v1887
    %v2144 = vpack.c.b16 %v1896, %v1888
    %v2145 = vpack.c.b16 %v1897, %v1889
    %v2146 = vpack.c.b16 %v1898, %v1890
    %v2147 = vpack.c.b16 %v1899, %v1891
    %v2148 = vpack.c.b16 %v1908, %v1900
    %v2149 = vpack.c.b16 %v1909, %v1901
    %v2150 = vpack.c.b16 %v1910, %v1902
    %v2151 = vpack.c.b16 %v1911, %v1903
    %v2152 = vpack.c.b16 %v1912, %v1904
    %v2153 = vpack.c.b16 %v1913, %v1905
    %v2154 = vpack.c.b16 %v1914, %v1906
    %v2155 = vpack.c.b16 %v1915, %v1907
    %vm2396 = vcmask 785408
    %v2398 = vsel %vm2396, %v913, 0
    %2400 = vmatprep.subr.bf16.mxu0 %v1973
    %2401 = vmatpush1.bf16.msra.mxu0 %v1972
    %2402 = vmatprep.subr.bf16.mxu0 %v1965
    %2403 = vmatpush1.bf16.msra.mxu0 %v1964
    %2404 = vmatprep.subr.bf16.mxu0 %v1957
    %2405 = vmatpush1.bf16.msra.mxu0 %v1956
    %2406 = vmatprep.subr.bf16.mxu0 %v1949
    %2407 = vmatpush1.bf16.msra.mxu0 %v1948
    %2408 = vmatprep.subr.bf16.mxu0 %v1941
    %2409 = vmatpush1.bf16.msra.mxu0 %v1940
    %2410 = vmatprep.subr.bf16.mxu0 %v1933
    %2411 = vmatpush1.bf16.msra.mxu0 %v1932
    %2412 = vmatprep.subr.bf16.mxu0 %v1925
    %2413 = vmatpush1.bf16.msra.mxu0 %v1924
    %2414 = vmatprep.subr.bf16.mxu0 %v1917
    %2415 = vmatpush1.bf16.msra.mxu0 %v1916
    %2416 = vmatprep.subr.bf16.mxu0 %v2037
    %2417 = vmatpush2.bf16.msra.mxu0 %v2036
    %2418 = vmatprep.subr.bf16.mxu0 %v2029
    %2419 = vmatpush2.bf16.msra.mxu0 %v2028
    %2420 = vmatprep.subr.bf16.mxu0 %v2021
    %2421 = vmatpush2.bf16.msra.mxu0 %v2020
    %2422 = vmatprep.subr.bf16.mxu0 %v2013
    %2423 = vmatpush2.bf16.msra.mxu0 %v2012
    %2424 = vmatprep.subr.bf16.mxu0 %v2005
    %2425 = vmatpush2.bf16.msra.mxu0 %v2004
    %2426 = vmatprep.subr.bf16.mxu0 %v1997
    %2427 = vmatpush2.bf16.msra.mxu0 %v1996
    %2428 = vmatprep.subr.bf16.mxu0 %v1989
    %2429 = vmatpush2.bf16.msra.mxu0 %v1988
    %2430 = vmatprep.subr.bf16.mxu0 %v1981
    %2431 = vmatpush2.bf16.msra.mxu0 %v1980
    %2432 = vmatprep.mubr.bf16.mxu0 %v911
    %2433 = vmatmul.mubr.bf16.gmra.mxu0 %v910
    %v2434 = vpop.f32.mrf.mxu0
    %v2435 = vadd.f32 %v1159, %v2434
    %v2436 = vpop.f32.mrf.mxu0
    %v2437 = vadd.f32 %v1163, %v2436
    %v2438 = vpop.f32.mrf.mxu0
    %v2439 = vpop.f32.mrf.mxu0
    %2440 = vdwg.mxu0
    %2441 = vmatprep.subr.bf16.mxu0 %v2101
    %2442 = vmatpush1.bf16.msra.mxu0 %v2100
    %2443 = vmatprep.subr.bf16.mxu0 %v2093
    %2444 = vmatpush1.bf16.msra.mxu0 %v2092
    %2445 = vmatprep.subr.bf16.mxu0 %v2085
    %2446 = vmatpush1.bf16.msra.mxu0 %v2084
    %2447 = vmatprep.subr.bf16.mxu0 %v2077
    %2448 = vmatpush1.bf16.msra.mxu0 %v2076
    %2449 = vmatprep.subr.bf16.mxu0 %v2069
    %2450 = vmatpush1.bf16.msra.mxu0 %v2068
    %2451 = vmatprep.subr.bf16.mxu0 %v2061
    %2452 = vmatpush1.bf16.msra.mxu0 %v2060
    %2453 = vmatprep.subr.bf16.mxu0 %v2053
    %2454 = vmatpush1.bf16.msra.mxu0 %v2052
    %2455 = vmatprep.subr.bf16.mxu0 %v2045
    %2456 = vmatpush1.bf16.msra.mxu0 %v2044
    %2457 = vmatprep.subr.bf16.mxu0 0
    %2458 = vmatpush2.bf16.msra.mxu0 0
    %2459 = vmatprep.subr.bf16.mxu0 0
    %2460 = vmatpush2.bf16.msra.mxu0 0
    %2461 = vmatprep.subr.bf16.mxu0 %v2149
    %2462 = vmatpush2.bf16.msra.mxu0 %v2148
    %2463 = vmatprep.subr.bf16.mxu0 %v2141
    %2464 = vmatpush2.bf16.msra.mxu0 %v2140
    %2465 = vmatprep.subr.bf16.mxu0 %v2133
    %2466 = vmatpush2.bf16.msra.mxu0 %v2132
    %2467 = vmatprep.subr.bf16.mxu0 %v2125
    %2468 = vmatpush2.bf16.msra.mxu0 %v2124
    %2469 = vmatprep.subr.bf16.mxu0 %v2117
    %2470 = vmatpush2.bf16.msra.mxu0 %v2116
    %2471 = vmatprep.subr.bf16.mxu0 %v2109
    %2472 = vmatpush2.bf16.msra.mxu0 %v2108
    %2473 = vmatprep.mubr.bf16.mxu0 %v2398
    %2474 = vmatmul.mubr.bf16.gmra.mxu0 %v912
    %v2475 = vpop.f32.mrf.mxu0
    %v2476 = vadd.f32 %v2435, %v2475
    %v2477 = vpop.f32.mrf.mxu0
    %v2478 = vadd.f32 %v2437, %v2477
    %v2479 = vpop.f32.mrf.mxu0
    %v2480 = vpop.f32.mrf.mxu0
    %2481 = vdwg.mxu0
    %2482 = vmatprep.subr.bf16.mxu0 %v1975
    %2483 = vmatpush1.bf16.msra.mxu0 %v1974
    %2484 = vmatprep.subr.bf16.mxu0 %v1967
    %2485 = vmatpush1.bf16.msra.mxu0 %v1966
    %2486 = vmatprep.subr.bf16.mxu0 %v1959
    %2487 = vmatpush1.bf16.msra.mxu0 %v1958
    %2488 = vmatprep.subr.bf16.mxu0 %v1951
    %2489 = vmatpush1.bf16.msra.mxu0 %v1950
    %2490 = vmatprep.subr.bf16.mxu0 %v1943
    %2491 = vmatpush1.bf16.msra.mxu0 %v1942
    %2492 = vmatprep.subr.bf16.mxu0 %v1935
    %2493 = vmatpush1.bf16.msra.mxu0 %v1934
    %2494 = vmatprep.subr.bf16.mxu0 %v1927
    %2495 = vmatpush1.bf16.msra.mxu0 %v1926
    %2496 = vmatprep.subr.bf16.mxu0 %v1919
    %2497 = vmatpush1.bf16.msra.mxu0 %v1918
    %2498 = vmatprep.subr.bf16.mxu0 %v2039
    %2499 = vmatpush2.bf16.msra.mxu0 %v2038
    %2500 = vmatprep.subr.bf16.mxu0 %v2031
    %2501 = vmatpush2.bf16.msra.mxu0 %v2030
    %2502 = vmatprep.subr.bf16.mxu0 %v2023
    %2503 = vmatpush2.bf16.msra.mxu0 %v2022
    %2504 = vmatprep.subr.bf16.mxu0 %v2015
    %2505 = vmatpush2.bf16.msra.mxu0 %v2014
    %2506 = vmatprep.subr.bf16.mxu0 %v2007
    %2507 = vmatpush2.bf16.msra.mxu0 %v2006
    %2508 = vmatprep.subr.bf16.mxu0 %v1999
    %2509 = vmatpush2.bf16.msra.mxu0 %v1998
    %2510 = vmatprep.subr.bf16.mxu0 %v1991
    %2511 = vmatpush2.bf16.msra.mxu0 %v1990
    %2512 = vmatprep.subr.bf16.mxu0 %v1983
    %2513 = vmatpush2.bf16.msra.mxu0 %v1982
    %2514 = vmatprep.mubr.bf16.mxu0 %v911
    %2515 = vmatmul.mubr.bf16.gmra.mxu0 %v910
    %v2516 = vpop.f32.mrf.mxu0
    %v2517 = vadd.f32 %v1167, %v2516
    %v2518 = vpop.f32.mrf.mxu0
    %v2519 = vadd.f32 %v1171, %v2518
    %v2520 = vpop.f32.mrf.mxu0
    %v2521 = vpop.f32.mrf.mxu0
    %2522 = vdwg.mxu0
    %2523 = vmatprep.subr.bf16.mxu0 %v2103
    %2524 = vmatpush1.bf16.msra.mxu0 %v2102
    %2525 = vmatprep.subr.bf16.mxu0 %v2095
    %2526 = vmatpush1.bf16.msra.mxu0 %v2094
    %2527 = vmatprep.subr.bf16.mxu0 %v2087
    %2528 = vmatpush1.bf16.msra.mxu0 %v2086
    %2529 = vmatprep.subr.bf16.mxu0 %v2079
    %2530 = vmatpush1.bf16.msra.mxu0 %v2078
    %2531 = vmatprep.subr.bf16.mxu0 %v2071
    %2532 = vmatpush1.bf16.msra.mxu0 %v2070
    %2533 = vmatprep.subr.bf16.mxu0 %v2063
    %2534 = vmatpush1.bf16.msra.mxu0 %v2062
    %2535 = vmatprep.subr.bf16.mxu0 %v2055
    %2536 = vmatpush1.bf16.msra.mxu0 %v2054
    %2537 = vmatprep.subr.bf16.mxu0 %v2047
    %2538 = vmatpush1.bf16.msra.mxu0 %v2046
    %2539 = vmatprep.subr.bf16.mxu0 0
    %2540 = vmatpush2.bf16.msra.mxu0 0
    %2541 = vmatprep.subr.bf16.mxu0 0
    %2542 = vmatpush2.bf16.msra.mxu0 0
    %2543 = vmatprep.subr.bf16.mxu0 %v2151
    %2544 = vmatpush2.bf16.msra.mxu0 %v2150
    %2545 = vmatprep.subr.bf16.mxu0 %v2143
    %2546 = vmatpush2.bf16.msra.mxu0 %v2142
    %2547 = vmatprep.subr.bf16.mxu0 %v2135
    %2548 = vmatpush2.bf16.msra.mxu0 %v2134
    %2549 = vmatprep.subr.bf16.mxu0 %v2127
    %2550 = vmatpush2.bf16.msra.mxu0 %v2126
    %2551 = vmatprep.subr.bf16.mxu0 %v2119
    %2552 = vmatpush2.bf16.msra.mxu0 %v2118
    %2553 = vmatprep.subr.bf16.mxu0 %v2111
    %2554 = vmatpush2.bf16.msra.mxu0 %v2110
    %2555 = vmatprep.mubr.bf16.mxu0 %v2398
    %2556 = vmatmul.mubr.bf16.gmra.mxu0 %v912
    %v2557 = vpop.f32.mrf.mxu0
    %v2558 = vadd.f32 %v2517, %v2557
    %v2559 = vpop.f32.mrf.mxu0
    %v2560 = vadd.f32 %v2519, %v2559
    %v2561 = vpop.f32.mrf.mxu0
    %v2562 = vpop.f32.mrf.mxu0
    %2563 = vdwg.mxu0
    %2564 = vmatprep.subr.bf16.mxu0 %v1977
    %2565 = vmatpush1.bf16.msra.mxu0 %v1976
    %2566 = vmatprep.subr.bf16.mxu0 %v1969
    %2567 = vmatpush1.bf16.msra.mxu0 %v1968
    %2568 = vmatprep.subr.bf16.mxu0 %v1961
    %2569 = vmatpush1.bf16.msra.mxu0 %v1960
    %2570 = vmatprep.subr.bf16.mxu0 %v1953
    %2571 = vmatpush1.bf16.msra.mxu0 %v1952
    %2572 = vmatprep.subr.bf16.mxu0 %v1945
    %2573 = vmatpush1.bf16.msra.mxu0 %v1944
    %2574 = vmatprep.subr.bf16.mxu0 %v1937
    %2575 = vmatpush1.bf16.msra.mxu0 %v1936
    %2576 = vmatprep.subr.bf16.mxu0 %v1929
    %2577 = vmatpush1.bf16.msra.mxu0 %v1928
    %2578 = vmatprep.subr.bf16.mxu0 %v1921
    %2579 = vmatpush1.bf16.msra.mxu0 %v1920
    %2580 = vmatprep.subr.bf16.mxu0 %v2041
    %2581 = vmatpush2.bf16.msra.mxu0 %v2040
    %2582 = vmatprep.subr.bf16.mxu0 %v2033
    %2583 = vmatpush2.bf16.msra.mxu0 %v2032
    %2584 = vmatprep.subr.bf16.mxu0 %v2025
    %2585 = vmatpush2.bf16.msra.mxu0 %v2024
    %2586 = vmatprep.subr.bf16.mxu0 %v2017
    %2587 = vmatpush2.bf16.msra.mxu0 %v2016
    %2588 = vmatprep.subr.bf16.mxu0 %v2009
    %2589 = vmatpush2.bf16.msra.mxu0 %v2008
    %2590 = vmatprep.subr.bf16.mxu0 %v2001
    %2591 = vmatpush2.bf16.msra.mxu0 %v2000
    %2592 = vmatprep.subr.bf16.mxu0 %v1993
    %2593 = vmatpush2.bf16.msra.mxu0 %v1992
    %2594 = vmatprep.subr.bf16.mxu0 %v1985
    %2595 = vmatpush2.bf16.msra.mxu0 %v1984
    %2596 = vmatprep.mubr.bf16.mxu0 %v911
    %2597 = vmatmul.mubr.bf16.gmra.mxu0 %v910
    %v2598 = vpop.f32.mrf.mxu0
    %v2599 = vadd.f32 %v1175, %v2598
    %v2600 = vpop.f32.mrf.mxu0
    %v2601 = vadd.f32 %v1179, %v2600
    %v2602 = vpop.f32.mrf.mxu0
    %v2603 = vpop.f32.mrf.mxu0
    %2604 = vdwg.mxu0
    %2605 = vmatprep.subr.bf16.mxu0 %v2105
    %2606 = vmatpush1.bf16.msra.mxu0 %v2104
    %2607 = vmatprep.subr.bf16.mxu0 %v2097
    %2608 = vmatpush1.bf16.msra.mxu0 %v2096
    %2609 = vmatprep.subr.bf16.mxu0 %v2089
    %2610 = vmatpush1.bf16.msra.mxu0 %v2088
    %2611 = vmatprep.subr.bf16.mxu0 %v2081
    %2612 = vmatpush1.bf16.msra.mxu0 %v2080
    %2613 = vmatprep.subr.bf16.mxu0 %v2073
    %2614 = vmatpush1.bf16.msra.mxu0 %v2072
    %2615 = vmatprep.subr.bf16.mxu0 %v2065
    %2616 = vmatpush1.bf16.msra.mxu0 %v2064
    %2617 = vmatprep.subr.bf16.mxu0 %v2057
    %2618 = vmatpush1.bf16.msra.mxu0 %v2056
    %2619 = vmatprep.subr.bf16.mxu0 %v2049
    %2620 = vmatpush1.bf16.msra.mxu0 %v2048
    %2621 = vmatprep.subr.bf16.mxu0 0
    %2622 = vmatpush2.bf16.msra.mxu0 0
    %2623 = vmatprep.subr.bf16.mxu0 0
    %2624 = vmatpush2.bf16.msra.mxu0 0
    %2625 = vmatprep.subr.bf16.mxu0 %v2153
    %2626 = vmatpush2.bf16.msra.mxu0 %v2152
    %2627 = vmatprep.subr.bf16.mxu0 %v2145
    %2628 = vmatpush2.bf16.msra.mxu0 %v2144
    %2629 = vmatprep.subr.bf16.mxu0 %v2137
    %2630 = vmatpush2.bf16.msra.mxu0 %v2136
    %2631 = vmatprep.subr.bf16.mxu0 %v2129
    %2632 = vmatpush2.bf16.msra.mxu0 %v2128
    %2633 = vmatprep.subr.bf16.mxu0 %v2121
    %2634 = vmatpush2.bf16.msra.mxu0 %v2120
    %2635 = vmatprep.subr.bf16.mxu0 %v2113
    %2636 = vmatpush2.bf16.msra.mxu0 %v2112
    %2637 = vmatprep.mubr.bf16.mxu0 %v2398
    %2638 = vmatmul.mubr.bf16.gmra.mxu0 %v912
    %v2639 = vpop.f32.mrf.mxu0
    %v2640 = vadd.f32 %v2599, %v2639
    %v2641 = vpop.f32.mrf.mxu0
    %v2642 = vadd.f32 %v2601, %v2641
    %v2643 = vpop.f32.mrf.mxu0
    %v2644 = vpop.f32.mrf.mxu0
    %2645 = vdwg.mxu0
    %2646 = vmatprep.subr.bf16.mxu0 %v1979
    %2647 = vmatpush1.bf16.msra.mxu0 %v1978
    %2648 = vmatprep.subr.bf16.mxu0 %v1971
    %2649 = vmatpush1.bf16.msra.mxu0 %v1970
    %2650 = vmatprep.subr.bf16.mxu0 %v1963
    %2651 = vmatpush1.bf16.msra.mxu0 %v1962
    %2652 = vmatprep.subr.bf16.mxu0 %v1955
    %2653 = vmatpush1.bf16.msra.mxu0 %v1954
    %2654 = vmatprep.subr.bf16.mxu0 %v1947
    %2655 = vmatpush1.bf16.msra.mxu0 %v1946
    %2656 = vmatprep.subr.bf16.mxu0 %v1939
    %2657 = vmatpush1.bf16.msra.mxu0 %v1938
    %2658 = vmatprep.subr.bf16.mxu0 %v1931
    %2659 = vmatpush1.bf16.msra.mxu0 %v1930
    %2660 = vmatprep.subr.bf16.mxu0 %v1923
    %2661 = vmatpush1.bf16.msra.mxu0 %v1922
    %2662 = vmatprep.subr.bf16.mxu0 %v2043
    %2663 = vmatpush2.bf16.msra.mxu0 %v2042
    %2664 = vmatprep.subr.bf16.mxu0 %v2035
    %2665 = vmatpush2.bf16.msra.mxu0 %v2034
    %2666 = vmatprep.subr.bf16.mxu0 %v2027
    %2667 = vmatpush2.bf16.msra.mxu0 %v2026
    %2668 = vmatprep.subr.bf16.mxu0 %v2019
    %2669 = vmatpush2.bf16.msra.mxu0 %v2018
    %2670 = vmatprep.subr.bf16.mxu0 %v2011
    %2671 = vmatpush2.bf16.msra.mxu0 %v2010
    %2672 = vmatprep.subr.bf16.mxu0 %v2003
    %2673 = vmatpush2.bf16.msra.mxu0 %v2002
    %2674 = vmatprep.subr.bf16.mxu0 %v1995
    %2675 = vmatpush2.bf16.msra.mxu0 %v1994
    %2676 = vmatprep.subr.bf16.mxu0 %v1987
    %2677 = vmatpush2.bf16.msra.mxu0 %v1986
    %2678 = vmatprep.mubr.bf16.mxu0 %v911
    %2679 = vmatmul.mubr.bf16.gmra.mxu0 %v910
    %v2680 = vpop.f32.mrf.mxu0
    %v2681 = vadd.f32 %v1183, %v2680
    %v2682 = vpop.f32.mrf.mxu0
    %v2683 = vadd.f32 %v1187, %v2682
    %v2684 = vpop.f32.mrf.mxu0
    %v2685 = vpop.f32.mrf.mxu0
    %2686 = vdwg.mxu0
    %2687 = vmatprep.subr.bf16.mxu0 %v2107
    %2688 = vmatpush1.bf16.msra.mxu0 %v2106
    %2689 = vmatprep.subr.bf16.mxu0 %v2099
    %2690 = vmatpush1.bf16.msra.mxu0 %v2098
    %2691 = vmatprep.subr.bf16.mxu0 %v2091
    %2692 = vmatpush1.bf16.msra.mxu0 %v2090
    %2693 = vmatprep.subr.bf16.mxu0 %v2083
    %2694 = vmatpush1.bf16.msra.mxu0 %v2082
    %2695 = vmatprep.subr.bf16.mxu0 %v2075
    %2696 = vmatpush1.bf16.msra.mxu0 %v2074
    %2697 = vmatprep.subr.bf16.mxu0 %v2067
    %2698 = vmatpush1.bf16.msra.mxu0 %v2066
    %2699 = vmatprep.subr.bf16.mxu0 %v2059
    %2700 = vmatpush1.bf16.msra.mxu0 %v2058
    %2701 = vmatprep.subr.bf16.mxu0 %v2051
    %2702 = vmatpush1.bf16.msra.mxu0 %v2050
    %2703 = vmatprep.subr.bf16.mxu0 0
    %2704 = vmatpush2.bf16.msra.mxu0 0
    %2705 = vmatprep.subr.bf16.mxu0 0
    %2706 = vmatpush2.bf16.msra.mxu0 0
    %2707 = vmatprep.subr.bf16.mxu0 %v2155
    %2708 = vmatpush2.bf16.msra.mxu0 %v2154
    %2709 = vmatprep.subr.bf16.mxu0 %v2147
    %2710 = vmatpush2.bf16.msra.mxu0 %v2146
    %2711 = vmatprep.subr.bf16.mxu0 %v2139
    %2712 = vmatpush2.bf16.msra.mxu0 %v2138
    %2713 = vmatprep.subr.bf16.mxu0 %v2131
    %2714 = vmatpush2.bf16.msra.mxu0 %v2130
    %2715 = vmatprep.subr.bf16.mxu0 %v2123
    %2716 = vmatpush2.bf16.msra.mxu0 %v2122
    %2717 = vmatprep.subr.bf16.mxu0 %v2115
    %2718 = vmatpush2.bf16.msra.mxu0 %v2114
    %2719 = vmatprep.mubr.bf16.mxu0 %v2398
    %2720 = vmatmul.mubr.bf16.gmra.mxu0 %v912
    %v2721 = vpop.f32.mrf.mxu0
    %v2722 = vadd.f32 %v2681, %v2721
    %v2723 = vpop.f32.mrf.mxu0
    %v2724 = vadd.f32 %v2683, %v2723
    %v2725 = vpop.f32.mrf.mxu0
    %v2726 = vpop.f32.mrf.mxu0
    %2727 = vdwg.mxu0
    %v2728 = vmax.f32 %v2476, 0.0
    %v2729 = vmax.f32 %v2478, 0.0
    %v2730 = vmax.f32 %v2558, 0.0
    %v2731 = vmax.f32 %v2560, 0.0
    %v2732 = vmax.f32 %v2640, 0.0
    %v2733 = vmax.f32 %v2642, 0.0
    %v2734 = vmax.f32 %v2722, 0.0
    %v2735 = vmax.f32 %v2724, 0.0
    %v2736 = vpack.c.bf16 %v2728, %v2728
    %v2737 = vpack.c.bf16 %v2729, %v2729
    %v2738 = vpack.c.bf16 %v2730, %v2730
    %v2739 = vpack.c.bf16 %v2731, %v2731
    %v2740 = vpack.c.bf16 %v2732, %v2732
    %v2741 = vpack.c.bf16 %v2733, %v2733
    %v2742 = vpack.c.bf16 %v2734, %v2734
    %v2743 = vpack.c.bf16 %v2735, %v2735
    %s2744 = smul.u32 4, 128
    %s2745 = smul.u32 %s2744, 1
    %s2746 = sshll.u32 %s2745, 4
    %2747 = dma.done %s51, %s2746
    %v2748 = vld [vmem:[#allocation4] sm:$0xf]
    %v2749 = vld [vmem:[#allocation4 + $0x4] sm:$0xf]
    %v2750 = vld [vmem:[#allocation4 + $0x8] sm:$0xf]
    %v2751 = vld [vmem:[#allocation4 + $0xc] sm:$0xf]
    %v2752 = vld [vmem:[#allocation4 + $0x10] sm:$0xf]
    %v2753 = vld [vmem:[#allocation4 + $0x14] sm:$0xf]
    %v2754 = vld [vmem:[#allocation4 + $0x18] sm:$0xf]
    %v2755 = vld [vmem:[#allocation4 + $0x1c] sm:$0xf]
    %v2756 = vld [vmem:[#allocation4 + $0x20] sm:$0xf]
    %v2757 = vld [vmem:[#allocation4 + $0x24] sm:$0xf]
    %v2758 = vld [vmem:[#allocation4 + $0x28] sm:$0xf]
    %v2759 = vld [vmem:[#allocation4 + $0x2c] sm:$0xf]
    %v2760 = vld [vmem:[#allocation4 + $0x30] sm:$0xf]
    %v2761 = vld [vmem:[#allocation4 + $0x34] sm:$0xf]
    %v2762 = vld [vmem:[#allocation4 + $0x38] sm:$0xf]
    %v2763 = vld [vmem:[#allocation4 + $0x3c] sm:$0xf]
    %v2764 = vld [vmem:[#allocation4 + $0x40] sm:$0xf]
    %v2765 = vld [vmem:[#allocation4 + $0x44] sm:$0xf]
    %v2766 = vld [vmem:[#allocation4 + $0x48] sm:$0xf]
    %v2767 = vld [vmem:[#allocation4 + $0x4c] sm:$0xf]
    %v2768 = vld [vmem:[#allocation4 + $0x50] sm:$0xf]
    %v2769 = vld [vmem:[#allocation4 + $0x54] sm:$0xf]
    %v2770 = vld [vmem:[#allocation4 + $0x58] sm:$0xf]
    %v2771 = vld [vmem:[#allocation4 + $0x5c] sm:$0xf]
    %v2772 = vld [vmem:[#allocation4 + $0x60] sm:$0xf]
    %v2773 = vld [vmem:[#allocation4 + $0x64] sm:$0xf]
    %v2774 = vld [vmem:[#allocation4 + $0x68] sm:$0xf]
    %v2775 = vld [vmem:[#allocation4 + $0x6c] sm:$0xf]
    %v2776 = vld [vmem:[#allocation4 + $0x70] sm:$0xf]
    %v2777 = vld [vmem:[#allocation4 + $0x74] sm:$0xf]
    %v2778 = vld [vmem:[#allocation4 + $0x78] sm:$0xf]
    %v2779 = vld [vmem:[#allocation4 + $0x7c] sm:$0xf]
    %v2780 = vld [vmem:[#allocation4 + $0x80] sm:$0xf]
    %v2781 = vld [vmem:[#allocation4 + $0x84] sm:$0xf]
    %v2782 = vld [vmem:[#allocation4 + $0x88] sm:$0xf]
    %v2783 = vld [vmem:[#allocation4 + $0x8c] sm:$0xf]
    %v2784 = vld [vmem:[#allocation4 + $0x90] sm:$0xf]
    %v2785 = vld [vmem:[#allocation4 + $0x94] sm:$0xf]
    %v2786 = vld [vmem:[#allocation4 + $0x98] sm:$0xf]
    %v2787 = vld [vmem:[#allocation4 + $0x9c] sm:$0xf]
    %v2788 = vld [vmem:[#allocation4 + $0xa0] sm:$0xf]
    %v2789 = vld [vmem:[#allocation4 + $0xa4] sm:$0xf]
    %v2790 = vld [vmem:[#allocation4 + $0xa8] sm:$0xf]
    %v2791 = vld [vmem:[#allocation4 + $0xac] sm:$0xf]
    %v2792 = vld [vmem:[#allocation4 + $0xb0] sm:$0xf]
    %v2793 = vld [vmem:[#allocation4 + $0xb4] sm:$0xf]
    %v2794 = vld [vmem:[#allocation4 + $0xb8] sm:$0xf]
    %v2795 = vld [vmem:[#allocation4 + $0xbc] sm:$0xf]
    %v2796 = vld [vmem:[#allocation4 + $0xc0] sm:$0xf]
    %v2797 = vld [vmem:[#allocation4 + $0xc4] sm:$0xf]
    %v2798 = vld [vmem:[#allocation4 + $0xc8] sm:$0xf]
    %v2799 = vld [vmem:[#allocation4 + $0xcc] sm:$0xf]
    %v2800 = vld [vmem:[#allocation4 + $0xd0] sm:$0xf]
    %v2801 = vld [vmem:[#allocation4 + $0xd4] sm:$0xf]
    %v2802 = vld [vmem:[#allocation4 + $0xd8] sm:$0xf]
    %v2803 = vld [vmem:[#allocation4 + $0xdc] sm:$0xf]
    %v2804 = vld [vmem:[#allocation4 + $0xe0] sm:$0xf]
    %v2805 = vld [vmem:[#allocation4 + $0xe4] sm:$0xf]
    %v2806 = vld [vmem:[#allocation4 + $0xe8] sm:$0xf]
    %v2807 = vld [vmem:[#allocation4 + $0xec] sm:$0xf]
    %v2808 = vld [vmem:[#allocation4 + $0xf0] sm:$0xf]
    %v2809 = vld [vmem:[#allocation4 + $0xf4] sm:$0xf]
    %v2810 = vld [vmem:[#allocation4 + $0xf8] sm:$0xf]
    %v2811 = vld [vmem:[#allocation4 + $0xfc] sm:$0xf]
    %v2812 = vld [vmem:[#allocation4 + $0x100] sm:$0xf]
    %v2813 = vld [vmem:[#allocation4 + $0x104] sm:$0xf]
    %v2814 = vld [vmem:[#allocation4 + $0x108] sm:$0xf]
    %v2815 = vld [vmem:[#allocation4 + $0x10c] sm:$0xf]
    %v2816 = vld [vmem:[#allocation4 + $0x110] sm:$0xf]
    %v2817 = vld [vmem:[#allocation4 + $0x114] sm:$0xf]
    %v2818 = vld [vmem:[#allocation4 + $0x118] sm:$0xf]
    %v2819 = vld [vmem:[#allocation4 + $0x11c] sm:$0xf]
    %v2820 = vld [vmem:[#allocation4 + $0x120] sm:$0xf]
    %v2821 = vld [vmem:[#allocation4 + $0x124] sm:$0xf]
    %v2822 = vld [vmem:[#allocation4 + $0x128] sm:$0xf]
    %v2823 = vld [vmem:[#allocation4 + $0x12c] sm:$0xf]
    %v2824 = vld [vmem:[#allocation4 + $0x130] sm:$0xf]
    %v2825 = vld [vmem:[#allocation4 + $0x134] sm:$0xf]
    %v2826 = vld [vmem:[#allocation4 + $0x138] sm:$0xf]
    %v2827 = vld [vmem:[#allocation4 + $0x13c] sm:$0xf]
    %v2828 = vld [vmem:[#allocation4 + $0x140] sm:$0xf]
    %v2829 = vld [vmem:[#allocation4 + $0x144] sm:$0xf]
    %v2830 = vld [vmem:[#allocation4 + $0x148] sm:$0xf]
    %v2831 = vld [vmem:[#allocation4 + $0x14c] sm:$0xf]
    %v2832 = vld [vmem:[#allocation4 + $0x150] sm:$0xf]
    %v2833 = vld [vmem:[#allocation4 + $0x154] sm:$0xf]
    %v2834 = vld [vmem:[#allocation4 + $0x158] sm:$0xf]
    %v2835 = vld [vmem:[#allocation4 + $0x15c] sm:$0xf]
    %v2836 = vld [vmem:[#allocation4 + $0x160] sm:$0xf]
    %v2837 = vld [vmem:[#allocation4 + $0x164] sm:$0xf]
    %v2838 = vld [vmem:[#allocation4 + $0x168] sm:$0xf]
    %v2839 = vld [vmem:[#allocation4 + $0x16c] sm:$0xf]
    %v2840 = vld [vmem:[#allocation4 + $0x170] sm:$0xf]
    %v2841 = vld [vmem:[#allocation4 + $0x174] sm:$0xf]
    %v2842 = vld [vmem:[#allocation4 + $0x178] sm:$0xf]
    %v2843 = vld [vmem:[#allocation4 + $0x17c] sm:$0xf]
    %v2844 = vld [vmem:[#allocation4 + $0x180] sm:$0xf]
    %v2845 = vld [vmem:[#allocation4 + $0x184] sm:$0xf]
    %v2846 = vld [vmem:[#allocation4 + $0x188] sm:$0xf]
    %v2847 = vld [vmem:[#allocation4 + $0x18c] sm:$0xf]
    %v2848 = vld [vmem:[#allocation4 + $0x190] sm:$0xf]
    %v2849 = vld [vmem:[#allocation4 + $0x194] sm:$0xf]
    %v2850 = vld [vmem:[#allocation4 + $0x198] sm:$0xf]
    %v2851 = vld [vmem:[#allocation4 + $0x19c] sm:$0xf]
    %v2852 = vld [vmem:[#allocation4 + $0x1a0] sm:$0xf]
    %v2853 = vld [vmem:[#allocation4 + $0x1a4] sm:$0xf]
    %v2854 = vld [vmem:[#allocation4 + $0x1a8] sm:$0xf]
    %v2855 = vld [vmem:[#allocation4 + $0x1ac] sm:$0xf]
    %v2856 = vld [vmem:[#allocation4 + $0x1b0] sm:$0xf]
    %v2857 = vld [vmem:[#allocation4 + $0x1b4] sm:$0xf]
    %v2858 = vld [vmem:[#allocation4 + $0x1b8] sm:$0xf]
    %v2859 = vld [vmem:[#allocation4 + $0x1bc] sm:$0xf]
    %v2860 = vld [vmem:[#allocation4 + $0x1c0] sm:$0xf]
    %v2861 = vld [vmem:[#allocation4 + $0x1c4] sm:$0xf]
    %v2862 = vld [vmem:[#allocation4 + $0x1c8] sm:$0xf]
    %v2863 = vld [vmem:[#allocation4 + $0x1cc] sm:$0xf]
    %v2864 = vld [vmem:[#allocation4 + $0x1d0] sm:$0xf]
    %v2865 = vld [vmem:[#allocation4 + $0x1d4] sm:$0xf]
    %v2866 = vld [vmem:[#allocation4 + $0x1d8] sm:$0xf]
    %v2867 = vld [vmem:[#allocation4 + $0x1dc] sm:$0xf]
    %v2868 = vld [vmem:[#allocation4 + $0x1e0] sm:$0xf]
    %v2869 = vld [vmem:[#allocation4 + $0x1e4] sm:$0xf]
    %v2870 = vld [vmem:[#allocation4 + $0x1e8] sm:$0xf]
    %v2871 = vld [vmem:[#allocation4 + $0x1ec] sm:$0xf]
    %v2872 = vld [vmem:[#allocation4 + $0x1f0] sm:$0xf]
    %v2873 = vld [vmem:[#allocation4 + $0x1f4] sm:$0xf]
    %v2874 = vld [vmem:[#allocation4 + $0x1f8] sm:$0xf]
    %v2875 = vld [vmem:[#allocation4 + $0x1fc] sm:$0xf]
    %v2876 = vld [vmem:[%s7] sm:$0x1]
    %v2878 = vlaneseq
    %v2879 = vshrl.u32 %v2878, 7
    %v2880 = vsub.s32 0, %v2879
    %v2881 = vrot.slane %v2876, %v2880
    %v3011 = vunpack.c.l.b16 %v2748
    %v3012 = vunpack.c.l.b16 %v2749
    %v3013 = vunpack.c.l.b16 %v2750
    %v3014 = vunpack.c.l.b16 %v2751
    %v3015 = vunpack.c.l.b16 %v2752
    %v3016 = vunpack.c.l.b16 %v2753
    %v3017 = vunpack.c.l.b16 %v2754
    %v3018 = vunpack.c.l.b16 %v2755
    %v3019 = vunpack.c.l.b16 %v2756
    %v3020 = vunpack.c.l.b16 %v2757
    %v3021 = vunpack.c.l.b16 %v2758
    %v3022 = vunpack.c.l.b16 %v2759
    %v3023 = vunpack.c.l.b16 %v2760
    %v3024 = vunpack.c.l.b16 %v2761
    %v3025 = vunpack.c.l.b16 %v2762
    %v3026 = vunpack.c.l.b16 %v2763
    %v3027 = vunpack.c.l.b16 %v2764
    %v3028 = vunpack.c.l.b16 %v2765
    %v3029 = vunpack.c.l.b16 %v2766
    %v3030 = vunpack.c.l.b16 %v2767
    %v3031 = vunpack.c.l.b16 %v2768
    %v3032 = vunpack.c.l.b16 %v2769
    %v3033 = vunpack.c.l.b16 %v2770
    %v3034 = vunpack.c.l.b16 %v2771
    %v3035 = vunpack.c.l.b16 %v2772
    %v3036 = vunpack.c.l.b16 %v2773
    %v3037 = vunpack.c.l.b16 %v2774
    %v3038 = vunpack.c.l.b16 %v2775
    %v3039 = vunpack.c.l.b16 %v2776
    %v3040 = vunpack.c.l.b16 %v2777
    %v3041 = vunpack.c.l.b16 %v2778
    %v3042 = vunpack.c.l.b16 %v2779
    %v3043 = vunpack.c.l.b16 %v2780
    %v3044 = vunpack.c.l.b16 %v2781
    %v3045 = vunpack.c.l.b16 %v2782
    %v3046 = vunpack.c.l.b16 %v2783
    %v3047 = vunpack.c.l.b16 %v2784
    %v3048 = vunpack.c.l.b16 %v2785
    %v3049 = vunpack.c.l.b16 %v2786
    %v3050 = vunpack.c.l.b16 %v2787
    %v3051 = vunpack.c.l.b16 %v2788
    %v3052 = vunpack.c.l.b16 %v2789
    %v3053 = vunpack.c.l.b16 %v2790
    %v3054 = vunpack.c.l.b16 %v2791
    %v3055 = vunpack.c.l.b16 %v2792
    %v3056 = vunpack.c.l.b16 %v2793
    %v3057 = vunpack.c.l.b16 %v2794
    %v3058 = vunpack.c.l.b16 %v2795
    %v3059 = vunpack.c.l.b16 %v2796
    %v3060 = vunpack.c.l.b16 %v2797
    %v3061 = vunpack.c.l.b16 %v2798
    %v3062 = vunpack.c.l.b16 %v2799
    %v3063 = vunpack.c.l.b16 %v2800
    %v3064 = vunpack.c.l.b16 %v2801
    %v3065 = vunpack.c.l.b16 %v2802
    %v3066 = vunpack.c.l.b16 %v2803
    %v3067 = vunpack.c.l.b16 %v2804
    %v3068 = vunpack.c.l.b16 %v2805
    %v3069 = vunpack.c.l.b16 %v2806
    %v3070 = vunpack.c.l.b16 %v2807
    %v3071 = vunpack.c.l.b16 %v2808
    %v3072 = vunpack.c.l.b16 %v2809
    %v3073 = vunpack.c.l.b16 %v2810
    %v3074 = vunpack.c.l.b16 %v2811
    %v3075 = vunpack.c.l.b16 %v2812
    %v3076 = vunpack.c.l.b16 %v2813
    %v3077 = vunpack.c.l.b16 %v2814
    %v3078 = vunpack.c.l.b16 %v2815
    %v3079 = vunpack.c.l.b16 %v2816
    %v3080 = vunpack.c.l.b16 %v2817
    %v3081 = vunpack.c.l.b16 %v2818
    %v3082 = vunpack.c.l.b16 %v2819
    %v3083 = vunpack.c.l.b16 %v2820
    %v3084 = vunpack.c.l.b16 %v2821
    %v3085 = vunpack.c.l.b16 %v2822
    %v3086 = vunpack.c.l.b16 %v2823
    %v3087 = vunpack.c.l.b16 %v2824
    %v3088 = vunpack.c.l.b16 %v2825
    %v3089 = vunpack.c.l.b16 %v2826
    %v3090 = vunpack.c.l.b16 %v2827
    %v3091 = vunpack.c.l.b16 %v2828
    %v3092 = vunpack.c.l.b16 %v2829
    %v3093 = vunpack.c.l.b16 %v2830
    %v3094 = vunpack.c.l.b16 %v2831
    %v3095 = vunpack.c.l.b16 %v2832
    %v3096 = vunpack.c.l.b16 %v2833
    %v3097 = vunpack.c.l.b16 %v2834
    %v3098 = vunpack.c.l.b16 %v2835
    %v3099 = vunpack.c.l.b16 %v2836
    %v3100 = vunpack.c.l.b16 %v2837
    %v3101 = vunpack.c.l.b16 %v2838
    %v3102 = vunpack.c.l.b16 %v2839
    %v3103 = vunpack.c.l.b16 %v2840
    %v3104 = vunpack.c.l.b16 %v2841
    %v3105 = vunpack.c.l.b16 %v2842
    %v3106 = vunpack.c.l.b16 %v2843
    %v3107 = vunpack.c.l.b16 %v2844
    %v3108 = vunpack.c.l.b16 %v2845
    %v3109 = vunpack.c.l.b16 %v2846
    %v3110 = vunpack.c.l.b16 %v2847
    %v3111 = vunpack.c.l.b16 %v2848
    %v3112 = vunpack.c.l.b16 %v2849
    %v3113 = vunpack.c.l.b16 %v2850
    %v3114 = vunpack.c.l.b16 %v2851
    %v3115 = vunpack.c.l.b16 %v2852
    %v3116 = vunpack.c.l.b16 %v2853
    %v3117 = vunpack.c.l.b16 %v2854
    %v3118 = vunpack.c.l.b16 %v2855
    %v3119 = vunpack.c.l.b16 %v2856
    %v3120 = vunpack.c.l.b16 %v2857
    %v3121 = vunpack.c.l.b16 %v2858
    %v3122 = vunpack.c.l.b16 %v2859
    %v3123 = vunpack.c.l.b16 %v2860
    %v3124 = vunpack.c.l.b16 %v2861
    %v3125 = vunpack.c.l.b16 %v2862
    %v3126 = vunpack.c.l.b16 %v2863
    %v3127 = vunpack.c.l.b16 %v2864
    %v3128 = vunpack.c.l.b16 %v2865
    %v3129 = vunpack.c.l.b16 %v2866
    %v3130 = vunpack.c.l.b16 %v2867
    %v3131 = vunpack.c.l.b16 %v2868
    %v3132 = vunpack.c.l.b16 %v2869
    %v3133 = vunpack.c.l.b16 %v2870
    %v3134 = vunpack.c.l.b16 %v2871
    %v3135 = vunpack.c.l.b16 %v2872
    %v3136 = vunpack.c.l.b16 %v2873
    %v3137 = vunpack.c.l.b16 %v2874
    %v3138 = vunpack.c.l.b16 %v2875
    %v3139 = vpack.c.b16 %v3012, %v3011
    %v3140 = vpack.c.b16 %v3014, %v3013
    %v3141 = vpack.c.b16 %v3016, %v3015
    %v3142 = vpack.c.b16 %v3018, %v3017
    %v3143 = vpack.c.b16 %v3020, %v3019
    %v3144 = vpack.c.b16 %v3022, %v3021
    %v3145 = vpack.c.b16 %v3024, %v3023
    %v3146 = vpack.c.b16 %v3026, %v3025
    %v3147 = vpack.c.b16 %v3028, %v3027
    %v3148 = vpack.c.b16 %v3030, %v3029
    %v3149 = vpack.c.b16 %v3032, %v3031
    %v3150 = vpack.c.b16 %v3034, %v3033
    %v3151 = vpack.c.b16 %v3036, %v3035
    %v3152 = vpack.c.b16 %v3038, %v3037
    %v3153 = vpack.c.b16 %v3040, %v3039
    %v3154 = vpack.c.b16 %v3042, %v3041
    %v3155 = vpack.c.b16 %v3044, %v3043
    %v3156 = vpack.c.b16 %v3046, %v3045
    %v3157 = vpack.c.b16 %v3048, %v3047
    %v3158 = vpack.c.b16 %v3050, %v3049
    %v3159 = vpack.c.b16 %v3052, %v3051
    %v3160 = vpack.c.b16 %v3054, %v3053
    %v3161 = vpack.c.b16 %v3056, %v3055
    %v3162 = vpack.c.b16 %v3058, %v3057
    %v3163 = vpack.c.b16 %v3060, %v3059
    %v3164 = vpack.c.b16 %v3062, %v3061
    %v3165 = vpack.c.b16 %v3064, %v3063
    %v3166 = vpack.c.b16 %v3066, %v3065
    %v3167 = vpack.c.b16 %v3068, %v3067
    %v3168 = vpack.c.b16 %v3070, %v3069
    %v3169 = vpack.c.b16 %v3072, %v3071
    %v3170 = vpack.c.b16 %v3074, %v3073
    %v3171 = vpack.c.b16 %v3076, %v3075
    %v3172 = vpack.c.b16 %v3078, %v3077
    %v3173 = vpack.c.b16 %v3080, %v3079
    %v3174 = vpack.c.b16 %v3082, %v3081
    %v3175 = vpack.c.b16 %v3084, %v3083
    %v3176 = vpack.c.b16 %v3086, %v3085
    %v3177 = vpack.c.b16 %v3088, %v3087
    %v3178 = vpack.c.b16 %v3090, %v3089
    %v3179 = vpack.c.b16 %v3092, %v3091
    %v3180 = vpack.c.b16 %v3094, %v3093
    %v3181 = vpack.c.b16 %v3096, %v3095
    %v3182 = vpack.c.b16 %v3098, %v3097
    %v3183 = vpack.c.b16 %v3100, %v3099
    %v3184 = vpack.c.b16 %v3102, %v3101
    %v3185 = vpack.c.b16 %v3104, %v3103
    %v3186 = vpack.c.b16 %v3106, %v3105
    %v3187 = vpack.c.b16 %v3108, %v3107
    %v3188 = vpack.c.b16 %v3110, %v3109
    %v3189 = vpack.c.b16 %v3112, %v3111
    %v3190 = vpack.c.b16 %v3114, %v3113
    %v3191 = vpack.c.b16 %v3116, %v3115
    %v3192 = vpack.c.b16 %v3118, %v3117
    %v3193 = vpack.c.b16 %v3120, %v3119
    %v3194 = vpack.c.b16 %v3122, %v3121
    %v3195 = vpack.c.b16 %v3124, %v3123
    %v3196 = vpack.c.b16 %v3126, %v3125
    %v3197 = vpack.c.b16 %v3128, %v3127
    %v3198 = vpack.c.b16 %v3130, %v3129
    %v3199 = vpack.c.b16 %v3132, %v3131
    %v3200 = vpack.c.b16 %v3134, %v3133
    %v3201 = vpack.c.b16 %v3136, %v3135
    %v3202 = vpack.c.b16 %v3138, %v3137
    %3267 = vmatprep.subr.bf16.mxu0 0
    %3268 = vmatpush1.bf16.msra.mxu0 %v3146
    %3269 = vmatprep.subr.bf16.mxu0 0
    %3270 = vmatpush1.bf16.msra.mxu0 %v3145
    %3271 = vmatprep.subr.bf16.mxu0 0
    %3272 = vmatpush1.bf16.msra.mxu0 %v3144
    %3273 = vmatprep.subr.bf16.mxu0 0
    %3274 = vmatpush1.bf16.msra.mxu0 %v3143
    %3275 = vmatprep.subr.bf16.mxu0 0
    %3276 = vmatpush1.bf16.msra.mxu0 %v3142
    %3277 = vmatprep.subr.bf16.mxu0 0
    %3278 = vmatpush1.bf16.msra.mxu0 %v3141
    %3279 = vmatprep.subr.bf16.mxu0 0
    %3280 = vmatpush1.bf16.msra.mxu0 %v3140
    %3281 = vmatprep.subr.bf16.mxu0 0
    %3282 = vmatpush1.bf16.msra.mxu0 %v3139
    %3283 = vmatprep.subr.bf16.mxu0 0
    %3284 = vmatpush2.bf16.msra.mxu0 %v3154
    %3285 = vmatprep.subr.bf16.mxu0 0
    %3286 = vmatpush2.bf16.msra.mxu0 %v3153
    %3287 = vmatprep.subr.bf16.mxu0 0
    %3288 = vmatpush2.bf16.msra.mxu0 %v3152
    %3289 = vmatprep.subr.bf16.mxu0 0
    %3290 = vmatpush2.bf16.msra.mxu0 %v3151
    %3291 = vmatprep.subr.bf16.mxu0 0
    %3292 = vmatpush2.bf16.msra.mxu0 %v3150
    %3293 = vmatprep.subr.bf16.mxu0 0
    %3294 = vmatpush2.bf16.msra.mxu0 %v3149
    %3295 = vmatprep.subr.bf16.mxu0 0
    %3296 = vmatpush2.bf16.msra.mxu0 %v3148
    %3297 = vmatprep.subr.bf16.mxu0 0
    %3298 = vmatpush2.bf16.msra.mxu0 %v3147
    %3299 = vmatprep.mubr.bf16.mxu0 %v2737
    %3300 = vmatmul.mubr.bf16.gmra.mxu0 %v2736
    %v3301 = vpop.f32.mrf.mxu0
    %v3302 = vadd.f32 %v2881, %v3301
    %v3303 = vpop.f32.mrf.mxu0
    %v3304 = vpop.f32.mrf.mxu0
    %v3305 = vpop.f32.mrf.mxu0
    %3306 = vdwg.mxu0
    %3307 = vmatprep.subr.bf16.mxu0 0
    %3308 = vmatpush1.bf16.msra.mxu0 %v3162
    %3309 = vmatprep.subr.bf16.mxu0 0
    %3310 = vmatpush1.bf16.msra.mxu0 %v3161
    %3311 = vmatprep.subr.bf16.mxu0 0
    %3312 = vmatpush1.bf16.msra.mxu0 %v3160
    %3313 = vmatprep.subr.bf16.mxu0 0
    %3314 = vmatpush1.bf16.msra.mxu0 %v3159
    %3315 = vmatprep.subr.bf16.mxu0 0
    %3316 = vmatpush1.bf16.msra.mxu0 %v3158
    %3317 = vmatprep.subr.bf16.mxu0 0
    %3318 = vmatpush1.bf16.msra.mxu0 %v3157
    %3319 = vmatprep.subr.bf16.mxu0 0
    %3320 = vmatpush1.bf16.msra.mxu0 %v3156
    %3321 = vmatprep.subr.bf16.mxu0 0
    %3322 = vmatpush1.bf16.msra.mxu0 %v3155
    %3323 = vmatprep.subr.bf16.mxu0 0
    %3324 = vmatpush2.bf16.msra.mxu0 %v3170
    %3325 = vmatprep.subr.bf16.mxu0 0
    %3326 = vmatpush2.bf16.msra.mxu0 %v3169
    %3327 = vmatprep.subr.bf16.mxu0 0
    %3328 = vmatpush2.bf16.msra.mxu0 %v3168
    %3329 = vmatprep.subr.bf16.mxu0 0
    %3330 = vmatpush2.bf16.msra.mxu0 %v3167
    %3331 = vmatprep.subr.bf16.mxu0 0
    %3332 = vmatpush2.bf16.msra.mxu0 %v3166
    %3333 = vmatprep.subr.bf16.mxu0 0
    %3334 = vmatpush2.bf16.msra.mxu0 %v3165
    %3335 = vmatprep.subr.bf16.mxu0 0
    %3336 = vmatpush2.bf16.msra.mxu0 %v3164
    %3337 = vmatprep.subr.bf16.mxu0 0
    %3338 = vmatpush2.bf16.msra.mxu0 %v3163
    %3339 = vmatprep.mubr.bf16.mxu0 %v2739
    %3340 = vmatmul.mubr.bf16.gmra.mxu0 %v2738
    %v3341 = vpop.f32.mrf.mxu0
    %v3342 = vadd.f32 %v3302, %v3341
    %v3343 = vpop.f32.mrf.mxu0
    %v3344 = vpop.f32.mrf.mxu0
    %v3345 = vpop.f32.mrf.mxu0
    %3346 = vdwg.mxu0
    %3347 = vmatprep.subr.bf16.mxu0 0
    %3348 = vmatpush1.bf16.msra.mxu0 %v3178
    %3349 = vmatprep.subr.bf16.mxu0 0
    %3350 = vmatpush1.bf16.msra.mxu0 %v3177
    %3351 = vmatprep.subr.bf16.mxu0 0
    %3352 = vmatpush1.bf16.msra.mxu0 %v3176
    %3353 = vmatprep.subr.bf16.mxu0 0
    %3354 = vmatpush1.bf16.msra.mxu0 %v3175
    %3355 = vmatprep.subr.bf16.mxu0 0
    %3356 = vmatpush1.bf16.msra.mxu0 %v3174
    %3357 = vmatprep.subr.bf16.mxu0 0
    %3358 = vmatpush1.bf16.msra.mxu0 %v3173
    %3359 = vmatprep.subr.bf16.mxu0 0
    %3360 = vmatpush1.bf16.msra.mxu0 %v3172
    %3361 = vmatprep.subr.bf16.mxu0 0
    %3362 = vmatpush1.bf16.msra.mxu0 %v3171
    %3363 = vmatprep.subr.bf16.mxu0 0
    %3364 = vmatpush2.bf16.msra.mxu0 %v3186
    %3365 = vmatprep.subr.bf16.mxu0 0
    %3366 = vmatpush2.bf16.msra.mxu0 %v3185
    %3367 = vmatprep.subr.bf16.mxu0 0
    %3368 = vmatpush2.bf16.msra.mxu0 %v3184
    %3369 = vmatprep.subr.bf16.mxu0 0
    %3370 = vmatpush2.bf16.msra.mxu0 %v3183
    %3371 = vmatprep.subr.bf16.mxu0 0
    %3372 = vmatpush2.bf16.msra.mxu0 %v3182
    %3373 = vmatprep.subr.bf16.mxu0 0
    %3374 = vmatpush2.bf16.msra.mxu0 %v3181
    %3375 = vmatprep.subr.bf16.mxu0 0
    %3376 = vmatpush2.bf16.msra.mxu0 %v3180
    %3377 = vmatprep.subr.bf16.mxu0 0
    %3378 = vmatpush2.bf16.msra.mxu0 %v3179
    %3379 = vmatprep.mubr.bf16.mxu0 %v2741
    %3380 = vmatmul.mubr.bf16.gmra.mxu0 %v2740
    %v3381 = vpop.f32.mrf.mxu0
    %v3382 = vadd.f32 %v3342, %v3381
    %v3383 = vpop.f32.mrf.mxu0
    %v3384 = vpop.f32.mrf.mxu0
    %v3385 = vpop.f32.mrf.mxu0
    %3386 = vdwg.mxu0
    %3387 = vmatprep.subr.bf16.mxu0 0
    %3388 = vmatpush1.bf16.msra.mxu0 %v3194
    %3389 = vmatprep.subr.bf16.mxu0 0
    %3390 = vmatpush1.bf16.msra.mxu0 %v3193
    %3391 = vmatprep.subr.bf16.mxu0 0
    %3392 = vmatpush1.bf16.msra.mxu0 %v3192
    %3393 = vmatprep.subr.bf16.mxu0 0
    %3394 = vmatpush1.bf16.msra.mxu0 %v3191
    %3395 = vmatprep.subr.bf16.mxu0 0
    %3396 = vmatpush1.bf16.msra.mxu0 %v3190
    %3397 = vmatprep.subr.bf16.mxu0 0
    %3398 = vmatpush1.bf16.msra.mxu0 %v3189
    %3399 = vmatprep.subr.bf16.mxu0 0
    %3400 = vmatpush1.bf16.msra.mxu0 %v3188
    %3401 = vmatprep.subr.bf16.mxu0 0
    %3402 = vmatpush1.bf16.msra.mxu0 %v3187
    %3403 = vmatprep.subr.bf16.mxu0 0
    %3404 = vmatpush2.bf16.msra.mxu0 %v3202
    %3405 = vmatprep.subr.bf16.mxu0 0
    %3406 = vmatpush2.bf16.msra.mxu0 %v3201
    %3407 = vmatprep.subr.bf16.mxu0 0
    %3408 = vmatpush2.bf16.msra.mxu0 %v3200
    %3409 = vmatprep.subr.bf16.mxu0 0
    %3410 = vmatpush2.bf16.msra.mxu0 %v3199
    %3411 = vmatprep.subr.bf16.mxu0 0
    %3412 = vmatpush2.bf16.msra.mxu0 %v3198
    %3413 = vmatprep.subr.bf16.mxu0 0
    %3414 = vmatpush2.bf16.msra.mxu0 %v3197
    %3415 = vmatprep.subr.bf16.mxu0 0
    %3416 = vmatpush2.bf16.msra.mxu0 %v3196
    %3417 = vmatprep.subr.bf16.mxu0 0
    %3418 = vmatpush2.bf16.msra.mxu0 %v3195
    %3419 = vmatprep.mubr.bf16.mxu0 %v2743
    %3420 = vmatmul.mubr.bf16.gmra.mxu0 %v2742
    %v3421 = vpop.f32.mrf.mxu0
    %v3422 = vadd.f32 %v3382, %v3421
    %v3423 = vpop.f32.mrf.mxu0
    %v3424 = vpop.f32.mrf.mxu0
    %v3425 = vpop.f32.mrf.mxu0
    %3426 = vdwg.mxu0
    %vm3427 = vcmask 50176
    %3428 = vst.msk [vmem:[#allocation7] sm:$0x3] %vm3427, %v3422
    %3430 = vrot.lane.b32.xlu0 %v3422, 121
    %v3431 = vpop.permute.xlu0 %3430
    %3433 = vst.msk [vmem:[#allocation9] sm:$0x3] %vm3427, %v3431
    // Predicated region
    $region72: #{state_of_art_fer_forward.1} parent=1 // pred_check
      _
    $region73: #{state_of_art_fer_forward.1} parent=1 // pred_check_branch
      %3435 = sbr.rel (0) target = $region75
    $region74: #{state_of_art_fer_forward.1} parent=1 // pred_region
      %s3437 = ssub.s32 32, 32
      %3438 = vsyncadd [#allocation8], %s3437
      %s3440 = sshll.u32 [#allocation7], 4
      %s3441 = int_to_ptr.vmem [resolvable:$true] %s3440
      %3443 = dma.vmem_to_hbm [thread:$0]  %s3441, 32, %s10, [#allocation8]
    $region75: #{state_of_art_fer_forward.1} parent=1 // pred_fallthru
      _
    // Predicated region
    $region76: #{state_of_art_fer_forward.1} parent=1 // pred_check
      _
    $region77: #{state_of_art_fer_forward.1} parent=1 // pred_check_branch
      %3445 = sbr.rel (0) target = $region79
    $region78: #{state_of_art_fer_forward.1} parent=1 // pred_region
      %s3447 = ssub.s32 32, 32
      %3448 = vsyncadd [#allocation10], %s3447
      %s3450 = sshll.u32 [#allocation9], 4
      %s3451 = int_to_ptr.vmem [resolvable:$true] %s3450
      %3453 = dma.vmem_to_hbm [thread:$0]  %s3451, 32, %s11, [#allocation10]
    $region79: #{state_of_art_fer_forward.1} parent=1 // pred_fallthru
      _
    // Predicated region
    $region80: #{state_of_art_fer_forward.1} parent=1 // pred_check
      _
    $region81: #{state_of_art_fer_forward.1} parent=1 // pred_check_branch
      %3455 = sbr.rel (0) target = $region83
    $region82: #{state_of_art_fer_forward.1} parent=1 // pred_region
      %3456 = dma.done [#allocation8], 32
    $region83: #{state_of_art_fer_forward.1} parent=1 // pred_fallthru
      _
    // Predicated region
    $region84: #{state_of_art_fer_forward.1} parent=1 // pred_check
      _
    $region85: #{state_of_art_fer_forward.1} parent=1 // pred_check_branch
      %3458 = sbr.rel (0) target = $region87
    $region86: #{state_of_art_fer_forward.1} parent=1 // pred_region
      %3459 = dma.done [#allocation10], 32
    $region87: #{state_of_art_fer_forward.1} parent=1 // pred_fallthru
      _
    %3460 = vsyncpa [#allocation8], 1
    %3461 = vsyncpa [#allocation10], 1
  %3462 = vsyncmov [#allocation5]
  %s3463 = vpop.sfrf %3462
  %p3464 = scmp.eq.s32.totalorder %s3463, 0
  %p3465 = pneg %p3464
  %3467 = shalt.err (%p3465)
  %s3468 = scalar_lea.sflag [#allocation5], 1
  %3469 = vsyncmov %s3468
  %s3470 = vpop.sfrf %3469
  %p3471 = scmp.eq.s32.totalorder %s3470, 0
  %p3472 = pneg %p3471
  %3474 = shalt.err (%p3472)

</llo_original>
